<compile_context>
chip_gen: v5e
topology: v5e:2x2
jax: 0.10.0
libtpu: 0.0.40
codegen_flags: <defaults>
</compile_context>

<pallas_src>
import jax
import jax.numpy as jnp
from jax.experimental import pallas as pl
from jax.experimental.pallas import tpu as pltpu

# ----------------------------- model config (small, ViT-like) -----------------------------
B = 2          # batch
C = 3          # input channels
IMG = 32       # image spatial size
PATCH = 8      # patch size  -> num_patches = (32/8)^2 = 16, H = W = 4
N_PATCH = (IMG // PATCH) ** 2
DIM = 32       # embedding dim
HEADS = 4
HEAD_DIM = DIM // HEADS
DEPTH = 2      # number of transformer blocks
MLP_DIM = 4 * DIM
SEQ = N_PATCH + 1           # +cls token
CPP = C * PATCH * PATCH     # flattened patch size
CPP2 = CPP + 2              # + [cls indicator, bias indicator] columns
LN_EPS = 1e-6               # timm ViT LayerNorm eps
SCALE = float(HEAD_DIM) ** -0.5
BF16 = jnp.bfloat16
F32 = jnp.float32


# ------------------------------ in-kernel helper functions --------------------------------
def _layernorm(x, g, b):
    """Row-wise LayerNorm over last dim in f32. x: (M, D), g/b: (1, D)."""
    mu = jnp.mean(x, axis=-1, keepdims=True)
    xc = x - mu
    var = jnp.mean(xc * xc, axis=-1, keepdims=True)
    return xc * jax.lax.rsqrt(var + LN_EPS) * g + b


def _erf_approx(x):
    # Abramowitz & Stegun 7.1.26, |error| < 1.5e-7. Matches PyTorch's exact-erf GELU
    # closely without depending on a lax.erf lowering inside Mosaic.
    a1, a2, a3, a4, a5 = 0.254829592, -0.284496736, 1.421413741, -1.453152027, 1.061405429
    pc = 0.3275911
    sign = jnp.where(x < 0.0, -1.0, 1.0)
    z = jnp.abs(x)
    t = 1.0 / (1.0 + pc * z)
    poly = t * (a1 + t * (a2 + t * (a3 + t * (a4 + t * a5))))
    return sign * (1.0 - poly * jnp.exp(-z * z))


def _gelu_exact(x):
    # PyTorch nn.GELU() default (exact erf form).
    return 0.5 * x * (1.0 + _erf_approx(x * 0.7071067811865476))


# ------------------------------------ fused encoder kernel --------------------------------
def _encoder_kernel(xa_ref, w_embed_ref, pos_ref,
                    ln1_g_ref, ln1_b_ref, qkv_w_ref, qkv_b_ref,
                    proj_w_ref, proj_b_ref, ln2_g_ref, ln2_b_ref,
                    fc1_w_ref, fc1_b_ref, fc2_w_ref, fc2_b_ref,
                    norm_g_ref, norm_b_ref, out_ref):
    """One grid step = one batch element. Everything stays in VMEM/vregs."""
    # ---- patch embed + cls token + conv bias (folded into one augmented matmul) ----
    xa = xa_ref[0].astype(BF16)                                   # (SEQ, CPP2)
    x = jnp.dot(xa, w_embed_ref[...], preferred_element_type=F32)  # (SEQ, DIM) f32
    x = x + pos_ref[...]                                           # add positional embedding

    # ---- transformer blocks (static unroll over DEPTH) ----
    for d in range(DEPTH):
        # --- attention (pre-norm) ---
        h = _layernorm(x, ln1_g_ref[d], ln1_b_ref[d])              # (SEQ, DIM) f32
        qkv = jnp.dot(h.astype(BF16), qkv_w_ref[d],
                      preferred_element_type=F32) + qkv_b_ref[d]   # (SEQ, 3*DIM) f32
        proj_w = proj_w_ref[d]                                     # (DIM, DIM) bf16
        attn_proj = proj_b_ref[d]                                  # (1, DIM) f32 (accumulator)
        for hh in range(HEADS):
            lo = hh * HEAD_DIM
            # scale folded into q before the score matmul
            q = (qkv[:, lo:lo + HEAD_DIM] * SCALE).astype(BF16)            # (SEQ, hd)
            k = qkv[:, DIM + lo:DIM + lo + HEAD_DIM].astype(BF16)          # (SEQ, hd)
            v = qkv[:, 2 * DIM + lo:2 * DIM + lo + HEAD_DIM].astype(BF16)  # (SEQ, hd)
            # q @ k^T without materializing a transpose: contract last dims
            s = jax.lax.dot_general(q, k, (((1,), (1,)), ((), ())),
                                    preferred_element_type=F32)            # (SEQ, SEQ) f32
            s = s - jnp.max(s, axis=-1, keepdims=True)
            p = jnp.exp(s)
            p = p * pl.reciprocal(jnp.sum(p, axis=-1, keepdims=True), approx=True)
            o = jnp.dot(p.astype(BF16), v, preferred_element_type=F32)     # (SEQ, hd) f32
            # fuse attention output directly into the output projection (per-head slab)
            attn_proj = attn_proj + jnp.dot(o.astype(BF16),
                                            proj_w[lo:lo + HEAD_DIM, :],
                                            preferred_element_type=F32)    # (SEQ, DIM)
        x = x + attn_proj                                         # residual add (free VPU)

        # --- MLP (pre-norm) ---
        h = _layernorm(x, ln2_g_ref[d], ln2_b_ref[d])
        h = jnp.dot(h.astype(BF16), fc1_w_ref[d],
                    preferred_element_type=F32) + fc1_b_ref[d]    # (SEQ, MLP_DIM)
        h = _gelu_exact(h)
        h = jnp.dot(h.astype(BF16), fc2_w_ref[d],
                    preferred_element_type=F32) + fc2_b_ref[d]    # (SEQ, DIM)
        x = x + h

    # ---- final LayerNorm ----
    x = _layernorm(x, norm_g_ref[...], norm_b_ref[...])
    out_ref[0] = x.astype(out_ref.dtype)


# ------------------------------------- parameters ------------------------------------------
def init_params(key):
    def nrm(k, shape, std=0.02):
        return jax.random.normal(k, shape, dtype=F32) * std

    keys = jax.random.split(key, 3 + 4 * DEPTH)
    patch_w = nrm(keys[0], (CPP, DIM))
    patch_b = jnp.zeros((1, DIM), F32)
    cls_token = nrm(keys[1], (1, DIM))

    p = {
        # augmented patch-embed weight rows: [cls_token, patch_bias, patch_w...]
        # (pairs with the [cls-indicator, bias-indicator, pixels] columns built in the wrapper)
        "w_embed": jnp.concatenate([cls_token, patch_b, patch_w], axis=0).astype(BF16),
        "pos_embed": nrm(keys[2], (SEQ, DIM)),
        "norm_g": jnp.ones((1, DIM), F32),
        "norm_b": jnp.zeros((1, DIM), F32),
        # per-block params stacked on a leading DEPTH axis; biases/LN pre-shaped (DEPTH,1,N)
        "ln1_g": jnp.ones((DEPTH, 1, DIM), F32),
        "ln1_b": jnp.zeros((DEPTH, 1, DIM), F32),
        "ln2_g": jnp.ones((DEPTH, 1, DIM), F32),
        "ln2_b": jnp.zeros((DEPTH, 1, DIM), F32),
        "qkv_b": jnp.zeros((DEPTH, 1, 3 * DIM), F32),
        "proj_b": jnp.zeros((DEPTH, 1, DIM), F32),
        "fc1_b": jnp.zeros((DEPTH, 1, MLP_DIM), F32),
        "fc2_b": jnp.zeros((DEPTH, 1, DIM), F32),
    }
    qkv_w, proj_w, fc1_w, fc2_w = [], [], [], []
    kit = iter(keys[3:])
    for _ in range(DEPTH):
        qkv_w.append(nrm(next(kit), (DIM, 3 * DIM)))
        proj_w.append(nrm(next(kit), (DIM, DIM)))
        fc1_w.append(nrm(next(kit), (DIM, MLP_DIM)))
        fc2_w.append(nrm(next(kit), (MLP_DIM, DIM)))
    # weights stored bf16 (MXU-native input precision; halves HBM/VMEM footprint)
    p["qkv_w"] = jnp.stack(qkv_w).astype(BF16)
    p["proj_w"] = jnp.stack(proj_w).astype(BF16)
    p["fc1_w"] = jnp.stack(fc1_w).astype(BF16)
    p["fc2_w"] = jnp.stack(fc2_w).astype(BF16)
    return p


# -------------------------------------- forward --------------------------------------------
def _patchify_aug(x):
    """NCHW image -> (B, SEQ, CPP2) augmented patch rows (wrapper-side glue only)."""
    Bc = x.shape[0]
    # equivalent to Conv2d(C, DIM, k=PATCH, s=PATCH): per-patch flatten in (c, kh, kw) order
    xp = x.reshape(Bc, C, IMG // PATCH, PATCH, IMG // PATCH, PATCH)
    xp = xp.transpose(0, 2, 4, 1, 3, 5).reshape(Bc, N_PATCH, CPP)
    zeros = jnp.zeros((Bc, N_PATCH, 1), x.dtype)
    ones = jnp.ones((Bc, N_PATCH, 1), x.dtype)
    patch_rows = jnp.concatenate([zeros, ones, xp], axis=-1)       # (B, N_PATCH, CPP2)
    cls_row = jnp.zeros((Bc, 1, CPP2), x.dtype).at[:, :, 0].set(1.0)
    return jnp.concatenate([cls_row, patch_rows], axis=1)          # (B, SEQ, CPP2)


def _full_spec(arr):
    nd = arr.ndim
    return pl.BlockSpec(arr.shape, lambda b, _n=nd: (0,) * _n)


def vit_encoder_forward(x, params):
    """x: (B, C, IMG, IMG) NCHW float32 -> (B, DIM, H, W) (same as the PyTorch module)."""
    Bc = x.shape[0]
    xa = _patchify_aug(x)                                          # (B, SEQ, CPP2)

    order = ["w_embed", "pos_embed",
             "ln1_g", "ln1_b", "qkv_w", "qkv_b", "proj_w", "proj_b",
             "ln2_g", "ln2_b", "fc1_w", "fc1_b", "fc2_w", "fc2_b",
             "norm_g", "norm_b"]
    operands = [params[k] for k in order]

    out = pl.pallas_call(
        _encoder_kernel,
        grid=(Bc,),
        in_specs=[pl.BlockSpec((1, SEQ, CPP2), lambda b: (b, 0, 0))]
                 + [_full_spec(a) for a in operands],
        out_specs=pl.BlockSpec((1, SEQ, DIM), lambda b: (b, 0, 0)),
        out_shape=jax.ShapeDtypeStruct((Bc, SEQ, DIM), F32),
        compiler_params=pltpu.CompilerParams(dimension_semantics=("parallel",)),
    )(xa, *operands)                                               # (B, SEQ, DIM)

    # features[:, 0] = cls (discarded); features[:, 1:] = patch tokens -> NCHW feature map
    patch_tokens = out[:, 1:]                                      # (B, N_PATCH, DIM)
    H = W = IMG // PATCH
    return patch_tokens.transpose(0, 2, 1).reshape(Bc, DIM, H, W)


# ---------------------------------------- main ----------------------------------------------
if __name__ == "__main__":
    key = jax.random.PRNGKey(0)
    k_params, k_x = jax.random.split(key)
    params = init_params(k_params)
    x = jax.random.normal(k_x, (B, C, IMG, IMG), dtype=F32)

    out = jax.jit(vit_encoder_forward)(x, params)
    out = jax.block_until_ready(out)

    assert out.shape == (B, DIM, IMG // PATCH, IMG // PATCH), out.shape
    assert jnp.all(jnp.isfinite(out))
    # TODO(synk): pretrained timm weights are not loaded (random init, same as before);
    # only the forward-pass computation of forward_features is reproduced.
    print("KERNEL_OK")
</pallas_src>

<mosaic_0001>
module attributes {stable_mosaic.version = 11 : i64} {
  func.func @_encoder_kernel(%arg0: i32, %arg1: memref<1x17x194xf32, #tpu.memory_space<vmem>>, %arg2: memref<194x32xbf16, #tpu.memory_space<vmem>>, %arg3: memref<17x32xf32, #tpu.memory_space<vmem>>, %arg4: memref<2x1x32xf32, #tpu.memory_space<vmem>>, %arg5: memref<2x1x32xf32, #tpu.memory_space<vmem>>, %arg6: memref<2x32x96xbf16, #tpu.memory_space<vmem>>, %arg7: memref<2x1x96xf32, #tpu.memory_space<vmem>>, %arg8: memref<2x32x32xbf16, #tpu.memory_space<vmem>>, %arg9: memref<2x1x32xf32, #tpu.memory_space<vmem>>, %arg10: memref<2x1x32xf32, #tpu.memory_space<vmem>>, %arg11: memref<2x1x32xf32, #tpu.memory_space<vmem>>, %arg12: memref<2x32x128xbf16, #tpu.memory_space<vmem>>, %arg13: memref<2x1x128xf32, #tpu.memory_space<vmem>>, %arg14: memref<2x128x32xbf16, #tpu.memory_space<vmem>>, %arg15: memref<2x1x32xf32, #tpu.memory_space<vmem>>, %arg16: memref<1x32xf32, #tpu.memory_space<vmem>>, %arg17: memref<1x32xf32, #tpu.memory_space<vmem>>, %arg18: memref<1x17x32xf32, #tpu.memory_space<vmem>>) attributes {dimension_semantics = [#tpu.dimension_semantics<parallel>], iteration_bounds = array<i64: 2>, scalar_prefetch = 0 : i64, scratch_operands = 0 : i64, tpu.core_type = #tpu.core_type<tc>, window_params = [{transform_indices = @transform_0, window_bounds = array<i64: 1, 17, 194>}, {pipeline_mode = #tpu.pipeline_mode<synchronous>, transform_indices = @transform_1, window_bounds = array<i64: 194, 32>}, {pipeline_mode = #tpu.pipeline_mode<synchronous>, transform_indices = @transform_2, window_bounds = array<i64: 17, 32>}, {pipeline_mode = #tpu.pipeline_mode<synchronous>, transform_indices = @transform_3, window_bounds = array<i64: 2, 1, 32>}, {pipeline_mode = #tpu.pipeline_mode<synchronous>, transform_indices = @transform_4, window_bounds = array<i64: 2, 1, 32>}, {pipeline_mode = #tpu.pipeline_mode<synchronous>, transform_indices = @transform_5, window_bounds = array<i64: 2, 32, 96>}, {pipeline_mode = #tpu.pipeline_mode<synchronous>, transform_indices = @transform_6, window_bounds = array<i64: 2, 1, 96>}, {pipeline_mode = #tpu.pipeline_mode<synchronous>, transform_indices = @transform_7, window_bounds = array<i64: 2, 32, 32>}, {pipeline_mode = #tpu.pipeline_mode<synchronous>, transform_indices = @transform_8, window_bounds = array<i64: 2, 1, 32>}, {pipeline_mode = #tpu.pipeline_mode<synchronous>, transform_indices = @transform_9, window_bounds = array<i64: 2, 1, 32>}, {pipeline_mode = #tpu.pipeline_mode<synchronous>, transform_indices = @transform_10, window_bounds = array<i64: 2, 1, 32>}, {pipeline_mode = #tpu.pipeline_mode<synchronous>, transform_indices = @transform_11, window_bounds = array<i64: 2, 32, 128>}, {pipeline_mode = #tpu.pipeline_mode<synchronous>, transform_indices = @transform_12, window_bounds = array<i64: 2, 1, 128>}, {pipeline_mode = #tpu.pipeline_mode<synchronous>, transform_indices = @transform_13, window_bounds = array<i64: 2, 128, 32>}, {pipeline_mode = #tpu.pipeline_mode<synchronous>, transform_indices = @transform_14, window_bounds = array<i64: 2, 1, 32>}, {pipeline_mode = #tpu.pipeline_mode<synchronous>, transform_indices = @transform_15, window_bounds = array<i64: 1, 32>}, {pipeline_mode = #tpu.pipeline_mode<synchronous>, transform_indices = @transform_16, window_bounds = array<i64: 1, 32>}, {transform_indices = @transform_17, window_bounds = array<i64: 1, 17, 32>}]} {
    %c0 = arith.constant 0 : index
    %c0_0 = arith.constant 0 : index
    %c0_1 = arith.constant 0 : index
    %0 = vector.load %arg1[%c0, %c0_0, %c0_1] : memref<1x17x194xf32, #tpu.memory_space<vmem>>, vector<1x17x194xf32>
    %1 = vector.shape_cast %0 : vector<1x17x194xf32> to vector<17x194xf32>
    %2 = arith.truncf %1 : vector<17x194xf32> to vector<17x194xbf16>
    %c0_2 = arith.constant 0 : index
    %c0_3 = arith.constant 0 : index
    %3 = vector.load %arg2[%c0_2, %c0_3] : memref<194x32xbf16, #tpu.memory_space<vmem>>, vector<194x32xbf16>
    %cst = arith.constant dense<0.000000e+00> : vector<17x32xf32>
    %4 = tpu.matmul %2, %3, %cst {dimension_numbers = #tpu.dot_dimension_numbers<[1], [0], [0], [1], [0, 0, 1, 1], [], []>} : vector<17x194xbf16>, vector<194x32xbf16>, vector<17x32xf32> -> vector<17x32xf32>
    %c0_4 = arith.constant 0 : index
    %c0_5 = arith.constant 0 : index
    %5 = vector.load %arg3[%c0_4, %c0_5] : memref<17x32xf32, #tpu.memory_space<vmem>>, vector<17x32xf32>
    %6 = arith.addf %4, %5 : vector<17x32xf32>
    %c0_6 = arith.constant 0 : index
    %c0_7 = arith.constant 0 : index
    %c0_8 = arith.constant 0 : index
    %7 = vector.load %arg4[%c0_6, %c0_7, %c0_8] : memref<2x1x32xf32, #tpu.memory_space<vmem>>, vector<1x1x32xf32>
    %8 = vector.shape_cast %7 : vector<1x1x32xf32> to vector<1x32xf32>
    %c0_9 = arith.constant 0 : index
    %c0_10 = arith.constant 0 : index
    %c0_11 = arith.constant 0 : index
    %9 = vector.load %arg5[%c0_9, %c0_10, %c0_11] : memref<2x1x32xf32, #tpu.memory_space<vmem>>, vector<1x1x32xf32>
    %10 = vector.shape_cast %9 : vector<1x1x32xf32> to vector<1x32xf32>
    %cst_12 = arith.constant dense<0.000000e+00> : vector<17xf32>
    %11 = vector.multi_reduction <add>, %6, %cst_12 [1] : vector<17x32xf32> to vector<17xf32>
    %12 = vector.shape_cast %11 : vector<17xf32> to vector<17x1xf32>
    %cst_13 = arith.constant 3.200000e+01 : f32
    %13 = vector.broadcast %cst_13 : f32 to vector<17x1xf32>
    %14 = arith.divf %12, %13 : vector<17x1xf32>
    %15 = vector.broadcast %14 : vector<17x1xf32> to vector<17x32xf32>
    %16 = arith.subf %6, %15 : vector<17x32xf32>
    %17 = arith.mulf %16, %16 : vector<17x32xf32>
    %cst_14 = arith.constant dense<0.000000e+00> : vector<17xf32>
    %18 = vector.multi_reduction <add>, %17, %cst_14 [1] : vector<17x32xf32> to vector<17xf32>
    %19 = vector.shape_cast %18 : vector<17xf32> to vector<17x1xf32>
    %cst_15 = arith.constant 3.200000e+01 : f32
    %20 = vector.broadcast %cst_15 : f32 to vector<17x1xf32>
    %21 = arith.divf %19, %20 : vector<17x1xf32>
    %cst_16 = arith.constant 9.99999997E-7 : f32
    %22 = vector.broadcast %cst_16 : f32 to vector<17x1xf32>
    %23 = arith.addf %21, %22 : vector<17x1xf32>
    %24 = math.rsqrt %23 : vector<17x1xf32>
    %25 = vector.broadcast %24 : vector<17x1xf32> to vector<17x32xf32>
    %26 = arith.mulf %16, %25 : vector<17x32xf32>
    %27 = vector.broadcast %8 : vector<1x32xf32> to vector<17x32xf32>
    %28 = arith.mulf %26, %27 : vector<17x32xf32>
    %29 = vector.broadcast %10 : vector<1x32xf32> to vector<17x32xf32>
    %30 = arith.addf %28, %29 : vector<17x32xf32>
    %31 = arith.truncf %30 : vector<17x32xf32> to vector<17x32xbf16>
    %c0_17 = arith.constant 0 : index
    %c0_18 = arith.constant 0 : index
    %c0_19 = arith.constant 0 : index
    %32 = vector.load %arg6[%c0_17, %c0_18, %c0_19] : memref<2x32x96xbf16, #tpu.memory_space<vmem>>, vector<1x32x96xbf16>
    %33 = vector.shape_cast %32 : vector<1x32x96xbf16> to vector<32x96xbf16>
    %cst_20 = arith.constant dense<0.000000e+00> : vector<17x96xf32>
    %34 = tpu.matmul %31, %33, %cst_20 {dimension_numbers = #tpu.dot_dimension_numbers<[1], [0], [0], [1], [0, 0, 1, 1], [], []>} : vector<17x32xbf16>, vector<32x96xbf16>, vector<17x96xf32> -> vector<17x96xf32>
    %c0_21 = arith.constant 0 : index
    %c0_22 = arith.constant 0 : index
    %c0_23 = arith.constant 0 : index
    %35 = vector.load %arg7[%c0_21, %c0_22, %c0_23] : memref<2x1x96xf32, #tpu.memory_space<vmem>>, vector<1x1x96xf32>
    %36 = vector.shape_cast %35 : vector<1x1x96xf32> to vector<1x96xf32>
    %37 = vector.broadcast %36 : vector<1x96xf32> to vector<17x96xf32>
    %38 = arith.addf %34, %37 : vector<17x96xf32>
    %c0_24 = arith.constant 0 : index
    %c0_25 = arith.constant 0 : index
    %c0_26 = arith.constant 0 : index
    %39 = vector.load %arg8[%c0_24, %c0_25, %c0_26] : memref<2x32x32xbf16, #tpu.memory_space<vmem>>, vector<1x32x32xbf16>
    %40 = vector.shape_cast %39 : vector<1x32x32xbf16> to vector<32x32xbf16>
    %c0_27 = arith.constant 0 : index
    %c0_28 = arith.constant 0 : index
    %c0_29 = arith.constant 0 : index
    %41 = vector.load %arg9[%c0_27, %c0_28, %c0_29] : memref<2x1x32xf32, #tpu.memory_space<vmem>>, vector<1x1x32xf32>
    %42 = vector.shape_cast %41 : vector<1x1x32xf32> to vector<1x32xf32>
    %43 = vector.extract_strided_slice %38 {offsets = [0, 0], sizes = [17, 8], strides = [1, 1]} : vector<17x96xf32> to vector<17x8xf32>
    %cst_30 = arith.constant 0.353553385 : f32
    %44 = vector.broadcast %cst_30 : f32 to vector<17x8xf32>
    %45 = arith.mulf %43, %44 : vector<17x8xf32>
    %46 = arith.truncf %45 : vector<17x8xf32> to vector<17x8xbf16>
    %47 = vector.extract_strided_slice %38 {offsets = [0, 32], sizes = [17, 8], strides = [1, 1]} : vector<17x96xf32> to vector<17x8xf32>
    %48 = arith.truncf %47 : vector<17x8xf32> to vector<17x8xbf16>
    %49 = vector.extract_strided_slice %38 {offsets = [0, 64], sizes = [17, 8], strides = [1, 1]} : vector<17x96xf32> to vector<17x8xf32>
    %50 = arith.truncf %49 : vector<17x8xf32> to vector<17x8xbf16>
    %cst_31 = arith.constant dense<0.000000e+00> : vector<17x17xf32>
    %51 = tpu.matmul %46, %48, %cst_31 {dimension_numbers = #tpu.dot_dimension_numbers<[1], [1], [0], [0], [0, 0, 1, 0], [], []>} : vector<17x8xbf16>, vector<17x8xbf16>, vector<17x17xf32> -> vector<17x17xf32>
    %cst_32 = arith.constant dense<0xFF800000> : vector<17xf32>
    %52 = vector.multi_reduction <maximumf>, %51, %cst_32 [1] : vector<17x17xf32> to vector<17xf32>
    %53 = vector.shape_cast %52 : vector<17xf32> to vector<17x1xf32>
    %54 = vector.broadcast %53 : vector<17x1xf32> to vector<17x17xf32>
    %55 = arith.subf %51, %54 : vector<17x17xf32>
    %56 = math.exp %55 : vector<17x17xf32>
    %cst_33 = arith.constant dense<0.000000e+00> : vector<17xf32>
    %57 = vector.multi_reduction <add>, %56, %cst_33 [1] : vector<17x17xf32> to vector<17xf32>
    %58 = vector.shape_cast %57 : vector<17xf32> to vector<17x1xf32>
    %59 = tpu.reciprocal %58 {approx = true} : vector<17x1xf32> -> vector<17x1xf32>
    %60 = vector.broadcast %59 : vector<17x1xf32> to vector<17x17xf32>
    %61 = arith.mulf %56, %60 : vector<17x17xf32>
    %62 = arith.truncf %61 : vector<17x17xf32> to vector<17x17xbf16>
    %cst_34 = arith.constant dense<0.000000e+00> : vector<17x8xf32>
    %63 = tpu.matmul %62, %50, %cst_34 {dimension_numbers = #tpu.dot_dimension_numbers<[1], [0], [0], [1], [0, 0, 1, 1], [], []>} : vector<17x17xbf16>, vector<17x8xbf16>, vector<17x8xf32> -> vector<17x8xf32>
    %64 = arith.truncf %63 : vector<17x8xf32> to vector<17x8xbf16>
    %65 = vector.extract_strided_slice %40 {offsets = [0, 0], sizes = [8, 32], strides = [1, 1]} : vector<32x32xbf16> to vector<8x32xbf16>
    %cst_35 = arith.constant dense<0.000000e+00> : vector<17x32xf32>
    %66 = tpu.matmul %64, %65, %cst_35 {dimension_numbers = #tpu.dot_dimension_numbers<[1], [0], [0], [1], [0, 0, 1, 1], [], []>} : vector<17x8xbf16>, vector<8x32xbf16>, vector<17x32xf32> -> vector<17x32xf32>
    %67 = vector.broadcast %42 : vector<1x32xf32> to vector<17x32xf32>
    %68 = arith.addf %67, %66 : vector<17x32xf32>
    %69 = vector.extract_strided_slice %38 {offsets = [0, 8], sizes = [17, 8], strides = [1, 1]} : vector<17x96xf32> to vector<17x8xf32>
    %cst_36 = arith.constant 0.353553385 : f32
    %70 = vector.broadcast %cst_36 : f32 to vector<17x8xf32>
    %71 = arith.mulf %69, %70 : vector<17x8xf32>
    %72 = arith.truncf %71 : vector<17x8xf32> to vector<17x8xbf16>
    %73 = vector.extract_strided_slice %38 {offsets = [0, 40], sizes = [17, 8], strides = [1, 1]} : vector<17x96xf32> to vector<17x8xf32>
    %74 = arith.truncf %73 : vector<17x8xf32> to vector<17x8xbf16>
    %75 = vector.extract_strided_slice %38 {offsets = [0, 72], sizes = [17, 8], strides = [1, 1]} : vector<17x96xf32> to vector<17x8xf32>
    %76 = arith.truncf %75 : vector<17x8xf32> to vector<17x8xbf16>
    %cst_37 = arith.constant dense<0.000000e+00> : vector<17x17xf32>
    %77 = tpu.matmul %72, %74, %cst_37 {dimension_numbers = #tpu.dot_dimension_numbers<[1], [1], [0], [0], [0, 0, 1, 0], [], []>} : vector<17x8xbf16>, vector<17x8xbf16>, vector<17x17xf32> -> vector<17x17xf32>
    %cst_38 = arith.constant dense<0xFF800000> : vector<17xf32>
    %78 = vector.multi_reduction <maximumf>, %77, %cst_38 [1] : vector<17x17xf32> to vector<17xf32>
    %79 = vector.shape_cast %78 : vector<17xf32> to vector<17x1xf32>
    %80 = vector.broadcast %79 : vector<17x1xf32> to vector<17x17xf32>
    %81 = arith.subf %77, %80 : vector<17x17xf32>
    %82 = math.exp %81 : vector<17x17xf32>
    %cst_39 = arith.constant dense<0.000000e+00> : vector<17xf32>
    %83 = vector.multi_reduction <add>, %82, %cst_39 [1] : vector<17x17xf32> to vector<17xf32>
    %84 = vector.shape_cast %83 : vector<17xf32> to vector<17x1xf32>
    %85 = tpu.reciprocal %84 {approx = true} : vector<17x1xf32> -> vector<17x1xf32>
    %86 = vector.broadcast %85 : vector<17x1xf32> to vector<17x17xf32>
    %87 = arith.mulf %82, %86 : vector<17x17xf32>
    %88 = arith.truncf %87 : vector<17x17xf32> to vector<17x17xbf16>
    %cst_40 = arith.constant dense<0.000000e+00> : vector<17x8xf32>
    %89 = tpu.matmul %88, %76, %cst_40 {dimension_numbers = #tpu.dot_dimension_numbers<[1], [0], [0], [1], [0, 0, 1, 1], [], []>} : vector<17x17xbf16>, vector<17x8xbf16>, vector<17x8xf32> -> vector<17x8xf32>
    %90 = arith.truncf %89 : vector<17x8xf32> to vector<17x8xbf16>
    %91 = vector.extract_strided_slice %40 {offsets = [8, 0], sizes = [8, 32], strides = [1, 1]} : vector<32x32xbf16> to vector<8x32xbf16>
    %cst_41 = arith.constant dense<0.000000e+00> : vector<17x32xf32>
    %92 = tpu.matmul %90, %91, %cst_41 {dimension_numbers = #tpu.dot_dimension_numbers<[1], [0], [0], [1], [0, 0, 1, 1], [], []>} : vector<17x8xbf16>, vector<8x32xbf16>, vector<17x32xf32> -> vector<17x32xf32>
    %93 = arith.addf %68, %92 : vector<17x32xf32>
    %94 = vector.extract_strided_slice %38 {offsets = [0, 16], sizes = [17, 8], strides = [1, 1]} : vector<17x96xf32> to vector<17x8xf32>
    %cst_42 = arith.constant 0.353553385 : f32
    %95 = vector.broadcast %cst_42 : f32 to vector<17x8xf32>
    %96 = arith.mulf %94, %95 : vector<17x8xf32>
    %97 = arith.truncf %96 : vector<17x8xf32> to vector<17x8xbf16>
    %98 = vector.extract_strided_slice %38 {offsets = [0, 48], sizes = [17, 8], strides = [1, 1]} : vector<17x96xf32> to vector<17x8xf32>
    %99 = arith.truncf %98 : vector<17x8xf32> to vector<17x8xbf16>
    %100 = vector.extract_strided_slice %38 {offsets = [0, 80], sizes = [17, 8], strides = [1, 1]} : vector<17x96xf32> to vector<17x8xf32>
    %101 = arith.truncf %100 : vector<17x8xf32> to vector<17x8xbf16>
    %cst_43 = arith.constant dense<0.000000e+00> : vector<17x17xf32>
    %102 = tpu.matmul %97, %99, %cst_43 {dimension_numbers = #tpu.dot_dimension_numbers<[1], [1], [0], [0], [0, 0, 1, 0], [], []>} : vector<17x8xbf16>, vector<17x8xbf16>, vector<17x17xf32> -> vector<17x17xf32>
    %cst_44 = arith.constant dense<0xFF800000> : vector<17xf32>
    %103 = vector.multi_reduction <maximumf>, %102, %cst_44 [1] : vector<17x17xf32> to vector<17xf32>
    %104 = vector.shape_cast %103 : vector<17xf32> to vector<17x1xf32>
    %105 = vector.broadcast %104 : vector<17x1xf32> to vector<17x17xf32>
    %106 = arith.subf %102, %105 : vector<17x17xf32>
    %107 = math.exp %106 : vector<17x17xf32>
    %cst_45 = arith.constant dense<0.000000e+00> : vector<17xf32>
    %108 = vector.multi_reduction <add>, %107, %cst_45 [1] : vector<17x17xf32> to vector<17xf32>
    %109 = vector.shape_cast %108 : vector<17xf32> to vector<17x1xf32>
    %110 = tpu.reciprocal %109 {approx = true} : vector<17x1xf32> -> vector<17x1xf32>
    %111 = vector.broadcast %110 : vector<17x1xf32> to vector<17x17xf32>
    %112 = arith.mulf %107, %111 : vector<17x17xf32>
    %113 = arith.truncf %112 : vector<17x17xf32> to vector<17x17xbf16>
    %cst_46 = arith.constant dense<0.000000e+00> : vector<17x8xf32>
    %114 = tpu.matmul %113, %101, %cst_46 {dimension_numbers = #tpu.dot_dimension_numbers<[1], [0], [0], [1], [0, 0, 1, 1], [], []>} : vector<17x17xbf16>, vector<17x8xbf16>, vector<17x8xf32> -> vector<17x8xf32>
    %115 = arith.truncf %114 : vector<17x8xf32> to vector<17x8xbf16>
    %116 = vector.extract_strided_slice %40 {offsets = [16, 0], sizes = [8, 32], strides = [1, 1]} : vector<32x32xbf16> to vector<8x32xbf16>
    %cst_47 = arith.constant dense<0.000000e+00> : vector<17x32xf32>
    %117 = tpu.matmul %115, %116, %cst_47 {dimension_numbers = #tpu.dot_dimension_numbers<[1], [0], [0], [1], [0, 0, 1, 1], [], []>} : vector<17x8xbf16>, vector<8x32xbf16>, vector<17x32xf32> -> vector<17x32xf32>
    %118 = arith.addf %93, %117 : vector<17x32xf32>
    %119 = vector.extract_strided_slice %38 {offsets = [0, 24], sizes = [17, 8], strides = [1, 1]} : vector<17x96xf32> to vector<17x8xf32>
    %cst_48 = arith.constant 0.353553385 : f32
    %120 = vector.broadcast %cst_48 : f32 to vector<17x8xf32>
    %121 = arith.mulf %119, %120 : vector<17x8xf32>
    %122 = arith.truncf %121 : vector<17x8xf32> to vector<17x8xbf16>
    %123 = vector.extract_strided_slice %38 {offsets = [0, 56], sizes = [17, 8], strides = [1, 1]} : vector<17x96xf32> to vector<17x8xf32>
    %124 = arith.truncf %123 : vector<17x8xf32> to vector<17x8xbf16>
    %125 = vector.extract_strided_slice %38 {offsets = [0, 88], sizes = [17, 8], strides = [1, 1]} : vector<17x96xf32> to vector<17x8xf32>
    %126 = arith.truncf %125 : vector<17x8xf32> to vector<17x8xbf16>
    %cst_49 = arith.constant dense<0.000000e+00> : vector<17x17xf32>
    %127 = tpu.matmul %122, %124, %cst_49 {dimension_numbers = #tpu.dot_dimension_numbers<[1], [1], [0], [0], [0, 0, 1, 0], [], []>} : vector<17x8xbf16>, vector<17x8xbf16>, vector<17x17xf32> -> vector<17x17xf32>
    %cst_50 = arith.constant dense<0xFF800000> : vector<17xf32>
    %128 = vector.multi_reduction <maximumf>, %127, %cst_50 [1] : vector<17x17xf32> to vector<17xf32>
    %129 = vector.shape_cast %128 : vector<17xf32> to vector<17x1xf32>
    %130 = vector.broadcast %129 : vector<17x1xf32> to vector<17x17xf32>
    %131 = arith.subf %127, %130 : vector<17x17xf32>
    %132 = math.exp %131 : vector<17x17xf32>
    %cst_51 = arith.constant dense<0.000000e+00> : vector<17xf32>
    %133 = vector.multi_reduction <add>, %132, %cst_51 [1] : vector<17x17xf32> to vector<17xf32>
    %134 = vector.shape_cast %133 : vector<17xf32> to vector<17x1xf32>
    %135 = tpu.reciprocal %134 {approx = true} : vector<17x1xf32> -> vector<17x1xf32>
    %136 = vector.broadcast %135 : vector<17x1xf32> to vector<17x17xf32>
    %137 = arith.mulf %132, %136 : vector<17x17xf32>
    %138 = arith.truncf %137 : vector<17x17xf32> to vector<17x17xbf16>
    %cst_52 = arith.constant dense<0.000000e+00> : vector<17x8xf32>
    %139 = tpu.matmul %138, %126, %cst_52 {dimension_numbers = #tpu.dot_dimension_numbers<[1], [0], [0], [1], [0, 0, 1, 1], [], []>} : vector<17x17xbf16>, vector<17x8xbf16>, vector<17x8xf32> -> vector<17x8xf32>
    %140 = arith.truncf %139 : vector<17x8xf32> to vector<17x8xbf16>
    %141 = vector.extract_strided_slice %40 {offsets = [24, 0], sizes = [8, 32], strides = [1, 1]} : vector<32x32xbf16> to vector<8x32xbf16>
    %cst_53 = arith.constant dense<0.000000e+00> : vector<17x32xf32>
    %142 = tpu.matmul %140, %141, %cst_53 {dimension_numbers = #tpu.dot_dimension_numbers<[1], [0], [0], [1], [0, 0, 1, 1], [], []>} : vector<17x8xbf16>, vector<8x32xbf16>, vector<17x32xf32> -> vector<17x32xf32>
    %143 = arith.addf %118, %142 : vector<17x32xf32>
    %144 = arith.addf %6, %143 : vector<17x32xf32>
    %c0_54 = arith.constant 0 : index
    %c0_55 = arith.constant 0 : index
    %c0_56 = arith.constant 0 : index
    %145 = vector.load %arg10[%c0_54, %c0_55, %c0_56] : memref<2x1x32xf32, #tpu.memory_space<vmem>>, vector<1x1x32xf32>
    %146 = vector.shape_cast %145 : vector<1x1x32xf32> to vector<1x32xf32>
    %c0_57 = arith.constant 0 : index
    %c0_58 = arith.constant 0 : index
    %c0_59 = arith.constant 0 : index
    %147 = vector.load %arg11[%c0_57, %c0_58, %c0_59] : memref<2x1x32xf32, #tpu.memory_space<vmem>>, vector<1x1x32xf32>
    %148 = vector.shape_cast %147 : vector<1x1x32xf32> to vector<1x32xf32>
    %cst_60 = arith.constant dense<0.000000e+00> : vector<17xf32>
    %149 = vector.multi_reduction <add>, %144, %cst_60 [1] : vector<17x32xf32> to vector<17xf32>
    %150 = vector.shape_cast %149 : vector<17xf32> to vector<17x1xf32>
    %cst_61 = arith.constant 3.200000e+01 : f32
    %151 = vector.broadcast %cst_61 : f32 to vector<17x1xf32>
    %152 = arith.divf %150, %151 : vector<17x1xf32>
    %153 = vector.broadcast %152 : vector<17x1xf32> to vector<17x32xf32>
    %154 = arith.subf %144, %153 : vector<17x32xf32>
    %155 = arith.mulf %154, %154 : vector<17x32xf32>
    %cst_62 = arith.constant dense<0.000000e+00> : vector<17xf32>
    %156 = vector.multi_reduction <add>, %155, %cst_62 [1] : vector<17x32xf32> to vector<17xf32>
    %157 = vector.shape_cast %156 : vector<17xf32> to vector<17x1xf32>
    %cst_63 = arith.constant 3.200000e+01 : f32
    %158 = vector.broadcast %cst_63 : f32 to vector<17x1xf32>
    %159 = arith.divf %157, %158 : vector<17x1xf32>
    %cst_64 = arith.constant 9.99999997E-7 : f32
    %160 = vector.broadcast %cst_64 : f32 to vector<17x1xf32>
    %161 = arith.addf %159, %160 : vector<17x1xf32>
    %162 = math.rsqrt %161 : vector<17x1xf32>
    %163 = vector.broadcast %162 : vector<17x1xf32> to vector<17x32xf32>
    %164 = arith.mulf %154, %163 : vector<17x32xf32>
    %165 = vector.broadcast %146 : vector<1x32xf32> to vector<17x32xf32>
    %166 = arith.mulf %164, %165 : vector<17x32xf32>
    %167 = vector.broadcast %148 : vector<1x32xf32> to vector<17x32xf32>
    %168 = arith.addf %166, %167 : vector<17x32xf32>
    %169 = arith.truncf %168 : vector<17x32xf32> to vector<17x32xbf16>
    %c0_65 = arith.constant 0 : index
    %c0_66 = arith.constant 0 : index
    %c0_67 = arith.constant 0 : index
    %170 = vector.load %arg12[%c0_65, %c0_66, %c0_67] : memref<2x32x128xbf16, #tpu.memory_space<vmem>>, vector<1x32x128xbf16>
    %171 = vector.shape_cast %170 : vector<1x32x128xbf16> to vector<32x128xbf16>
    %cst_68 = arith.constant dense<0.000000e+00> : vector<17x128xf32>
    %172 = tpu.matmul %169, %171, %cst_68 {dimension_numbers = #tpu.dot_dimension_numbers<[1], [0], [0], [1], [0, 0, 1, 1], [], []>} : vector<17x32xbf16>, vector<32x128xbf16>, vector<17x128xf32> -> vector<17x128xf32>
    %c0_69 = arith.constant 0 : index
    %c0_70 = arith.constant 0 : index
    %c0_71 = arith.constant 0 : index
    %173 = vector.load %arg13[%c0_69, %c0_70, %c0_71] : memref<2x1x128xf32, #tpu.memory_space<vmem>>, vector<1x1x128xf32>
    %174 = vector.shape_cast %173 : vector<1x1x128xf32> to vector<1x128xf32>
    %175 = vector.broadcast %174 : vector<1x128xf32> to vector<17x128xf32>
    %176 = arith.addf %172, %175 : vector<17x128xf32>
    %cst_72 = arith.constant 5.000000e-01 : f32
    %177 = vector.broadcast %cst_72 : f32 to vector<17x128xf32>
    %178 = arith.mulf %177, %176 : vector<17x128xf32>
    %cst_73 = arith.constant 0.707106769 : f32
    %179 = vector.broadcast %cst_73 : f32 to vector<17x128xf32>
    %180 = arith.mulf %176, %179 : vector<17x128xf32>
    %cst_74 = arith.constant 0.000000e+00 : f32
    %181 = vector.broadcast %cst_74 : f32 to vector<17x128xf32>
    %182 = arith.cmpf olt, %180, %181 : vector<17x128xf32>
    %cst_75 = arith.constant -1.000000e+00 : f32
    %cst_76 = arith.constant 1.000000e+00 : f32
    %183 = vector.broadcast %cst_75 : f32 to vector<17x128xf32>
    %184 = vector.broadcast %cst_76 : f32 to vector<17x128xf32>
    %185 = arith.select %182, %183, %184 : vector<17x128xi1>, vector<17x128xf32>
    %186 = math.absf %180 : vector<17x128xf32>
    %cst_77 = arith.constant 0.327591091 : f32
    %187 = vector.broadcast %cst_77 : f32 to vector<17x128xf32>
    %188 = arith.mulf %187, %186 : vector<17x128xf32>
    %cst_78 = arith.constant 1.000000e+00 : f32
    %189 = vector.broadcast %cst_78 : f32 to vector<17x128xf32>
    %190 = arith.addf %189, %188 : vector<17x128xf32>
    %cst_79 = arith.constant 1.000000e+00 : f32
    %191 = vector.broadcast %cst_79 : f32 to vector<17x128xf32>
    %192 = arith.divf %191, %190 : vector<17x128xf32>
    %cst_80 = arith.constant 1.06140542 : f32
    %193 = vector.broadcast %cst_80 : f32 to vector<17x128xf32>
    %194 = arith.mulf %192, %193 : vector<17x128xf32>
    %cst_81 = arith.constant -1.45315206 : f32
    %195 = vector.broadcast %cst_81 : f32 to vector<17x128xf32>
    %196 = arith.addf %195, %194 : vector<17x128xf32>
    %197 = arith.mulf %192, %196 : vector<17x128xf32>
    %cst_82 = arith.constant 1.42141378 : f32
    %198 = vector.broadcast %cst_82 : f32 to vector<17x128xf32>
    %199 = arith.addf %198, %197 : vector<17x128xf32>
    %200 = arith.mulf %192, %199 : vector<17x128xf32>
    %cst_83 = arith.constant -0.284496725 : f32
    %201 = vector.broadcast %cst_83 : f32 to vector<17x128xf32>
    %202 = arith.addf %201, %200 : vector<17x128xf32>
    %203 = arith.mulf %192, %202 : vector<17x128xf32>
    %cst_84 = arith.constant 0.254829586 : f32
    %204 = vector.broadcast %cst_84 : f32 to vector<17x128xf32>
    %205 = arith.addf %204, %203 : vector<17x128xf32>
    %206 = arith.mulf %192, %205 : vector<17x128xf32>
    %cst_85 = arith.constant 0.000000e+00 : f32
    %207 = vector.broadcast %cst_85 : f32 to vector<17x128xf32>
    %208 = arith.subf %207, %186 : vector<17x128xf32>
    %209 = arith.mulf %208, %186 : vector<17x128xf32>
    %210 = math.exp %209 : vector<17x128xf32>
    %211 = arith.mulf %206, %210 : vector<17x128xf32>
    %cst_86 = arith.constant 1.000000e+00 : f32
    %212 = vector.broadcast %cst_86 : f32 to vector<17x128xf32>
    %213 = arith.subf %212, %211 : vector<17x128xf32>
    %214 = arith.mulf %185, %213 : vector<17x128xf32>
    %cst_87 = arith.constant 1.000000e+00 : f32
    %215 = vector.broadcast %cst_87 : f32 to vector<17x128xf32>
    %216 = arith.addf %215, %214 : vector<17x128xf32>
    %217 = arith.mulf %178, %216 : vector<17x128xf32>
    %218 = arith.truncf %217 : vector<17x128xf32> to vector<17x128xbf16>
    %c0_88 = arith.constant 0 : index
    %c0_89 = arith.constant 0 : index
    %c0_90 = arith.constant 0 : index
    %219 = vector.load %arg14[%c0_88, %c0_89, %c0_90] : memref<2x128x32xbf16, #tpu.memory_space<vmem>>, vector<1x128x32xbf16>
    %220 = vector.shape_cast %219 : vector<1x128x32xbf16> to vector<128x32xbf16>
    %cst_91 = arith.constant dense<0.000000e+00> : vector<17x32xf32>
    %221 = tpu.matmul %218, %220, %cst_91 {dimension_numbers = #tpu.dot_dimension_numbers<[1], [0], [0], [1], [0, 0, 1, 1], [], []>} : vector<17x128xbf16>, vector<128x32xbf16>, vector<17x32xf32> -> vector<17x32xf32>
    %c0_92 = arith.constant 0 : index
    %c0_93 = arith.constant 0 : index
    %c0_94 = arith.constant 0 : index
    %222 = vector.load %arg15[%c0_92, %c0_93, %c0_94] : memref<2x1x32xf32, #tpu.memory_space<vmem>>, vector<1x1x32xf32>
    %223 = vector.shape_cast %222 : vector<1x1x32xf32> to vector<1x32xf32>
    %224 = vector.broadcast %223 : vector<1x32xf32> to vector<17x32xf32>
    %225 = arith.addf %221, %224 : vector<17x32xf32>
    %226 = arith.addf %144, %225 : vector<17x32xf32>
    %c1 = arith.constant 1 : index
    %c0_95 = arith.constant 0 : index
    %c0_96 = arith.constant 0 : index
    %227 = vector.load %arg4[%c1, %c0_95, %c0_96] : memref<2x1x32xf32, #tpu.memory_space<vmem>>, vector<1x1x32xf32>
    %228 = vector.shape_cast %227 : vector<1x1x32xf32> to vector<1x32xf32>
    %c1_97 = arith.constant 1 : index
    %c0_98 = arith.constant 0 : index
    %c0_99 = arith.constant 0 : index
    %229 = vector.load %arg5[%c1_97, %c0_98, %c0_99] : memref<2x1x32xf32, #tpu.memory_space<vmem>>, vector<1x1x32xf32>
    %230 = vector.shape_cast %229 : vector<1x1x32xf32> to vector<1x32xf32>
    %cst_100 = arith.constant dense<0.000000e+00> : vector<17xf32>
    %231 = vector.multi_reduction <add>, %226, %cst_100 [1] : vector<17x32xf32> to vector<17xf32>
    %232 = vector.shape_cast %231 : vector<17xf32> to vector<17x1xf32>
    %cst_101 = arith.constant 3.200000e+01 : f32
    %233 = vector.broadcast %cst_101 : f32 to vector<17x1xf32>
    %234 = arith.divf %232, %233 : vector<17x1xf32>
    %235 = vector.broadcast %234 : vector<17x1xf32> to vector<17x32xf32>
    %236 = arith.subf %226, %235 : vector<17x32xf32>
    %237 = arith.mulf %236, %236 : vector<17x32xf32>
    %cst_102 = arith.constant dense<0.000000e+00> : vector<17xf32>
    %238 = vector.multi_reduction <add>, %237, %cst_102 [1] : vector<17x32xf32> to vector<17xf32>
    %239 = vector.shape_cast %238 : vector<17xf32> to vector<17x1xf32>
    %cst_103 = arith.constant 3.200000e+01 : f32
    %240 = vector.broadcast %cst_103 : f32 to vector<17x1xf32>
    %241 = arith.divf %239, %240 : vector<17x1xf32>
    %cst_104 = arith.constant 9.99999997E-7 : f32
    %242 = vector.broadcast %cst_104 : f32 to vector<17x1xf32>
    %243 = arith.addf %241, %242 : vector<17x1xf32>
    %244 = math.rsqrt %243 : vector<17x1xf32>
    %245 = vector.broadcast %244 : vector<17x1xf32> to vector<17x32xf32>
    %246 = arith.mulf %236, %245 : vector<17x32xf32>
    %247 = vector.broadcast %228 : vector<1x32xf32> to vector<17x32xf32>
    %248 = arith.mulf %246, %247 : vector<17x32xf32>
    %249 = vector.broadcast %230 : vector<1x32xf32> to vector<17x32xf32>
    %250 = arith.addf %248, %249 : vector<17x32xf32>
    %251 = arith.truncf %250 : vector<17x32xf32> to vector<17x32xbf16>
    %c1_105 = arith.constant 1 : index
    %c0_106 = arith.constant 0 : index
    %c0_107 = arith.constant 0 : index
    %252 = vector.load %arg6[%c1_105, %c0_106, %c0_107] : memref<2x32x96xbf16, #tpu.memory_space<vmem>>, vector<1x32x96xbf16>
    %253 = vector.shape_cast %252 : vector<1x32x96xbf16> to vector<32x96xbf16>
    %cst_108 = arith.constant dense<0.000000e+00> : vector<17x96xf32>
    %254 = tpu.matmul %251, %253, %cst_108 {dimension_numbers = #tpu.dot_dimension_numbers<[1], [0], [0], [1], [0, 0, 1, 1], [], []>} : vector<17x32xbf16>, vector<32x96xbf16>, vector<17x96xf32> -> vector<17x96xf32>
    %c1_109 = arith.constant 1 : index
    %c0_110 = arith.constant 0 : index
    %c0_111 = arith.constant 0 : index
    %255 = vector.load %arg7[%c1_109, %c0_110, %c0_111] : memref<2x1x96xf32, #tpu.memory_space<vmem>>, vector<1x1x96xf32>
    %256 = vector.shape_cast %255 : vector<1x1x96xf32> to vector<1x96xf32>
    %257 = vector.broadcast %256 : vector<1x96xf32> to vector<17x96xf32>
    %258 = arith.addf %254, %257 : vector<17x96xf32>
    %c1_112 = arith.constant 1 : index
    %c0_113 = arith.constant 0 : index
    %c0_114 = arith.constant 0 : index
    %259 = vector.load %arg8[%c1_112, %c0_113, %c0_114] : memref<2x32x32xbf16, #tpu.memory_space<vmem>>, vector<1x32x32xbf16>
    %260 = vector.shape_cast %259 : vector<1x32x32xbf16> to vector<32x32xbf16>
    %c1_115 = arith.constant 1 : index
    %c0_116 = arith.constant 0 : index
    %c0_117 = arith.constant 0 : index
    %261 = vector.load %arg9[%c1_115, %c0_116, %c0_117] : memref<2x1x32xf32, #tpu.memory_space<vmem>>, vector<1x1x32xf32>
    %262 = vector.shape_cast %261 : vector<1x1x32xf32> to vector<1x32xf32>
    %263 = vector.extract_strided_slice %258 {offsets = [0, 0], sizes = [17, 8], strides = [1, 1]} : vector<17x96xf32> to vector<17x8xf32>
    %cst_118 = arith.constant 0.353553385 : f32
    %264 = vector.broadcast %cst_118 : f32 to vector<17x8xf32>
    %265 = arith.mulf %263, %264 : vector<17x8xf32>
    %266 = arith.truncf %265 : vector<17x8xf32> to vector<17x8xbf16>
    %267 = vector.extract_strided_slice %258 {offsets = [0, 32], sizes = [17, 8], strides = [1, 1]} : vector<17x96xf32> to vector<17x8xf32>
    %268 = arith.truncf %267 : vector<17x8xf32> to vector<17x8xbf16>
    %269 = vector.extract_strided_slice %258 {offsets = [0, 64], sizes = [17, 8], strides = [1, 1]} : vector<17x96xf32> to vector<17x8xf32>
    %270 = arith.truncf %269 : vector<17x8xf32> to vector<17x8xbf16>
    %cst_119 = arith.constant dense<0.000000e+00> : vector<17x17xf32>
    %271 = tpu.matmul %266, %268, %cst_119 {dimension_numbers = #tpu.dot_dimension_numbers<[1], [1], [0], [0], [0, 0, 1, 0], [], []>} : vector<17x8xbf16>, vector<17x8xbf16>, vector<17x17xf32> -> vector<17x17xf32>
    %cst_120 = arith.constant dense<0xFF800000> : vector<17xf32>
    %272 = vector.multi_reduction <maximumf>, %271, %cst_120 [1] : vector<17x17xf32> to vector<17xf32>
    %273 = vector.shape_cast %272 : vector<17xf32> to vector<17x1xf32>
    %274 = vector.broadcast %273 : vector<17x1xf32> to vector<17x17xf32>
    %275 = arith.subf %271, %274 : vector<17x17xf32>
    %276 = math.exp %275 : vector<17x17xf32>
    %cst_121 = arith.constant dense<0.000000e+00> : vector<17xf32>
    %277 = vector.multi_reduction <add>, %276, %cst_121 [1] : vector<17x17xf32> to vector<17xf32>
    %278 = vector.shape_cast %277 : vector<17xf32> to vector<17x1xf32>
    %279 = tpu.reciprocal %278 {approx = true} : vector<17x1xf32> -> vector<17x1xf32>
    %280 = vector.broadcast %279 : vector<17x1xf32> to vector<17x17xf32>
    %281 = arith.mulf %276, %280 : vector<17x17xf32>
    %282 = arith.truncf %281 : vector<17x17xf32> to vector<17x17xbf16>
    %cst_122 = arith.constant dense<0.000000e+00> : vector<17x8xf32>
    %283 = tpu.matmul %282, %270, %cst_122 {dimension_numbers = #tpu.dot_dimension_numbers<[1], [0], [0], [1], [0, 0, 1, 1], [], []>} : vector<17x17xbf16>, vector<17x8xbf16>, vector<17x8xf32> -> vector<17x8xf32>
    %284 = arith.truncf %283 : vector<17x8xf32> to vector<17x8xbf16>
    %285 = vector.extract_strided_slice %260 {offsets = [0, 0], sizes = [8, 32], strides = [1, 1]} : vector<32x32xbf16> to vector<8x32xbf16>
    %cst_123 = arith.constant dense<0.000000e+00> : vector<17x32xf32>
    %286 = tpu.matmul %284, %285, %cst_123 {dimension_numbers = #tpu.dot_dimension_numbers<[1], [0], [0], [1], [0, 0, 1, 1], [], []>} : vector<17x8xbf16>, vector<8x32xbf16>, vector<17x32xf32> -> vector<17x32xf32>
    %287 = vector.broadcast %262 : vector<1x32xf32> to vector<17x32xf32>
    %288 = arith.addf %287, %286 : vector<17x32xf32>
    %289 = vector.extract_strided_slice %258 {offsets = [0, 8], sizes = [17, 8], strides = [1, 1]} : vector<17x96xf32> to vector<17x8xf32>
    %cst_124 = arith.constant 0.353553385 : f32
    %290 = vector.broadcast %cst_124 : f32 to vector<17x8xf32>
    %291 = arith.mulf %289, %290 : vector<17x8xf32>
    %292 = arith.truncf %291 : vector<17x8xf32> to vector<17x8xbf16>
    %293 = vector.extract_strided_slice %258 {offsets = [0, 40], sizes = [17, 8], strides = [1, 1]} : vector<17x96xf32> to vector<17x8xf32>
    %294 = arith.truncf %293 : vector<17x8xf32> to vector<17x8xbf16>
    %295 = vector.extract_strided_slice %258 {offsets = [0, 72], sizes = [17, 8], strides = [1, 1]} : vector<17x96xf32> to vector<17x8xf32>
    %296 = arith.truncf %295 : vector<17x8xf32> to vector<17x8xbf16>
    %cst_125 = arith.constant dense<0.000000e+00> : vector<17x17xf32>
    %297 = tpu.matmul %292, %294, %cst_125 {dimension_numbers = #tpu.dot_dimension_numbers<[1], [1], [0], [0], [0, 0, 1, 0], [], []>} : vector<17x8xbf16>, vector<17x8xbf16>, vector<17x17xf32> -> vector<17x17xf32>
    %cst_126 = arith.constant dense<0xFF800000> : vector<17xf32>
    %298 = vector.multi_reduction <maximumf>, %297, %cst_126 [1] : vector<17x17xf32> to vector<17xf32>
    %299 = vector.shape_cast %298 : vector<17xf32> to vector<17x1xf32>
    %300 = vector.broadcast %299 : vector<17x1xf32> to vector<17x17xf32>
    %301 = arith.subf %297, %300 : vector<17x17xf32>
    %302 = math.exp %301 : vector<17x17xf32>
    %cst_127 = arith.constant dense<0.000000e+00> : vector<17xf32>
    %303 = vector.multi_reduction <add>, %302, %cst_127 [1] : vector<17x17xf32> to vector<17xf32>
    %304 = vector.shape_cast %303 : vector<17xf32> to vector<17x1xf32>
    %305 = tpu.reciprocal %304 {approx = true} : vector<17x1xf32> -> vector<17x1xf32>
    %306 = vector.broadcast %305 : vector<17x1xf32> to vector<17x17xf32>
    %307 = arith.mulf %302, %306 : vector<17x17xf32>
    %308 = arith.truncf %307 : vector<17x17xf32> to vector<17x17xbf16>
    %cst_128 = arith.constant dense<0.000000e+00> : vector<17x8xf32>
    %309 = tpu.matmul %308, %296, %cst_128 {dimension_numbers = #tpu.dot_dimension_numbers<[1], [0], [0], [1], [0, 0, 1, 1], [], []>} : vector<17x17xbf16>, vector<17x8xbf16>, vector<17x8xf32> -> vector<17x8xf32>
    %310 = arith.truncf %309 : vector<17x8xf32> to vector<17x8xbf16>
    %311 = vector.extract_strided_slice %260 {offsets = [8, 0], sizes = [8, 32], strides = [1, 1]} : vector<32x32xbf16> to vector<8x32xbf16>
    %cst_129 = arith.constant dense<0.000000e+00> : vector<17x32xf32>
    %312 = tpu.matmul %310, %311, %cst_129 {dimension_numbers = #tpu.dot_dimension_numbers<[1], [0], [0], [1], [0, 0, 1, 1], [], []>} : vector<17x8xbf16>, vector<8x32xbf16>, vector<17x32xf32> -> vector<17x32xf32>
    %313 = arith.addf %288, %312 : vector<17x32xf32>
    %314 = vector.extract_strided_slice %258 {offsets = [0, 16], sizes = [17, 8], strides = [1, 1]} : vector<17x96xf32> to vector<17x8xf32>
    %cst_130 = arith.constant 0.353553385 : f32
    %315 = vector.broadcast %cst_130 : f32 to vector<17x8xf32>
    %316 = arith.mulf %314, %315 : vector<17x8xf32>
    %317 = arith.truncf %316 : vector<17x8xf32> to vector<17x8xbf16>
    %318 = vector.extract_strided_slice %258 {offsets = [0, 48], sizes = [17, 8], strides = [1, 1]} : vector<17x96xf32> to vector<17x8xf32>
    %319 = arith.truncf %318 : vector<17x8xf32> to vector<17x8xbf16>
    %320 = vector.extract_strided_slice %258 {offsets = [0, 80], sizes = [17, 8], strides = [1, 1]} : vector<17x96xf32> to vector<17x8xf32>
    %321 = arith.truncf %320 : vector<17x8xf32> to vector<17x8xbf16>
    %cst_131 = arith.constant dense<0.000000e+00> : vector<17x17xf32>
    %322 = tpu.matmul %317, %319, %cst_131 {dimension_numbers = #tpu.dot_dimension_numbers<[1], [1], [0], [0], [0, 0, 1, 0], [], []>} : vector<17x8xbf16>, vector<17x8xbf16>, vector<17x17xf32> -> vector<17x17xf32>
    %cst_132 = arith.constant dense<0xFF800000> : vector<17xf32>
    %323 = vector.multi_reduction <maximumf>, %322, %cst_132 [1] : vector<17x17xf32> to vector<17xf32>
    %324 = vector.shape_cast %323 : vector<17xf32> to vector<17x1xf32>
    %325 = vector.broadcast %324 : vector<17x1xf32> to vector<17x17xf32>
    %326 = arith.subf %322, %325 : vector<17x17xf32>
    %327 = math.exp %326 : vector<17x17xf32>
    %cst_133 = arith.constant dense<0.000000e+00> : vector<17xf32>
    %328 = vector.multi_reduction <add>, %327, %cst_133 [1] : vector<17x17xf32> to vector<17xf32>
    %329 = vector.shape_cast %328 : vector<17xf32> to vector<17x1xf32>
    %330 = tpu.reciprocal %329 {approx = true} : vector<17x1xf32> -> vector<17x1xf32>
    %331 = vector.broadcast %330 : vector<17x1xf32> to vector<17x17xf32>
    %332 = arith.mulf %327, %331 : vector<17x17xf32>
    %333 = arith.truncf %332 : vector<17x17xf32> to vector<17x17xbf16>
    %cst_134 = arith.constant dense<0.000000e+00> : vector<17x8xf32>
    %334 = tpu.matmul %333, %321, %cst_134 {dimension_numbers = #tpu.dot_dimension_numbers<[1], [0], [0], [1], [0, 0, 1, 1], [], []>} : vector<17x17xbf16>, vector<17x8xbf16>, vector<17x8xf32> -> vector<17x8xf32>
    %335 = arith.truncf %334 : vector<17x8xf32> to vector<17x8xbf16>
    %336 = vector.extract_strided_slice %260 {offsets = [16, 0], sizes = [8, 32], strides = [1, 1]} : vector<32x32xbf16> to vector<8x32xbf16>
    %cst_135 = arith.constant dense<0.000000e+00> : vector<17x32xf32>
    %337 = tpu.matmul %335, %336, %cst_135 {dimension_numbers = #tpu.dot_dimension_numbers<[1], [0], [0], [1], [0, 0, 1, 1], [], []>} : vector<17x8xbf16>, vector<8x32xbf16>, vector<17x32xf32> -> vector<17x32xf32>
    %338 = arith.addf %313, %337 : vector<17x32xf32>
    %339 = vector.extract_strided_slice %258 {offsets = [0, 24], sizes = [17, 8], strides = [1, 1]} : vector<17x96xf32> to vector<17x8xf32>
    %cst_136 = arith.constant 0.353553385 : f32
    %340 = vector.broadcast %cst_136 : f32 to vector<17x8xf32>
    %341 = arith.mulf %339, %340 : vector<17x8xf32>
    %342 = arith.truncf %341 : vector<17x8xf32> to vector<17x8xbf16>
    %343 = vector.extract_strided_slice %258 {offsets = [0, 56], sizes = [17, 8], strides = [1, 1]} : vector<17x96xf32> to vector<17x8xf32>
    %344 = arith.truncf %343 : vector<17x8xf32> to vector<17x8xbf16>
    %345 = vector.extract_strided_slice %258 {offsets = [0, 88], sizes = [17, 8], strides = [1, 1]} : vector<17x96xf32> to vector<17x8xf32>
    %346 = arith.truncf %345 : vector<17x8xf32> to vector<17x8xbf16>
    %cst_137 = arith.constant dense<0.000000e+00> : vector<17x17xf32>
    %347 = tpu.matmul %342, %344, %cst_137 {dimension_numbers = #tpu.dot_dimension_numbers<[1], [1], [0], [0], [0, 0, 1, 0], [], []>} : vector<17x8xbf16>, vector<17x8xbf16>, vector<17x17xf32> -> vector<17x17xf32>
    %cst_138 = arith.constant dense<0xFF800000> : vector<17xf32>
    %348 = vector.multi_reduction <maximumf>, %347, %cst_138 [1] : vector<17x17xf32> to vector<17xf32>
    %349 = vector.shape_cast %348 : vector<17xf32> to vector<17x1xf32>
    %350 = vector.broadcast %349 : vector<17x1xf32> to vector<17x17xf32>
    %351 = arith.subf %347, %350 : vector<17x17xf32>
    %352 = math.exp %351 : vector<17x17xf32>
    %cst_139 = arith.constant dense<0.000000e+00> : vector<17xf32>
    %353 = vector.multi_reduction <add>, %352, %cst_139 [1] : vector<17x17xf32> to vector<17xf32>
    %354 = vector.shape_cast %353 : vector<17xf32> to vector<17x1xf32>
    %355 = tpu.reciprocal %354 {approx = true} : vector<17x1xf32> -> vector<17x1xf32>
    %356 = vector.broadcast %355 : vector<17x1xf32> to vector<17x17xf32>
    %357 = arith.mulf %352, %356 : vector<17x17xf32>
    %358 = arith.truncf %357 : vector<17x17xf32> to vector<17x17xbf16>
    %cst_140 = arith.constant dense<0.000000e+00> : vector<17x8xf32>
    %359 = tpu.matmul %358, %346, %cst_140 {dimension_numbers = #tpu.dot_dimension_numbers<[1], [0], [0], [1], [0, 0, 1, 1], [], []>} : vector<17x17xbf16>, vector<17x8xbf16>, vector<17x8xf32> -> vector<17x8xf32>
    %360 = arith.truncf %359 : vector<17x8xf32> to vector<17x8xbf16>
    %361 = vector.extract_strided_slice %260 {offsets = [24, 0], sizes = [8, 32], strides = [1, 1]} : vector<32x32xbf16> to vector<8x32xbf16>
    %cst_141 = arith.constant dense<0.000000e+00> : vector<17x32xf32>
    %362 = tpu.matmul %360, %361, %cst_141 {dimension_numbers = #tpu.dot_dimension_numbers<[1], [0], [0], [1], [0, 0, 1, 1], [], []>} : vector<17x8xbf16>, vector<8x32xbf16>, vector<17x32xf32> -> vector<17x32xf32>
    %363 = arith.addf %338, %362 : vector<17x32xf32>
    %364 = arith.addf %226, %363 : vector<17x32xf32>
    %c1_142 = arith.constant 1 : index
    %c0_143 = arith.constant 0 : index
    %c0_144 = arith.constant 0 : index
    %365 = vector.load %arg10[%c1_142, %c0_143, %c0_144] : memref<2x1x32xf32, #tpu.memory_space<vmem>>, vector<1x1x32xf32>
    %366 = vector.shape_cast %365 : vector<1x1x32xf32> to vector<1x32xf32>
    %c1_145 = arith.constant 1 : index
    %c0_146 = arith.constant 0 : index
    %c0_147 = arith.constant 0 : index
    %367 = vector.load %arg11[%c1_145, %c0_146, %c0_147] : memref<2x1x32xf32, #tpu.memory_space<vmem>>, vector<1x1x32xf32>
    %368 = vector.shape_cast %367 : vector<1x1x32xf32> to vector<1x32xf32>
    %cst_148 = arith.constant dense<0.000000e+00> : vector<17xf32>
    %369 = vector.multi_reduction <add>, %364, %cst_148 [1] : vector<17x32xf32> to vector<17xf32>
    %370 = vector.shape_cast %369 : vector<17xf32> to vector<17x1xf32>
    %cst_149 = arith.constant 3.200000e+01 : f32
    %371 = vector.broadcast %cst_149 : f32 to vector<17x1xf32>
    %372 = arith.divf %370, %371 : vector<17x1xf32>
    %373 = vector.broadcast %372 : vector<17x1xf32> to vector<17x32xf32>
    %374 = arith.subf %364, %373 : vector<17x32xf32>
    %375 = arith.mulf %374, %374 : vector<17x32xf32>
    %cst_150 = arith.constant dense<0.000000e+00> : vector<17xf32>
    %376 = vector.multi_reduction <add>, %375, %cst_150 [1] : vector<17x32xf32> to vector<17xf32>
    %377 = vector.shape_cast %376 : vector<17xf32> to vector<17x1xf32>
    %cst_151 = arith.constant 3.200000e+01 : f32
    %378 = vector.broadcast %cst_151 : f32 to vector<17x1xf32>
    %379 = arith.divf %377, %378 : vector<17x1xf32>
    %cst_152 = arith.constant 9.99999997E-7 : f32
    %380 = vector.broadcast %cst_152 : f32 to vector<17x1xf32>
    %381 = arith.addf %379, %380 : vector<17x1xf32>
    %382 = math.rsqrt %381 : vector<17x1xf32>
    %383 = vector.broadcast %382 : vector<17x1xf32> to vector<17x32xf32>
    %384 = arith.mulf %374, %383 : vector<17x32xf32>
    %385 = vector.broadcast %366 : vector<1x32xf32> to vector<17x32xf32>
    %386 = arith.mulf %384, %385 : vector<17x32xf32>
    %387 = vector.broadcast %368 : vector<1x32xf32> to vector<17x32xf32>
    %388 = arith.addf %386, %387 : vector<17x32xf32>
    %389 = arith.truncf %388 : vector<17x32xf32> to vector<17x32xbf16>
    %c1_153 = arith.constant 1 : index
    %c0_154 = arith.constant 0 : index
    %c0_155 = arith.constant 0 : index
    %390 = vector.load %arg12[%c1_153, %c0_154, %c0_155] : memref<2x32x128xbf16, #tpu.memory_space<vmem>>, vector<1x32x128xbf16>
    %391 = vector.shape_cast %390 : vector<1x32x128xbf16> to vector<32x128xbf16>
    %cst_156 = arith.constant dense<0.000000e+00> : vector<17x128xf32>
    %392 = tpu.matmul %389, %391, %cst_156 {dimension_numbers = #tpu.dot_dimension_numbers<[1], [0], [0], [1], [0, 0, 1, 1], [], []>} : vector<17x32xbf16>, vector<32x128xbf16>, vector<17x128xf32> -> vector<17x128xf32>
    %c1_157 = arith.constant 1 : index
    %c0_158 = arith.constant 0 : index
    %c0_159 = arith.constant 0 : index
    %393 = vector.load %arg13[%c1_157, %c0_158, %c0_159] : memref<2x1x128xf32, #tpu.memory_space<vmem>>, vector<1x1x128xf32>
    %394 = vector.shape_cast %393 : vector<1x1x128xf32> to vector<1x128xf32>
    %395 = vector.broadcast %394 : vector<1x128xf32> to vector<17x128xf32>
    %396 = arith.addf %392, %395 : vector<17x128xf32>
    %cst_160 = arith.constant 5.000000e-01 : f32
    %397 = vector.broadcast %cst_160 : f32 to vector<17x128xf32>
    %398 = arith.mulf %397, %396 : vector<17x128xf32>
    %cst_161 = arith.constant 0.707106769 : f32
    %399 = vector.broadcast %cst_161 : f32 to vector<17x128xf32>
    %400 = arith.mulf %396, %399 : vector<17x128xf32>
    %cst_162 = arith.constant 0.000000e+00 : f32
    %401 = vector.broadcast %cst_162 : f32 to vector<17x128xf32>
    %402 = arith.cmpf olt, %400, %401 : vector<17x128xf32>
    %cst_163 = arith.constant -1.000000e+00 : f32
    %cst_164 = arith.constant 1.000000e+00 : f32
    %403 = vector.broadcast %cst_163 : f32 to vector<17x128xf32>
    %404 = vector.broadcast %cst_164 : f32 to vector<17x128xf32>
    %405 = arith.select %402, %403, %404 : vector<17x128xi1>, vector<17x128xf32>
    %406 = math.absf %400 : vector<17x128xf32>
    %cst_165 = arith.constant 0.327591091 : f32
    %407 = vector.broadcast %cst_165 : f32 to vector<17x128xf32>
    %408 = arith.mulf %407, %406 : vector<17x128xf32>
    %cst_166 = arith.constant 1.000000e+00 : f32
    %409 = vector.broadcast %cst_166 : f32 to vector<17x128xf32>
    %410 = arith.addf %409, %408 : vector<17x128xf32>
    %cst_167 = arith.constant 1.000000e+00 : f32
    %411 = vector.broadcast %cst_167 : f32 to vector<17x128xf32>
    %412 = arith.divf %411, %410 : vector<17x128xf32>
    %cst_168 = arith.constant 1.06140542 : f32
    %413 = vector.broadcast %cst_168 : f32 to vector<17x128xf32>
    %414 = arith.mulf %412, %413 : vector<17x128xf32>
    %cst_169 = arith.constant -1.45315206 : f32
    %415 = vector.broadcast %cst_169 : f32 to vector<17x128xf32>
    %416 = arith.addf %415, %414 : vector<17x128xf32>
    %417 = arith.mulf %412, %416 : vector<17x128xf32>
    %cst_170 = arith.constant 1.42141378 : f32
    %418 = vector.broadcast %cst_170 : f32 to vector<17x128xf32>
    %419 = arith.addf %418, %417 : vector<17x128xf32>
    %420 = arith.mulf %412, %419 : vector<17x128xf32>
    %cst_171 = arith.constant -0.284496725 : f32
    %421 = vector.broadcast %cst_171 : f32 to vector<17x128xf32>
    %422 = arith.addf %421, %420 : vector<17x128xf32>
    %423 = arith.mulf %412, %422 : vector<17x128xf32>
    %cst_172 = arith.constant 0.254829586 : f32
    %424 = vector.broadcast %cst_172 : f32 to vector<17x128xf32>
    %425 = arith.addf %424, %423 : vector<17x128xf32>
    %426 = arith.mulf %412, %425 : vector<17x128xf32>
    %cst_173 = arith.constant 0.000000e+00 : f32
    %427 = vector.broadcast %cst_173 : f32 to vector<17x128xf32>
    %428 = arith.subf %427, %406 : vector<17x128xf32>
    %429 = arith.mulf %428, %406 : vector<17x128xf32>
    %430 = math.exp %429 : vector<17x128xf32>
    %431 = arith.mulf %426, %430 : vector<17x128xf32>
    %cst_174 = arith.constant 1.000000e+00 : f32
    %432 = vector.broadcast %cst_174 : f32 to vector<17x128xf32>
    %433 = arith.subf %432, %431 : vector<17x128xf32>
    %434 = arith.mulf %405, %433 : vector<17x128xf32>
    %cst_175 = arith.constant 1.000000e+00 : f32
    %435 = vector.broadcast %cst_175 : f32 to vector<17x128xf32>
    %436 = arith.addf %435, %434 : vector<17x128xf32>
    %437 = arith.mulf %398, %436 : vector<17x128xf32>
    %438 = arith.truncf %437 : vector<17x128xf32> to vector<17x128xbf16>
    %c1_176 = arith.constant 1 : index
    %c0_177 = arith.constant 0 : index
    %c0_178 = arith.constant 0 : index
    %439 = vector.load %arg14[%c1_176, %c0_177, %c0_178] : memref<2x128x32xbf16, #tpu.memory_space<vmem>>, vector<1x128x32xbf16>
    %440 = vector.shape_cast %439 : vector<1x128x32xbf16> to vector<128x32xbf16>
    %cst_179 = arith.constant dense<0.000000e+00> : vector<17x32xf32>
    %441 = tpu.matmul %438, %440, %cst_179 {dimension_numbers = #tpu.dot_dimension_numbers<[1], [0], [0], [1], [0, 0, 1, 1], [], []>} : vector<17x128xbf16>, vector<128x32xbf16>, vector<17x32xf32> -> vector<17x32xf32>
    %c1_180 = arith.constant 1 : index
    %c0_181 = arith.constant 0 : index
    %c0_182 = arith.constant 0 : index
    %442 = vector.load %arg15[%c1_180, %c0_181, %c0_182] : memref<2x1x32xf32, #tpu.memory_space<vmem>>, vector<1x1x32xf32>
    %443 = vector.shape_cast %442 : vector<1x1x32xf32> to vector<1x32xf32>
    %444 = vector.broadcast %443 : vector<1x32xf32> to vector<17x32xf32>
    %445 = arith.addf %441, %444 : vector<17x32xf32>
    %446 = arith.addf %364, %445 : vector<17x32xf32>
    %c0_183 = arith.constant 0 : index
    %c0_184 = arith.constant 0 : index
    %447 = vector.load %arg16[%c0_183, %c0_184] : memref<1x32xf32, #tpu.memory_space<vmem>>, vector<1x32xf32>
    %c0_185 = arith.constant 0 : index
    %c0_186 = arith.constant 0 : index
    %448 = vector.load %arg17[%c0_185, %c0_186] : memref<1x32xf32, #tpu.memory_space<vmem>>, vector<1x32xf32>
    %cst_187 = arith.constant dense<0.000000e+00> : vector<17xf32>
    %449 = vector.multi_reduction <add>, %446, %cst_187 [1] : vector<17x32xf32> to vector<17xf32>
    %450 = vector.shape_cast %449 : vector<17xf32> to vector<17x1xf32>
    %cst_188 = arith.constant 3.200000e+01 : f32
    %451 = vector.broadcast %cst_188 : f32 to vector<17x1xf32>
    %452 = arith.divf %450, %451 : vector<17x1xf32>
    %453 = vector.broadcast %452 : vector<17x1xf32> to vector<17x32xf32>
    %454 = arith.subf %446, %453 : vector<17x32xf32>
    %455 = arith.mulf %454, %454 : vector<17x32xf32>
    %cst_189 = arith.constant dense<0.000000e+00> : vector<17xf32>
    %456 = vector.multi_reduction <add>, %455, %cst_189 [1] : vector<17x32xf32> to vector<17xf32>
    %457 = vector.shape_cast %456 : vector<17xf32> to vector<17x1xf32>
    %cst_190 = arith.constant 3.200000e+01 : f32
    %458 = vector.broadcast %cst_190 : f32 to vector<17x1xf32>
    %459 = arith.divf %457, %458 : vector<17x1xf32>
    %cst_191 = arith.constant 9.99999997E-7 : f32
    %460 = vector.broadcast %cst_191 : f32 to vector<17x1xf32>
    %461 = arith.addf %459, %460 : vector<17x1xf32>
    %462 = math.rsqrt %461 : vector<17x1xf32>
    %463 = vector.broadcast %462 : vector<17x1xf32> to vector<17x32xf32>
    %464 = arith.mulf %454, %463 : vector<17x32xf32>
    %465 = vector.broadcast %447 : vector<1x32xf32> to vector<17x32xf32>
    %466 = arith.mulf %464, %465 : vector<17x32xf32>
    %467 = vector.broadcast %448 : vector<1x32xf32> to vector<17x32xf32>
    %468 = arith.addf %466, %467 : vector<17x32xf32>
    %c0_192 = arith.constant 0 : index
    %c0_193 = arith.constant 0 : index
    %c0_194 = arith.constant 0 : index
    %469 = vector.load %arg18[%c0_192, %c0_193, %c0_194] : memref<1x17x32xf32, #tpu.memory_space<vmem>>, vector<1x17x32xf32>
    %470 = vector.shape_cast %469 : vector<1x17x32xf32> to vector<17x32xf32>
    %471 = vector.shape_cast %468 : vector<17x32xf32> to vector<1x17x32xf32>
    tpu.vector_store %arg18[%c0_192, %c0_193, %c0_194], %471 {strides = array<i32>} : memref<1x17x32xf32, #tpu.memory_space<vmem>>, vector<1x17x32xf32>,
    return
  }
  func.func @transform_0(%arg0: i32) -> (i32, i32, i32) {
    %c0_i32 = arith.constant 0 : i32
    %c0_i32_0 = arith.constant 0 : i32
    %c0_i32_1 = arith.constant 0 : i32
    return %arg0, %c0_i32, %c0_i32_0 : i32, i32, i32
  }
  func.func @transform_1(%arg0: i32) -> (i32, i32) {
    %c0_i32 = arith.constant 0 : i32
    %c0_i32_0 = arith.constant 0 : i32
    %c0_i32_1 = arith.constant 0 : i32
    return %c0_i32, %c0_i32_0 : i32, i32
  }
  func.func @transform_2(%arg0: i32) -> (i32, i32) {
    %c0_i32 = arith.constant 0 : i32
    %c0_i32_0 = arith.constant 0 : i32
    %c0_i32_1 = arith.constant 0 : i32
    return %c0_i32, %c0_i32_0 : i32, i32
  }
  func.func @transform_3(%arg0: i32) -> (i32, i32, i32) {
    %c0_i32 = arith.constant 0 : i32
    %c0_i32_0 = arith.constant 0 : i32
    %c0_i32_1 = arith.constant 0 : i32
    %c0_i32_2 = arith.constant 0 : i32
    return %c0_i32, %c0_i32_0, %c0_i32_1 : i32, i32, i32
  }
  func.func @transform_4(%arg0: i32) -> (i32, i32, i32) {
    %c0_i32 = arith.constant 0 : i32
    %c0_i32_0 = arith.constant 0 : i32
    %c0_i32_1 = arith.constant 0 : i32
    %c0_i32_2 = arith.constant 0 : i32
    return %c0_i32, %c0_i32_0, %c0_i32_1 : i32, i32, i32
  }
  func.func @transform_5(%arg0: i32) -> (i32, i32, i32) {
    %c0_i32 = arith.constant 0 : i32
    %c0_i32_0 = arith.constant 0 : i32
    %c0_i32_1 = arith.constant 0 : i32
    %c0_i32_2 = arith.constant 0 : i32
    return %c0_i32, %c0_i32_0, %c0_i32_1 : i32, i32, i32
  }
  func.func @transform_6(%arg0: i32) -> (i32, i32, i32) {
    %c0_i32 = arith.constant 0 : i32
    %c0_i32_0 = arith.constant 0 : i32
    %c0_i32_1 = arith.constant 0 : i32
    %c0_i32_2 = arith.constant 0 : i32
    return %c0_i32, %c0_i32_0, %c0_i32_1 : i32, i32, i32
  }
  func.func @transform_7(%arg0: i32) -> (i32, i32, i32) {
    %c0_i32 = arith.constant 0 : i32
    %c0_i32_0 = arith.constant 0 : i32
    %c0_i32_1 = arith.constant 0 : i32
    %c0_i32_2 = arith.constant 0 : i32
    return %c0_i32, %c0_i32_0, %c0_i32_1 : i32, i32, i32
  }
  func.func @transform_8(%arg0: i32) -> (i32, i32, i32) {
    %c0_i32 = arith.constant 0 : i32
    %c0_i32_0 = arith.constant 0 : i32
    %c0_i32_1 = arith.constant 0 : i32
    %c0_i32_2 = arith.constant 0 : i32
    return %c0_i32, %c0_i32_0, %c0_i32_1 : i32, i32, i32
  }
  func.func @transform_9(%arg0: i32) -> (i32, i32, i32) {
    %c0_i32 = arith.constant 0 : i32
    %c0_i32_0 = arith.constant 0 : i32
    %c0_i32_1 = arith.constant 0 : i32
    %c0_i32_2 = arith.constant 0 : i32
    return %c0_i32, %c0_i32_0, %c0_i32_1 : i32, i32, i32
  }
  func.func @transform_10(%arg0: i32) -> (i32, i32, i32) {
    %c0_i32 = arith.constant 0 : i32
    %c0_i32_0 = arith.constant 0 : i32
    %c0_i32_1 = arith.constant 0 : i32
    %c0_i32_2 = arith.constant 0 : i32
    return %c0_i32, %c0_i32_0, %c0_i32_1 : i32, i32, i32
  }
  func.func @transform_11(%arg0: i32) -> (i32, i32, i32) {
    %c0_i32 = arith.constant 0 : i32
    %c0_i32_0 = arith.constant 0 : i32
    %c0_i32_1 = arith.constant 0 : i32
    %c0_i32_2 = arith.constant 0 : i32
    return %c0_i32, %c0_i32_0, %c0_i32_1 : i32, i32, i32
  }
  func.func @transform_12(%arg0: i32) -> (i32, i32, i32) {
    %c0_i32 = arith.constant 0 : i32
    %c0_i32_0 = arith.constant 0 : i32
    %c0_i32_1 = arith.constant 0 : i32
    %c0_i32_2 = arith.constant 0 : i32
    return %c0_i32, %c0_i32_0, %c0_i32_1 : i32, i32, i32
  }
  func.func @transform_13(%arg0: i32) -> (i32, i32, i32) {
    %c0_i32 = arith.constant 0 : i32
    %c0_i32_0 = arith.constant 0 : i32
    %c0_i32_1 = arith.constant 0 : i32
    %c0_i32_2 = arith.constant 0 : i32
    return %c0_i32, %c0_i32_0, %c0_i32_1 : i32, i32, i32
  }
  func.func @transform_14(%arg0: i32) -> (i32, i32, i32) {
    %c0_i32 = arith.constant 0 : i32
    %c0_i32_0 = arith.constant 0 : i32
    %c0_i32_1 = arith.constant 0 : i32
    %c0_i32_2 = arith.constant 0 : i32
    return %c0_i32, %c0_i32_0, %c0_i32_1 : i32, i32, i32
  }
  func.func @transform_15(%arg0: i32) -> (i32, i32) {
    %c0_i32 = arith.constant 0 : i32
    %c0_i32_0 = arith.constant 0 : i32
    %c0_i32_1 = arith.constant 0 : i32
    return %c0_i32, %c0_i32_0 : i32, i32
  }
  func.func @transform_16(%arg0: i32) -> (i32, i32) {
    %c0_i32 = arith.constant 0 : i32
    %c0_i32_0 = arith.constant 0 : i32
    %c0_i32_1 = arith.constant 0 : i32
    return %c0_i32, %c0_i32_0 : i32, i32
  }
  func.func @transform_17(%arg0: i32) -> (i32, i32, i32) {
    %c0_i32 = arith.constant 0 : i32
    %c0_i32_0 = arith.constant 0 : i32
    %c0_i32_1 = arith.constant 0 : i32
    return %arg0, %c0_i32, %c0_i32_0 : i32, i32, i32
  }
}

</mosaic_0001>

<llo_original>
// kernel: vit_encoder_forward.1
$region0: #{vit_encoder_forward.1}
  #allocation0 [shape = 'u32[]', space=smem, size = 0x4, offset = 0x4, fixed_abs, tag = 'smem constant byte address 0x4 - core index']
  #allocation1 [shape = 'u32[72,128]{1,0:T(1,128)}', space=vmem, size = 0x9000, scoped, tag = 'internal scratch']
  %s0 = inlined_call_operand.vmem [shape: f32[2,17,194], index: 0, kind: input, shape index: {}]
  %s1 = inlined_call_operand.vmem [shape: bf16[194,32], index: 1, kind: input, shape index: {}]
  %s2 = inlined_call_operand.vmem [shape: f32[17,32], index: 2, kind: input, shape index: {}]
  %s3 = inlined_call_operand.vmem [shape: f32[2,1,32], index: 3, kind: input, shape index: {}]
  %s4 = inlined_call_operand.vmem [shape: f32[2,1,32], index: 4, kind: input, shape index: {}]
  %s5 = inlined_call_operand.vmem [shape: bf16[2,32,96], index: 5, kind: input, shape index: {}]
  %s6 = inlined_call_operand.vmem [shape: f32[2,1,96], index: 6, kind: input, shape index: {}]
  %s7 = inlined_call_operand.vmem [shape: bf16[2,32,32], index: 7, kind: input, shape index: {}]
  %s8 = inlined_call_operand.vmem [shape: f32[2,1,32], index: 8, kind: input, shape index: {}]
  %s9 = inlined_call_operand.vmem [shape: f32[2,1,32], index: 9, kind: input, shape index: {}]
  %s10 = inlined_call_operand.vmem [shape: f32[2,1,32], index: 10, kind: input, shape index: {}]
  %s11 = inlined_call_operand.vmem [shape: bf16[2,32,128], index: 11, kind: input, shape index: {}]
  %s12 = inlined_call_operand.vmem [shape: f32[2,1,128], index: 12, kind: input, shape index: {}]
  %s13 = inlined_call_operand.vmem [shape: bf16[2,128,32], index: 13, kind: input, shape index: {}]
  %s14 = inlined_call_operand.vmem [shape: f32[2,1,32], index: 14, kind: input, shape index: {}]
  %s15 = inlined_call_operand.vmem [shape: f32[1,32], index: 15, kind: input, shape index: {}]
  %s16 = inlined_call_operand.vmem [shape: f32[1,32], index: 16, kind: input, shape index: {}]
  %s17 = inlined_call_operand.vmem [shape: f32[2,17,32], index: 17, kind: output, shape index: {}]
  %s18 = sld [smem:[#allocation0]]
  $region101: #{vit_encoder_forward.1} parent=0
    _
  %s20 = ssub.s32 1, %s18
  %s21 = scalar_select 0, %s20, %s18
  loop: start=0, step=1, limit=4
  $region2: #{vit_encoder_forward.1} parent=0 // loop_pre_header
    _
  $region3: #{vit_encoder_forward.1} parent=0 // loop_header
    %s23 = sphi 0, %s27
    %p24 = scmp.ge.s32.totalorder %s23, 4
    %s33 = sphi 0, %s35
    %s36 = sphi 0, %s33
    %s37 = sphi 0, %s36
    %s53 = sphi 0, %s37
    %s57 = sphi 0, %s57
    %s59 = sphi 0, %s57
    %s60 = sphi 0, %s59
    %s74 = sphi 0, %s60
    %s78 = sphi 0, %s78
    %s80 = sphi 0, %s78
    %s81 = sphi 0, %s80
    %s95 = sphi 0, %s81
    %s99 = sphi 0, %s99
    %s101 = sphi 0, %s99
    %s102 = sphi 0, %s101
    %s116 = sphi 0, %s102
    %s120 = sphi 0, %s120
    %s122 = sphi 0, %s120
    %s123 = sphi 0, %s122
    %s137 = sphi 0, %s123
    %s141 = sphi 0, %s141
    %s143 = sphi 0, %s141
    %s144 = sphi 0, %s143
    %s158 = sphi 0, %s144
    %s162 = sphi 0, %s162
    %s164 = sphi 0, %s162
    %s165 = sphi 0, %s164
    %s179 = sphi 0, %s165
    %s183 = sphi 0, %s183
    %s185 = sphi 0, %s183
    %s186 = sphi 0, %s185
    %s200 = sphi 0, %s186
    %s204 = sphi 0, %s204
    %s206 = sphi 0, %s204
    %s207 = sphi 0, %s206
    %s221 = sphi 0, %s207
    %s225 = sphi 0, %s225
    %s227 = sphi 0, %s225
    %s228 = sphi 0, %s227
    %s242 = sphi 0, %s228
    %s246 = sphi 0, %s246
    %s248 = sphi 0, %s246
    %s249 = sphi 0, %s248
    %s263 = sphi 0, %s249
    %s267 = sphi 0, %s267
    %s269 = sphi 0, %s267
    %s270 = sphi 0, %s269
    %s284 = sphi 0, %s270
    %s288 = sphi 0, %s288
    %s290 = sphi 0, %s288
    %s291 = sphi 0, %s290
    %s305 = sphi 0, %s291
    %s309 = sphi 0, %s309
    %s311 = sphi 0, %s309
    %s312 = sphi 0, %s311
    %s326 = sphi 0, %s312
    %s330 = sphi 0, %s330
    %s332 = sphi 0, %s330
    %s333 = sphi 0, %s332
    %s347 = sphi 0, %s333
    %s351 = sphi 0, %s351
    %s353 = sphi 0, %s351
    %s354 = sphi 0, %s353
    %s368 = sphi 0, %s354
    %s372 = sphi 0, %s372
    %s374 = sphi 0, %s372
    %s375 = sphi 0, %s374
    %s389 = sphi 0, %s375
    %s395 = sphi 0, %s397
    %s398 = sphi 0, %s395
    %s399 = sphi 0, %s398
    %s415 = sphi 0, %s399
  $region4: #{vit_encoder_forward.1} parent=0 // loop_header_branch
    %26 = sbr.rel (%p24) target = $region8
  $region5: #{vit_encoder_forward.1} parent=0 // loop_body
    %s28 = ssub.s32 %s23, 1
    %s29 = ssub.s32 %s23, 2
    %s30 = sadd.s32 %s23, 1
    %s31 = ssub.s32 %s23, %s30
    %p32 = scmp.eq.s32.totalorder %s31, 0
    %s34 = sadd.s32 %s33, 1
    %s35 = scalar_select %p32, %s33, %s34
    %p38 = pneg %p32
    %p39 = scmp.eq.s32.totalorder %s23, 1
    %p40 = por %p38, %p39
    %p41 = scmp.ne.s32.totalorder %s33, %s36
    %p42 = scmp.eq.s32.totalorder %s23, 0
    %p43 = por %p41, %p42
    %p44 = scmp.ne.s32.totalorder %s33, %s36
    %p45 = scmp.eq.s32.totalorder %s28, 1
    %p46 = por %p44, %p45
    %p47 = scmp.ne.s32.totalorder %s36, %s37
    %p48 = scmp.eq.s32.totalorder %s28, 0
    %p49 = por %p47, %p48
    %p50 = scmp.ne.s32.totalorder %s36, %s37
    %p51 = scmp.eq.s32.totalorder %s29, 1
    %p52 = por %p50, %p51
    %p54 = scmp.ne.s32.totalorder %s37, %s53
    %p55 = scmp.eq.s32.totalorder %s29, 0
    %p56 = por %p54, %p55
    %s58 = sadd.s32 %s57, 1
    %p61 = scmp.eq.s32.totalorder %s23, 1
    %p62 = scmp.ne.s32.totalorder %s57, %s59
    %p63 = scmp.eq.s32.totalorder %s23, 0
    %p64 = por %p62, %p63
    %p65 = scmp.ne.s32.totalorder %s57, %s59
    %p66 = scmp.eq.s32.totalorder %s28, 1
    %p67 = por %p65, %p66
    %p68 = scmp.ne.s32.totalorder %s59, %s60
    %p69 = scmp.eq.s32.totalorder %s28, 0
    %p70 = por %p68, %p69
    %p71 = scmp.ne.s32.totalorder %s59, %s60
    %p72 = scmp.eq.s32.totalorder %s29, 1
    %p73 = por %p71, %p72
    %p75 = scmp.ne.s32.totalorder %s60, %s74
    %p76 = scmp.eq.s32.totalorder %s29, 0
    %p77 = por %p75, %p76
    %s79 = sadd.s32 %s78, 1
    %p82 = scmp.eq.s32.totalorder %s23, 1
    %p83 = scmp.ne.s32.totalorder %s78, %s80
    %p84 = scmp.eq.s32.totalorder %s23, 0
    %p85 = por %p83, %p84
    %p86 = scmp.ne.s32.totalorder %s78, %s80
    %p87 = scmp.eq.s32.totalorder %s28, 1
    %p88 = por %p86, %p87
    %p89 = scmp.ne.s32.totalorder %s80, %s81
    %p90 = scmp.eq.s32.totalorder %s28, 0
    %p91 = por %p89, %p90
    %p92 = scmp.ne.s32.totalorder %s80, %s81
    %p93 = scmp.eq.s32.totalorder %s29, 1
    %p94 = por %p92, %p93
    %p96 = scmp.ne.s32.totalorder %s81, %s95
    %p97 = scmp.eq.s32.totalorder %s29, 0
    %p98 = por %p96, %p97
    %s100 = sadd.s32 %s99, 1
    %p103 = scmp.eq.s32.totalorder %s23, 1
    %p104 = scmp.ne.s32.totalorder %s99, %s101
    %p105 = scmp.eq.s32.totalorder %s23, 0
    %p106 = por %p104, %p105
    %p107 = scmp.ne.s32.totalorder %s99, %s101
    %p108 = scmp.eq.s32.totalorder %s28, 1
    %p109 = por %p107, %p108
    %p110 = scmp.ne.s32.totalorder %s101, %s102
    %p111 = scmp.eq.s32.totalorder %s28, 0
    %p112 = por %p110, %p111
    %p113 = scmp.ne.s32.totalorder %s101, %s102
    %p114 = scmp.eq.s32.totalorder %s29, 1
    %p115 = por %p113, %p114
    %p117 = scmp.ne.s32.totalorder %s102, %s116
    %p118 = scmp.eq.s32.totalorder %s29, 0
    %p119 = por %p117, %p118
    %s121 = sadd.s32 %s120, 1
    %p124 = scmp.eq.s32.totalorder %s23, 1
    %p125 = scmp.ne.s32.totalorder %s120, %s122
    %p126 = scmp.eq.s32.totalorder %s23, 0
    %p127 = por %p125, %p126
    %p128 = scmp.ne.s32.totalorder %s120, %s122
    %p129 = scmp.eq.s32.totalorder %s28, 1
    %p130 = por %p128, %p129
    %p131 = scmp.ne.s32.totalorder %s122, %s123
    %p132 = scmp.eq.s32.totalorder %s28, 0
    %p133 = por %p131, %p132
    %p134 = scmp.ne.s32.totalorder %s122, %s123
    %p135 = scmp.eq.s32.totalorder %s29, 1
    %p136 = por %p134, %p135
    %p138 = scmp.ne.s32.totalorder %s123, %s137
    %p139 = scmp.eq.s32.totalorder %s29, 0
    %p140 = por %p138, %p139
    %s142 = sadd.s32 %s141, 1
    %p145 = scmp.eq.s32.totalorder %s23, 1
    %p146 = scmp.ne.s32.totalorder %s141, %s143
    %p147 = scmp.eq.s32.totalorder %s23, 0
    %p148 = por %p146, %p147
    %p149 = scmp.ne.s32.totalorder %s141, %s143
    %p150 = scmp.eq.s32.totalorder %s28, 1
    %p151 = por %p149, %p150
    %p152 = scmp.ne.s32.totalorder %s143, %s144
    %p153 = scmp.eq.s32.totalorder %s28, 0
    %p154 = por %p152, %p153
    %p155 = scmp.ne.s32.totalorder %s143, %s144
    %p156 = scmp.eq.s32.totalorder %s29, 1
    %p157 = por %p155, %p156
    %p159 = scmp.ne.s32.totalorder %s144, %s158
    %p160 = scmp.eq.s32.totalorder %s29, 0
    %p161 = por %p159, %p160
    %s163 = sadd.s32 %s162, 1
    %p166 = scmp.eq.s32.totalorder %s23, 1
    %p167 = scmp.ne.s32.totalorder %s162, %s164
    %p168 = scmp.eq.s32.totalorder %s23, 0
    %p169 = por %p167, %p168
    %p170 = scmp.ne.s32.totalorder %s162, %s164
    %p171 = scmp.eq.s32.totalorder %s28, 1
    %p172 = por %p170, %p171
    %p173 = scmp.ne.s32.totalorder %s164, %s165
    %p174 = scmp.eq.s32.totalorder %s28, 0
    %p175 = por %p173, %p174
    %p176 = scmp.ne.s32.totalorder %s164, %s165
    %p177 = scmp.eq.s32.totalorder %s29, 1
    %p178 = por %p176, %p177
    %p180 = scmp.ne.s32.totalorder %s165, %s179
    %p181 = scmp.eq.s32.totalorder %s29, 0
    %p182 = por %p180, %p181
    %s184 = sadd.s32 %s183, 1
    %p187 = scmp.eq.s32.totalorder %s23, 1
    %p188 = scmp.ne.s32.totalorder %s183, %s185
    %p189 = scmp.eq.s32.totalorder %s23, 0
    %p190 = por %p188, %p189
    %p191 = scmp.ne.s32.totalorder %s183, %s185
    %p192 = scmp.eq.s32.totalorder %s28, 1
    %p193 = por %p191, %p192
    %p194 = scmp.ne.s32.totalorder %s185, %s186
    %p195 = scmp.eq.s32.totalorder %s28, 0
    %p196 = por %p194, %p195
    %p197 = scmp.ne.s32.totalorder %s185, %s186
    %p198 = scmp.eq.s32.totalorder %s29, 1
    %p199 = por %p197, %p198
    %p201 = scmp.ne.s32.totalorder %s186, %s200
    %p202 = scmp.eq.s32.totalorder %s29, 0
    %p203 = por %p201, %p202
    %s205 = sadd.s32 %s204, 1
    %p208 = scmp.eq.s32.totalorder %s23, 1
    %p209 = scmp.ne.s32.totalorder %s204, %s206
    %p210 = scmp.eq.s32.totalorder %s23, 0
    %p211 = por %p209, %p210
    %p212 = scmp.ne.s32.totalorder %s204, %s206
    %p213 = scmp.eq.s32.totalorder %s28, 1
    %p214 = por %p212, %p213
    %p215 = scmp.ne.s32.totalorder %s206, %s207
    %p216 = scmp.eq.s32.totalorder %s28, 0
    %p217 = por %p215, %p216
    %p218 = scmp.ne.s32.totalorder %s206, %s207
    %p219 = scmp.eq.s32.totalorder %s29, 1
    %p220 = por %p218, %p219
    %p222 = scmp.ne.s32.totalorder %s207, %s221
    %p223 = scmp.eq.s32.totalorder %s29, 0
    %p224 = por %p222, %p223
    %s226 = sadd.s32 %s225, 1
    %p229 = scmp.eq.s32.totalorder %s23, 1
    %p230 = scmp.ne.s32.totalorder %s225, %s227
    %p231 = scmp.eq.s32.totalorder %s23, 0
    %p232 = por %p230, %p231
    %p233 = scmp.ne.s32.totalorder %s225, %s227
    %p234 = scmp.eq.s32.totalorder %s28, 1
    %p235 = por %p233, %p234
    %p236 = scmp.ne.s32.totalorder %s227, %s228
    %p237 = scmp.eq.s32.totalorder %s28, 0
    %p238 = por %p236, %p237
    %p239 = scmp.ne.s32.totalorder %s227, %s228
    %p240 = scmp.eq.s32.totalorder %s29, 1
    %p241 = por %p239, %p240
    %p243 = scmp.ne.s32.totalorder %s228, %s242
    %p244 = scmp.eq.s32.totalorder %s29, 0
    %p245 = por %p243, %p244
    %s247 = sadd.s32 %s246, 1
    %p250 = scmp.eq.s32.totalorder %s23, 1
    %p251 = scmp.ne.s32.totalorder %s246, %s248
    %p252 = scmp.eq.s32.totalorder %s23, 0
    %p253 = por %p251, %p252
    %p254 = scmp.ne.s32.totalorder %s246, %s248
    %p255 = scmp.eq.s32.totalorder %s28, 1
    %p256 = por %p254, %p255
    %p257 = scmp.ne.s32.totalorder %s248, %s249
    %p258 = scmp.eq.s32.totalorder %s28, 0
    %p259 = por %p257, %p258
    %p260 = scmp.ne.s32.totalorder %s248, %s249
    %p261 = scmp.eq.s32.totalorder %s29, 1
    %p262 = por %p260, %p261
    %p264 = scmp.ne.s32.totalorder %s249, %s263
    %p265 = scmp.eq.s32.totalorder %s29, 0
    %p266 = por %p264, %p265
    %s268 = sadd.s32 %s267, 1
    %p271 = scmp.eq.s32.totalorder %s23, 1
    %p272 = scmp.ne.s32.totalorder %s267, %s269
    %p273 = scmp.eq.s32.totalorder %s23, 0
    %p274 = por %p272, %p273
    %p275 = scmp.ne.s32.totalorder %s267, %s269
    %p276 = scmp.eq.s32.totalorder %s28, 1
    %p277 = por %p275, %p276
    %p278 = scmp.ne.s32.totalorder %s269, %s270
    %p279 = scmp.eq.s32.totalorder %s28, 0
    %p280 = por %p278, %p279
    %p281 = scmp.ne.s32.totalorder %s269, %s270
    %p282 = scmp.eq.s32.totalorder %s29, 1
    %p283 = por %p281, %p282
    %p285 = scmp.ne.s32.totalorder %s270, %s284
    %p286 = scmp.eq.s32.totalorder %s29, 0
    %p287 = por %p285, %p286
    %s289 = sadd.s32 %s288, 1
    %p292 = scmp.eq.s32.totalorder %s23, 1
    %p293 = scmp.ne.s32.totalorder %s288, %s290
    %p294 = scmp.eq.s32.totalorder %s23, 0
    %p295 = por %p293, %p294
    %p296 = scmp.ne.s32.totalorder %s288, %s290
    %p297 = scmp.eq.s32.totalorder %s28, 1
    %p298 = por %p296, %p297
    %p299 = scmp.ne.s32.totalorder %s290, %s291
    %p300 = scmp.eq.s32.totalorder %s28, 0
    %p301 = por %p299, %p300
    %p302 = scmp.ne.s32.totalorder %s290, %s291
    %p303 = scmp.eq.s32.totalorder %s29, 1
    %p304 = por %p302, %p303
    %p306 = scmp.ne.s32.totalorder %s291, %s305
    %p307 = scmp.eq.s32.totalorder %s29, 0
    %p308 = por %p306, %p307
    %s310 = sadd.s32 %s309, 1
    %p313 = scmp.eq.s32.totalorder %s23, 1
    %p314 = scmp.ne.s32.totalorder %s309, %s311
    %p315 = scmp.eq.s32.totalorder %s23, 0
    %p316 = por %p314, %p315
    %p317 = scmp.ne.s32.totalorder %s309, %s311
    %p318 = scmp.eq.s32.totalorder %s28, 1
    %p319 = por %p317, %p318
    %p320 = scmp.ne.s32.totalorder %s311, %s312
    %p321 = scmp.eq.s32.totalorder %s28, 0
    %p322 = por %p320, %p321
    %p323 = scmp.ne.s32.totalorder %s311, %s312
    %p324 = scmp.eq.s32.totalorder %s29, 1
    %p325 = por %p323, %p324
    %p327 = scmp.ne.s32.totalorder %s312, %s326
    %p328 = scmp.eq.s32.totalorder %s29, 0
    %p329 = por %p327, %p328
    %s331 = sadd.s32 %s330, 1
    %p334 = scmp.eq.s32.totalorder %s23, 1
    %p335 = scmp.ne.s32.totalorder %s330, %s332
    %p336 = scmp.eq.s32.totalorder %s23, 0
    %p337 = por %p335, %p336
    %p338 = scmp.ne.s32.totalorder %s330, %s332
    %p339 = scmp.eq.s32.totalorder %s28, 1
    %p340 = por %p338, %p339
    %p341 = scmp.ne.s32.totalorder %s332, %s333
    %p342 = scmp.eq.s32.totalorder %s28, 0
    %p343 = por %p341, %p342
    %p344 = scmp.ne.s32.totalorder %s332, %s333
    %p345 = scmp.eq.s32.totalorder %s29, 1
    %p346 = por %p344, %p345
    %p348 = scmp.ne.s32.totalorder %s333, %s347
    %p349 = scmp.eq.s32.totalorder %s29, 0
    %p350 = por %p348, %p349
    %s352 = sadd.s32 %s351, 1
    %p355 = scmp.eq.s32.totalorder %s23, 1
    %p356 = scmp.ne.s32.totalorder %s351, %s353
    %p357 = scmp.eq.s32.totalorder %s23, 0
    %p358 = por %p356, %p357
    %p359 = scmp.ne.s32.totalorder %s351, %s353
    %p360 = scmp.eq.s32.totalorder %s28, 1
    %p361 = por %p359, %p360
    %p362 = scmp.ne.s32.totalorder %s353, %s354
    %p363 = scmp.eq.s32.totalorder %s28, 0
    %p364 = por %p362, %p363
    %p365 = scmp.ne.s32.totalorder %s353, %s354
    %p366 = scmp.eq.s32.totalorder %s29, 1
    %p367 = por %p365, %p366
    %p369 = scmp.ne.s32.totalorder %s354, %s368
    %p370 = scmp.eq.s32.totalorder %s29, 0
    %p371 = por %p369, %p370
    %s373 = sadd.s32 %s372, 1
    %p376 = scmp.eq.s32.totalorder %s23, 1
    %p377 = scmp.ne.s32.totalorder %s372, %s374
    %p378 = scmp.eq.s32.totalorder %s23, 0
    %p379 = por %p377, %p378
    %p380 = scmp.ne.s32.totalorder %s372, %s374
    %p381 = scmp.eq.s32.totalorder %s28, 1
    %p382 = por %p380, %p381
    %p383 = scmp.ne.s32.totalorder %s374, %s375
    %p384 = scmp.eq.s32.totalorder %s28, 0
    %p385 = por %p383, %p384
    %p386 = scmp.ne.s32.totalorder %s374, %s375
    %p387 = scmp.eq.s32.totalorder %s29, 1
    %p388 = por %p386, %p387
    %p390 = scmp.ne.s32.totalorder %s375, %s389
    %p391 = scmp.eq.s32.totalorder %s29, 0
    %p392 = por %p390, %p391
    %s393 = ssub.s32 %s23, %s30
    %p394 = scmp.eq.s32.totalorder %s393, 0
    %s396 = sadd.s32 %s395, 1
    %s397 = scalar_select %p394, %s395, %s396
    %p400 = pneg %p394
    %p401 = scmp.eq.s32.totalorder %s23, 1
    %p402 = por %p400, %p401
    %p403 = scmp.ne.s32.totalorder %s395, %s398
    %p404 = scmp.eq.s32.totalorder %s23, 0
    %p405 = por %p403, %p404
    %p406 = scmp.ne.s32.totalorder %s395, %s398
    %p407 = scmp.eq.s32.totalorder %s28, 1
    %p408 = por %p406, %p407
    %p409 = scmp.ne.s32.totalorder %s398, %s399
    %p410 = scmp.eq.s32.totalorder %s28, 0
    %p411 = por %p409, %p410
    %p412 = scmp.ne.s32.totalorder %s398, %s399
    %p413 = scmp.eq.s32.totalorder %s29, 1
    %p414 = por %p412, %p413
    %p416 = scmp.ne.s32.totalorder %s399, %s415
    %p417 = scmp.eq.s32.totalorder %s29, 0
    %p418 = por %p416, %p417
    %p419 = scmp.le.s32.totalorder 1, %s23
    %p420 = scmp.lt.s32.totalorder %s23, 3
    %p421 = pnand %p419, %p420
    %p422 = pneg %p421
    // Predicated region
    $region9: #{vit_encoder_forward.1} parent=5 // pred_check
      _
    $region10: #{vit_encoder_forward.1} parent=5 // pred_check_branch
      %424 = sbr.rel (%p421) target = $region12
    $region11: #{vit_encoder_forward.1} parent=5 // pred_region
      %s425 = ssub.s32 %s23, 1
      // Predicated region
      $region13: #{vit_encoder_forward.1} parent=11 // pred_check
        %p426 = pneg %p70
      $region14: #{vit_encoder_forward.1} parent=11 // pred_check_branch
        %428 = sbr.rel (%p426) target = $region16
      $region15: #{vit_encoder_forward.1} parent=11 // pred_region
        _
      $region16: #{vit_encoder_forward.1} parent=11 // pred_fallthru
        _
      // Predicated region
      $region17: #{vit_encoder_forward.1} parent=11 // pred_check
        %p429 = pneg %p91
      $region18: #{vit_encoder_forward.1} parent=11 // pred_check_branch
        %431 = sbr.rel (%p429) target = $region20
      $region19: #{vit_encoder_forward.1} parent=11 // pred_region
        _
      $region20: #{vit_encoder_forward.1} parent=11 // pred_fallthru
        _
      // Predicated region
      $region21: #{vit_encoder_forward.1} parent=11 // pred_check
        %p432 = pneg %p112
      $region22: #{vit_encoder_forward.1} parent=11 // pred_check_branch
        %434 = sbr.rel (%p432) target = $region24
      $region23: #{vit_encoder_forward.1} parent=11 // pred_region
        _
      $region24: #{vit_encoder_forward.1} parent=11 // pred_fallthru
        _
      // Predicated region
      $region25: #{vit_encoder_forward.1} parent=11 // pred_check
        %p435 = pneg %p133
      $region26: #{vit_encoder_forward.1} parent=11 // pred_check_branch
        %437 = sbr.rel (%p435) target = $region28
      $region27: #{vit_encoder_forward.1} parent=11 // pred_region
        _
      $region28: #{vit_encoder_forward.1} parent=11 // pred_fallthru
        _
      // Predicated region
      $region29: #{vit_encoder_forward.1} parent=11 // pred_check
        %p438 = pneg %p154
      $region30: #{vit_encoder_forward.1} parent=11 // pred_check_branch
        %440 = sbr.rel (%p438) target = $region32
      $region31: #{vit_encoder_forward.1} parent=11 // pred_region
        _
      $region32: #{vit_encoder_forward.1} parent=11 // pred_fallthru
        _
      // Predicated region
      $region33: #{vit_encoder_forward.1} parent=11 // pred_check
        %p441 = pneg %p175
      $region34: #{vit_encoder_forward.1} parent=11 // pred_check_branch
        %443 = sbr.rel (%p441) target = $region36
      $region35: #{vit_encoder_forward.1} parent=11 // pred_region
        _
      $region36: #{vit_encoder_forward.1} parent=11 // pred_fallthru
        _
      // Predicated region
      $region37: #{vit_encoder_forward.1} parent=11 // pred_check
        %p444 = pneg %p196
      $region38: #{vit_encoder_forward.1} parent=11 // pred_check_branch
        %446 = sbr.rel (%p444) target = $region40
      $region39: #{vit_encoder_forward.1} parent=11 // pred_region
        _
      $region40: #{vit_encoder_forward.1} parent=11 // pred_fallthru
        _
      // Predicated region
      $region41: #{vit_encoder_forward.1} parent=11 // pred_check
        %p447 = pneg %p217
      $region42: #{vit_encoder_forward.1} parent=11 // pred_check_branch
        %449 = sbr.rel (%p447) target = $region44
      $region43: #{vit_encoder_forward.1} parent=11 // pred_region
        _
      $region44: #{vit_encoder_forward.1} parent=11 // pred_fallthru
        _
      // Predicated region
      $region45: #{vit_encoder_forward.1} parent=11 // pred_check
        %p450 = pneg %p238
      $region46: #{vit_encoder_forward.1} parent=11 // pred_check_branch
        %452 = sbr.rel (%p450) target = $region48
      $region47: #{vit_encoder_forward.1} parent=11 // pred_region
        _
      $region48: #{vit_encoder_forward.1} parent=11 // pred_fallthru
        _
      // Predicated region
      $region49: #{vit_encoder_forward.1} parent=11 // pred_check
        %p453 = pneg %p259
      $region50: #{vit_encoder_forward.1} parent=11 // pred_check_branch
        %455 = sbr.rel (%p453) target = $region52
      $region51: #{vit_encoder_forward.1} parent=11 // pred_region
        _
      $region52: #{vit_encoder_forward.1} parent=11 // pred_fallthru
        _
      // Predicated region
      $region53: #{vit_encoder_forward.1} parent=11 // pred_check
        %p456 = pneg %p280
      $region54: #{vit_encoder_forward.1} parent=11 // pred_check_branch
        %458 = sbr.rel (%p456) target = $region56
      $region55: #{vit_encoder_forward.1} parent=11 // pred_region
        _
      $region56: #{vit_encoder_forward.1} parent=11 // pred_fallthru
        _
      // Predicated region
      $region57: #{vit_encoder_forward.1} parent=11 // pred_check
        %p459 = pneg %p301
      $region58: #{vit_encoder_forward.1} parent=11 // pred_check_branch
        %461 = sbr.rel (%p459) target = $region60
      $region59: #{vit_encoder_forward.1} parent=11 // pred_region
        _
      $region60: #{vit_encoder_forward.1} parent=11 // pred_fallthru
        _
      // Predicated region
      $region61: #{vit_encoder_forward.1} parent=11 // pred_check
        %p462 = pneg %p322
      $region62: #{vit_encoder_forward.1} parent=11 // pred_check_branch
        %464 = sbr.rel (%p462) target = $region64
      $region63: #{vit_encoder_forward.1} parent=11 // pred_region
        _
      $region64: #{vit_encoder_forward.1} parent=11 // pred_fallthru
        _
      // Predicated region
      $region65: #{vit_encoder_forward.1} parent=11 // pred_check
        %p465 = pneg %p343
      $region66: #{vit_encoder_forward.1} parent=11 // pred_check_branch
        %467 = sbr.rel (%p465) target = $region68
      $region67: #{vit_encoder_forward.1} parent=11 // pred_region
        _
      $region68: #{vit_encoder_forward.1} parent=11 // pred_fallthru
        _
      // Predicated region
      $region69: #{vit_encoder_forward.1} parent=11 // pred_check
        %p468 = pneg %p364
      $region70: #{vit_encoder_forward.1} parent=11 // pred_check_branch
        %470 = sbr.rel (%p468) target = $region72
      $region71: #{vit_encoder_forward.1} parent=11 // pred_region
        _
      $region72: #{vit_encoder_forward.1} parent=11 // pred_fallthru
        _
      // Predicated region
      $region73: #{vit_encoder_forward.1} parent=11 // pred_check
        %p471 = pneg %p385
      $region74: #{vit_encoder_forward.1} parent=11 // pred_check_branch
        %473 = sbr.rel (%p471) target = $region76
      $region75: #{vit_encoder_forward.1} parent=11 // pred_region
        _
      $region76: #{vit_encoder_forward.1} parent=11 // pred_fallthru
        _
    $region12: #{vit_encoder_forward.1} parent=5 // pred_fallthru
      _
    %p474 = scmp.lt.s32.totalorder %s23, 2
    // Predicated region
    $region77: #{vit_encoder_forward.1} parent=5 // pred_check
      %p475 = pneg %p474
    $region78: #{vit_encoder_forward.1} parent=5 // pred_check_branch
      %477 = sbr.rel (%p475) target = $region80
    $region79: #{vit_encoder_forward.1} parent=5 // pred_region
      // Predicated region
      $region81: #{vit_encoder_forward.1} parent=79 // pred_check
        %p478 = pneg %p43
      $region82: #{vit_encoder_forward.1} parent=79 // pred_check_branch
        %480 = sbr.rel (%p478) target = $region84
      $region83: #{vit_encoder_forward.1} parent=79 // pred_region
        %p481 = scmp.lt.s32.totalorder %s23, 1
        %s482 = scalar_select %p481, %s23, 1
        %s483 = smul.addr %s482, 6
        %s484 = smul.addr %s483, 8
        %s485 = scalar_lea.vmem %s0, %s484
      $region84: #{vit_encoder_forward.1} parent=79 // pred_fallthru
        _
    $region80: #{vit_encoder_forward.1} parent=5 // pred_fallthru
      _
    %p486 = scmp.le.s32.totalorder 1, %s23
    %p487 = scmp.lt.s32.totalorder %s23, 3
    %p488 = pnand %p486, %p487
    %p489 = pneg %p488
    // Predicated region
    $region85: #{vit_encoder_forward.1} parent=5 // pred_check
      _
    $region86: #{vit_encoder_forward.1} parent=5 // pred_check_branch
      %491 = sbr.rel (%p488) target = $region88
    $region87: #{vit_encoder_forward.1} parent=5 // pred_region
      %s492 = ssub.s32 %s23, 1
      %p493 = scmp.lt.s32.totalorder %s28, 1
      %s494 = scalar_select %p493, %s28, 1
      %s495 = smul.addr %s494, 6
      %s496 = smul.addr %s495, 8
      %s497 = scalar_lea.vmem %s0, %s496
      %p498 = pneg %p49
      %p499 = pneg %p46
      %p500 = pneg %p70
      %p501 = pneg %p67
      %p502 = pneg %p91
      %p503 = pneg %p88
      %p504 = pneg %p112
      %p505 = pneg %p109
      %p506 = pneg %p133
      %p507 = pneg %p130
      %p508 = pneg %p154
      %p509 = pneg %p151
      %p510 = pneg %p175
      %p511 = pneg %p172
      %p512 = pneg %p196
      %p513 = pneg %p193
      %p514 = pneg %p217
      %p515 = pneg %p214
      %p516 = pneg %p238
      %p517 = pneg %p235
      %p518 = pneg %p259
      %p519 = pneg %p256
      %p520 = pneg %p280
      %p521 = pneg %p277
      %p522 = pneg %p301
      %p523 = pneg %p298
      %p524 = pneg %p322
      %p525 = pneg %p319
      %p526 = pneg %p343
      %p527 = pneg %p340
      %p528 = pneg %p364
      %p529 = pneg %p361
      %p530 = pneg %p385
      %p531 = pneg %p382
      %p532 = pneg %p411
      %p533 = pneg %p408
      %p534 = scmp.lt.s32.totalorder %s28, 1
      %s535 = scalar_select %p534, %s28, 1
      %s536 = smul.addr %s535, 3
      %s537 = smul.addr %s536, 8
      %s538 = scalar_lea.vmem %s17, %s537
      %p539 = scmp.lt.s32.totalorder %s28, 1
      %s540 = scalar_select %p539, %s28, 1
      %s541 = smul.addr %s540, 6
      %s542 = smul.addr %s541, 8
      %s543 = scalar_lea.vmem %s0, %s542
      %p544 = scmp.lt.s32.totalorder %s28, 1
      %s545 = scalar_select %p544, %s28, 1
      %s546 = smul.addr %s545, 3
      %s547 = smul.addr %s546, 8
      %s548 = scalar_lea.vmem %s17, %s547
      %v550 = vld [vmem:[%s543] sm:$0xff]
      %v551 = vld [vmem:[%s543 + $0x8] sm:$0xff]
      %v552 = vld [vmem:[%s543 + $0x10] sm:$0xff]
      %v553 = vld [vmem:[%s543 + $0x18] sm:$0xff]
      %v554 = vld [vmem:[%s543 + $0x20] sm:$0x1]
      %v555 = vld [vmem:[%s543 + $0x28] sm:$0x1]
      %v556 = vpack.c.bf16 %v552, %v550
      %v557 = vpack.c.bf16 %v553, %v551
      %v558 = vpack.c.bf16 %v554, %v554
      %v559 = vpack.c.bf16 %v555, %v555
      %v560 = vld [vmem:[%s1] sm:$0xf]
      %v561 = vld [vmem:[%s1 + $0x4] sm:$0xf]
      %v562 = vld [vmem:[%s1 + $0x8] sm:$0xf]
      %v563 = vld [vmem:[%s1 + $0xc] sm:$0xf]
      %v564 = vld [vmem:[%s1 + $0x10] sm:$0xf]
      %v565 = vld [vmem:[%s1 + $0x14] sm:$0xf]
      %v566 = vld [vmem:[%s1 + $0x18] sm:$0xf]
      %v567 = vld [vmem:[%s1 + $0x1c] sm:$0xf]
      %v568 = vld [vmem:[%s1 + $0x20] sm:$0xf]
      %v569 = vld [vmem:[%s1 + $0x24] sm:$0xf]
      %v570 = vld [vmem:[%s1 + $0x28] sm:$0xf]
      %v571 = vld [vmem:[%s1 + $0x2c] sm:$0xf]
      %v572 = vld [vmem:[%s1 + $0x30] sm:$0xf]
      %v573 = vld [vmem:[%s1 + $0x34] sm:$0xf]
      %v574 = vld [vmem:[%s1 + $0x38] sm:$0xf]
      %v575 = vld [vmem:[%s1 + $0x3c] sm:$0xf]
      %v576 = vld [vmem:[%s1 + $0x40] sm:$0xf]
      %v577 = vld [vmem:[%s1 + $0x44] sm:$0xf]
      %v578 = vld [vmem:[%s1 + $0x48] sm:$0xf]
      %v579 = vld [vmem:[%s1 + $0x4c] sm:$0xf]
      %v580 = vld [vmem:[%s1 + $0x50] sm:$0xf]
      %v581 = vld [vmem:[%s1 + $0x54] sm:$0xf]
      %v582 = vld [vmem:[%s1 + $0x58] sm:$0xf]
      %v583 = vld [vmem:[%s1 + $0x5c] sm:$0xf]
      %v584 = vld [vmem:[%s1 + $0x60] sm:$0x1]
      %v585 = vld [vmem:[%s2] sm:$0xff]
      %v586 = vld [vmem:[%s2 + $0x8] sm:$0xff]
      %v587 = vld [vmem:[%s2 + $0x10] sm:$0x1]
      %v613 = vunpack.c.l.b16 %v560
      %v614 = vunpack.c.l.b16 %v561
      %v615 = vunpack.c.l.b16 %v562
      %v616 = vunpack.c.l.b16 %v563
      %v617 = vunpack.c.l.b16 %v564
      %v618 = vunpack.c.l.b16 %v565
      %v619 = vunpack.c.l.b16 %v566
      %v620 = vunpack.c.l.b16 %v567
      %v621 = vunpack.c.l.b16 %v568
      %v622 = vunpack.c.l.b16 %v569
      %v623 = vunpack.c.l.b16 %v570
      %v624 = vunpack.c.l.b16 %v571
      %v625 = vunpack.c.l.b16 %v572
      %v626 = vunpack.c.l.b16 %v573
      %v627 = vunpack.c.l.b16 %v574
      %v628 = vunpack.c.l.b16 %v575
      %v629 = vunpack.c.l.b16 %v576
      %v630 = vunpack.c.l.b16 %v577
      %v631 = vunpack.c.l.b16 %v578
      %v632 = vunpack.c.l.b16 %v579
      %v633 = vunpack.c.l.b16 %v580
      %v634 = vunpack.c.l.b16 %v581
      %v635 = vunpack.c.l.b16 %v582
      %v636 = vunpack.c.l.b16 %v583
      %v637 = vunpack.c.l.b16 %v584
      %v638 = vpack.c.b16 %v614, %v613
      %v639 = vpack.c.b16 %v616, %v615
      %v640 = vpack.c.b16 %v618, %v617
      %v641 = vpack.c.b16 %v620, %v619
      %v642 = vpack.c.b16 %v622, %v621
      %v643 = vpack.c.b16 %v624, %v623
      %v644 = vpack.c.b16 %v626, %v625
      %v645 = vpack.c.b16 %v628, %v627
      %v646 = vpack.c.b16 %v630, %v629
      %v647 = vpack.c.b16 %v632, %v631
      %v648 = vpack.c.b16 %v634, %v633
      %v649 = vpack.c.b16 %v636, %v635
      %v650 = vpack.c.b16 %v637, %v637
      %vm663 = vcmask 539648
      %v665 = vsel %vm663, %v557, 0
      %v668 = vsel %vm663, %v559, 0
      %vm670 = vcmask 1040384
      %v672 = vsel %vm670, %v650, 0
      %674 = vmatpush.bf16.msra.mxu0 %v645
      %675 = vmatpush.bf16.msra.mxu0 %v644
      %676 = vmatpush.bf16.msra.mxu0 %v643
      %677 = vmatpush.bf16.msra.mxu0 %v642
      %678 = vmatpush.bf16.msra.mxu0 %v641
      %679 = vmatpush.bf16.msra.mxu0 %v640
      %680 = vmatpush.bf16.msra.mxu0 %v639
      %681 = vmatpush.bf16.msra.mxu0 %v638
      %682 = vmatmul.bf16.gmra.mxu0 %v556
      %v683 = vpop.f32.mrf.mxu0
      %v684 = vadd.f32 %v585, %v683
      %v685 = vpop.f32.mrf.mxu0
      %v686 = vadd.f32 %v586, %v685
      %687 = vmatmul.bf16.gmra.mxu0 %v558
      %v688 = vpop.f32.mrf.mxu0
      %v689 = vadd.f32 %v587, %v688
      %v690 = vpop.f32.mrf.mxu0
      %691 = vdwg.mxu0
      %692 = vmatpush.bf16.msra.mxu0 0
      %693 = vmatpush.bf16.msra.mxu0 0
      %694 = vmatpush.bf16.msra.mxu0 0
      %695 = vmatpush.bf16.msra.mxu0 %v672
      %696 = vmatpush.bf16.msra.mxu0 %v649
      %697 = vmatpush.bf16.msra.mxu0 %v648
      %698 = vmatpush.bf16.msra.mxu0 %v647
      %699 = vmatpush.bf16.msra.mxu0 %v646
      %700 = vmatmul.bf16.gmra.mxu0 %v665
      %v701 = vpop.f32.mrf.mxu0
      %v702 = vadd.f32 %v684, %v701
      %v703 = vpop.f32.mrf.mxu0
      %v704 = vadd.f32 %v686, %v703
      %705 = vmatmul.bf16.gmra.mxu0 %v668
      %v706 = vpop.f32.mrf.mxu0
      %v707 = vadd.f32 %v689, %v706
      %v708 = vpop.f32.mrf.mxu0
      %709 = vdwg.mxu0
      %v710 = vld [vmem:[%s3] sm:$0x1]
      %v711 = vld [vmem:[%s4] sm:$0x1]
      %vm712 = vcmask 261120
      %v713 = vsel %vm712, %v702, 0.0
      %714 = vadd.xlane.f32.xlu0 %v713
      %v715 = vpop.xlane.xlu0 %714
      %v716 = vsel %vm712, %v704, 0.0
      %717 = vadd.xlane.f32.xlu0 %v716
      %v718 = vpop.xlane.xlu0 %717
      %vm719 = vcmask 253952
      %v720 = vsel %vm719, %v707, 0.0
      %721 = vadd.xlane.f32.xlu0 %v720
      %v722 = vpop.xlane.xlu0 %721
      %v723 = vrcp.pop 32.0
      %v724 = vmul.f32 32.0, %v723
      %v725 = vsub.f32 1.0, %v724
      %v726 = vmul.f32 %v723, %v725
      %v727 = vadd.f32 %v723, %v726
      %vm728 = vweird.f32 %v723
      %v729 = vsel %vm728, %v723, %v727
      %v730 = vmul.f32 %v715, %v729
      %v731 = vmul.f32 %v718, %v729
      %v732 = vmul.f32 %v722, %v729
      %v733 = vsub.f32 %v702, %v730
      %v734 = vsub.f32 %v704, %v731
      %v735 = vsub.f32 %v707, %v732
      %v736 = vmul.f32 %v733, %v733
      %v737 = vmul.f32 %v734, %v734
      %v738 = vmul.f32 %v735, %v735
      %v739 = vsel %vm712, %v736, 0.0
      %740 = vadd.xlane.f32.xlu0 %v739
      %v741 = vpop.xlane.xlu0 %740
      %v742 = vsel %vm712, %v737, 0.0
      %743 = vadd.xlane.f32.xlu0 %v742
      %v744 = vpop.xlane.xlu0 %743
      %v745 = vsel %vm719, %v738, 0.0
      %746 = vadd.xlane.f32.xlu0 %v745
      %v747 = vpop.xlane.xlu0 %746
      %v748 = vmul.f32 %v741, %v729
      %v749 = vmul.f32 %v744, %v729
      %v750 = vmul.f32 %v747, %v729
      %v751 = vadd.f32 %v748, 1e-06
      %v752 = vadd.f32 %v749, 1e-06
      %v753 = vadd.f32 %v750, 1e-06
      %v754 = vrsqrt.pop %v751
      %v755 = vmul.f32 %v754, %v751
      %v756 = vmul.f32 %v755, %v754
      %v757 = vmul.f32 0.5, %v756
      %v758 = vsub.f32 1.5, %v757
      %v759 = vmul.f32 %v754, %v758
      %vm760 = vweird.f32 %v751
      %vm761 = vweird.f32 %v754
      %vm762 = vmor %vm760, %vm761
      %v763 = vsel %vm762, %v754, %v759
      %v764 = vrsqrt.pop %v752
      %v765 = vmul.f32 %v764, %v752
      %v766 = vmul.f32 %v765, %v764
      %v767 = vmul.f32 0.5, %v766
      %v768 = vsub.f32 1.5, %v767
      %v769 = vmul.f32 %v764, %v768
      %vm770 = vweird.f32 %v752
      %vm771 = vweird.f32 %v764
      %vm772 = vmor %vm770, %vm771
      %v773 = vsel %vm772, %v764, %v769
      %v774 = vrsqrt.pop %v753
      %v775 = vmul.f32 %v774, %v753
      %v776 = vmul.f32 %v775, %v774
      %v777 = vmul.f32 0.5, %v776
      %v778 = vsub.f32 1.5, %v777
      %v779 = vmul.f32 %v774, %v778
      %vm780 = vweird.f32 %v753
      %vm781 = vweird.f32 %v774
      %vm782 = vmor %vm780, %vm781
      %v783 = vsel %vm782, %v774, %v779
      %v784 = vmul.f32 %v733, %v763
      %v785 = vmul.f32 %v734, %v773
      %v786 = vmul.f32 %v735, %v783
      %v788 = vperm.slane %v710, 0
      %v790 = vmul.f32 %v784, %v788
      %v791 = vmul.f32 %v785, %v788
      %v792 = vmul.f32 %v786, %v788
      %v794 = vperm.slane %v711, 0
      %v796 = vadd.f32 %v790, %v794
      %v797 = vadd.f32 %v791, %v794
      %v798 = vadd.f32 %v792, %v794
      %v799 = vpack.c.bf16 %v797, %v796
      %v800 = vpack.c.bf16 %v798, %v798
      %v801 = vld [vmem:[%s5] sm:$0xf]
      %v802 = vld [vmem:[%s5 + $0x4] sm:$0xf]
      %v803 = vld [vmem:[%s5 + $0x8] sm:$0xf]
      %v804 = vld [vmem:[%s5 + $0xc] sm:$0xf]
      %v805 = vld [vmem:[%s6] sm:$0x1]
      %v807 = vperm.slane %v805, 0
      %v813 = vunpack.c.l.b16 %v801
      %v814 = vunpack.c.l.b16 %v802
      %v815 = vunpack.c.l.b16 %v803
      %v816 = vunpack.c.l.b16 %v804
      %v817 = vpack.c.b16 %v814, %v813
      %v818 = vpack.c.b16 %v816, %v815
      %v822 = vsel %vm712, %v799, 0
      %v825 = vsel %vm712, %v800, 0
      %827 = vmatpush.bf16.msra.mxu0 0
      %828 = vmatpush.bf16.msra.mxu0 0
      %829 = vmatpush.bf16.msra.mxu0 0
      %830 = vmatpush.bf16.msra.mxu0 0
      %831 = vmatpush.bf16.msra.mxu0 0
      %832 = vmatpush.bf16.msra.mxu0 0
      %833 = vmatpush.bf16.msra.mxu0 %v818
      %834 = vmatpush.bf16.msra.mxu0 %v817
      %835 = vmatmul.bf16.gmra.mxu0 %v822
      %v836 = vpop.f32.mrf.mxu0
      %v837 = vadd.f32 %v807, %v836
      %v838 = vpop.f32.mrf.mxu0
      %v839 = vadd.f32 %v807, %v838
      %840 = vmatmul.bf16.gmra.mxu0 %v825
      %v841 = vpop.f32.mrf.mxu0
      %v842 = vadd.f32 %v807, %v841
      %v843 = vpop.f32.mrf.mxu0
      %844 = vdwg.mxu0
      %v845 = vld [vmem:[%s7] sm:$0xf]
      %v846 = vld [vmem:[%s7 + $0x4] sm:$0xf]
      %v847 = vld [vmem:[%s7 + $0x8] sm:$0xf]
      %v848 = vld [vmem:[%s7 + $0xc] sm:$0xf]
      %v849 = vld [vmem:[%s8] sm:$0x1]
      %v850 = vmul.f32 %v837, 0.35355338
      %v851 = vmul.f32 %v839, 0.35355338
      %v852 = vmul.f32 %v842, 0.35355338
      %v853 = vpack.c.bf16 %v851, %v850
      %v854 = vpack.c.bf16 %v852, %v852
      %v855 = vpack.c.bf16 %v839, %v837
      %v856 = vpack.c.bf16 %v842, %v842
      %859 = vrot.lane.b32.xlu0 %v855, 96
      %v860 = vpop.permute.xlu0 %859
      %861 = vrot.lane.b32.xlu0 %v856, 96
      %v862 = vpop.permute.xlu0 %861
      %vm863 = vcmask 64512
      %v865 = vsel %vm863, %v853, 0
      %v868 = vsel %vm863, %v854, 0
      %v871 = vsel %vm863, %v860, 0
      %v874 = vsel %vm863, %v862, 0
      %876 = vmatpush.bf16.xpose.msra.mxu0 0
      %877 = vmatpush.bf16.xpose.msra.mxu0 0
      %878 = vmatpush.bf16.xpose.msra.mxu0 0
      %879 = vmatpush.bf16.xpose.msra.mxu0 0
      %880 = vmatpush.bf16.xpose.msra.mxu0 0
      %881 = vmatpush.bf16.xpose.msra.mxu0 0
      %882 = vmatpush.bf16.xpose.msra.mxu0 %v874
      %883 = vmatpush.bf16.xpose.msra.mxu0 %v871
      %884 = vmatmul.bf16.gmra.mxu0 %v865
      %v885 = vpop.f32.mrf.mxu0
      %v886 = vadd.f32 0.0, %v885
      %v887 = vpop.f32.mrf.mxu0
      %v888 = vadd.f32 0.0, %v887
      %889 = vmatmul.bf16.gmra.mxu0 %v868
      %v890 = vpop.f32.mrf.mxu0
      %v891 = vadd.f32 0.0, %v890
      %v892 = vpop.f32.mrf.mxu0
      %893 = vdwg.mxu0
      %vm894 = vcmask 138240
      %v895 = vsel %vm894, %v886, -inf
      %896 = vmax.xlane.f32.xlu0 %v895
      %v897 = vpop.xlane.xlu0 %896
      %v898 = vsel %vm894, %v888, -inf
      %899 = vmax.xlane.f32.xlu0 %v898
      %v900 = vpop.xlane.xlu0 %899
      %vm901 = vcmask 131072
      %v902 = vsel %vm901, %v891, -inf
      %903 = vmax.xlane.f32.xlu0 %v902
      %v904 = vpop.xlane.xlu0 %903
      %v905 = vsub.f32 %v886, %v897
      %v906 = vsub.f32 %v888, %v900
      %v907 = vsub.f32 %v891, %v904
      %v908 = vmul.f32 %v905, 1.442695
      %v909 = vpow.pop %v908
      %v910 = vmul.f32 %v906, 1.442695
      %v911 = vpow.pop %v910
      %v912 = vmul.f32 %v907, 1.442695
      %v913 = vpow.pop %v912
      %v914 = vsel %vm894, %v909, 0.0
      %915 = vadd.xlane.f32.xlu0 %v914
      %v916 = vpop.xlane.xlu0 %915
      %v917 = vsel %vm894, %v911, 0.0
      %918 = vadd.xlane.f32.xlu0 %v917
      %v919 = vpop.xlane.xlu0 %918
      %v920 = vsel %vm901, %v913, 0.0
      %921 = vadd.xlane.f32.xlu0 %v920
      %v922 = vpop.xlane.xlu0 %921
      %v923 = vrcp.pop %v916
      %v924 = vrcp.pop %v919
      %v925 = vrcp.pop %v922
      %v926 = vmul.f32 %v909, %v923
      %v927 = vmul.f32 %v911, %v924
      %v928 = vmul.f32 %v913, %v925
      %v929 = vpack.c.bf16 %v927, %v926
      %v930 = vpack.c.bf16 %v928, %v928
      %931 = vrot.lane.b32.xlu0 %v855, 64
      %v932 = vpop.permute.xlu0 %931
      %933 = vrot.lane.b32.xlu0 %v856, 64
      %v934 = vpop.permute.xlu0 %933
      %v937 = vsel %vm894, %v929, 0
      %v940 = vsel %vm894, %v930, 0
      %v942 = vsel 0, 4294967295, 65535
      %v943 = vsel %vm670, %v942, 0
      %v945 = vand.u32 %v934, %v943
      %947 = vmatpush.bf16.msra.mxu0 0
      %948 = vmatpush.bf16.msra.mxu0 0
      %949 = vmatpush.bf16.msra.mxu0 0
      %950 = vmatpush.bf16.msra.mxu0 0
      %951 = vmatpush.bf16.msra.mxu0 0
      %952 = vmatpush.bf16.msra.mxu0 0
      %953 = vmatpush.bf16.msra.mxu0 %v945
      %954 = vmatpush.bf16.msra.mxu0 %v932
      %955 = vmatmul.bf16.gmra.mxu0 %v937
      %v956 = vpop.f32.mrf.mxu0
      %v957 = vadd.f32 0.0, %v956
      %v958 = vpop.f32.mrf.mxu0
      %v959 = vadd.f32 0.0, %v958
      %960 = vmatmul.bf16.gmra.mxu0 %v940
      %v961 = vpop.f32.mrf.mxu0
      %v962 = vadd.f32 0.0, %v961
      %v963 = vpop.f32.mrf.mxu0
      %964 = vdwg.mxu0
      %v965 = vpack.c.bf16 %v959, %v957
      %v966 = vpack.c.bf16 %v962, %v962
      %v968 = vsel %vm863, %v965, 0
      %v971 = vsel %vm863, %v966, 0
      %vm973 = vcmask 1043456
      %v975 = vsel %vm973, %v845, 0
      %977 = vmatpush.bf16.msra.mxu0 0
      %978 = vmatpush.bf16.msra.mxu0 0
      %979 = vmatpush.bf16.msra.mxu0 0
      %980 = vmatpush.bf16.msra.mxu0 0
      %981 = vmatpush.bf16.msra.mxu0 0
      %982 = vmatpush.bf16.msra.mxu0 0
      %983 = vmatpush.bf16.msra.mxu0 0
      %984 = vmatpush.bf16.msra.mxu0 %v975
      %985 = vmatmul.bf16.gmra.mxu0 %v968
      %v986 = vpop.f32.mrf.mxu0
      %v987 = vadd.f32 0.0, %v986
      %v988 = vpop.f32.mrf.mxu0
      %v989 = vadd.f32 0.0, %v988
      %990 = vmatmul.bf16.gmra.mxu0 %v971
      %v991 = vpop.f32.mrf.mxu0
      %v992 = vadd.f32 0.0, %v991
      %v993 = vpop.f32.mrf.mxu0
      %994 = vdwg.mxu0
      %v996 = vperm.slane %v849, 0
      %v998 = vadd.f32 %v996, %v987
      %v999 = vadd.f32 %v996, %v989
      %v1000 = vadd.f32 %v996, %v992
      %1003 = vrot.lane.b32.xlu0 %v853, 120
      %v1004 = vpop.permute.xlu0 %1003
      %1005 = vrot.lane.b32.xlu0 %v854, 120
      %v1006 = vpop.permute.xlu0 %1005
      %1007 = vrot.lane.b32.xlu0 %v855, 88
      %v1008 = vpop.permute.xlu0 %1007
      %1009 = vrot.lane.b32.xlu0 %v856, 88
      %v1010 = vpop.permute.xlu0 %1009
      %v1012 = vsel %vm863, %v1004, 0
      %v1015 = vsel %vm863, %v1006, 0
      %v1018 = vsel %vm863, %v1008, 0
      %v1021 = vsel %vm863, %v1010, 0
      %1023 = vmatpush.bf16.xpose.msra.mxu0 0
      %1024 = vmatpush.bf16.xpose.msra.mxu0 0
      %1025 = vmatpush.bf16.xpose.msra.mxu0 0
      %1026 = vmatpush.bf16.xpose.msra.mxu0 0
      %1027 = vmatpush.bf16.xpose.msra.mxu0 0
      %1028 = vmatpush.bf16.xpose.msra.mxu0 0
      %1029 = vmatpush.bf16.xpose.msra.mxu0 %v1021
      %1030 = vmatpush.bf16.xpose.msra.mxu0 %v1018
      %1031 = vmatmul.bf16.gmra.mxu0 %v1012
      %v1032 = vpop.f32.mrf.mxu0
      %v1033 = vadd.f32 0.0, %v1032
      %v1034 = vpop.f32.mrf.mxu0
      %v1035 = vadd.f32 0.0, %v1034
      %1036 = vmatmul.bf16.gmra.mxu0 %v1015
      %v1037 = vpop.f32.mrf.mxu0
      %v1038 = vadd.f32 0.0, %v1037
      %v1039 = vpop.f32.mrf.mxu0
      %1040 = vdwg.mxu0
      %v1041 = vsel %vm894, %v1033, -inf
      %1042 = vmax.xlane.f32.xlu0 %v1041
      %v1043 = vpop.xlane.xlu0 %1042
      %v1044 = vsel %vm894, %v1035, -inf
      %1045 = vmax.xlane.f32.xlu0 %v1044
      %v1046 = vpop.xlane.xlu0 %1045
      %v1047 = vsel %vm901, %v1038, -inf
      %1048 = vmax.xlane.f32.xlu0 %v1047
      %v1049 = vpop.xlane.xlu0 %1048
      %v1050 = vsub.f32 %v1033, %v1043
      %v1051 = vsub.f32 %v1035, %v1046
      %v1052 = vsub.f32 %v1038, %v1049
      %v1053 = vmul.f32 %v1050, 1.442695
      %v1054 = vpow.pop %v1053
      %v1055 = vmul.f32 %v1051, 1.442695
      %v1056 = vpow.pop %v1055
      %v1057 = vmul.f32 %v1052, 1.442695
      %v1058 = vpow.pop %v1057
      %v1059 = vsel %vm894, %v1054, 0.0
      %1060 = vadd.xlane.f32.xlu0 %v1059
      %v1061 = vpop.xlane.xlu0 %1060
      %v1062 = vsel %vm894, %v1056, 0.0
      %1063 = vadd.xlane.f32.xlu0 %v1062
      %v1064 = vpop.xlane.xlu0 %1063
      %v1065 = vsel %vm901, %v1058, 0.0
      %1066 = vadd.xlane.f32.xlu0 %v1065
      %v1067 = vpop.xlane.xlu0 %1066
      %v1068 = vrcp.pop %v1061
      %v1069 = vrcp.pop %v1064
      %v1070 = vrcp.pop %v1067
      %v1071 = vmul.f32 %v1054, %v1068
      %v1072 = vmul.f32 %v1056, %v1069
      %v1073 = vmul.f32 %v1058, %v1070
      %v1074 = vpack.c.bf16 %v1072, %v1071
      %v1075 = vpack.c.bf16 %v1073, %v1073
      %1076 = vrot.lane.b32.xlu0 %v855, 56
      %v1077 = vpop.permute.xlu0 %1076
      %1078 = vrot.lane.b32.xlu0 %v856, 56
      %v1079 = vpop.permute.xlu0 %1078
      %v1082 = vsel %vm894, %v1074, 0
      %v1085 = vsel %vm894, %v1075, 0
      %v1088 = vand.u32 %v1079, %v943
      %1090 = vmatpush.bf16.msra.mxu0 0
      %1091 = vmatpush.bf16.msra.mxu0 0
      %1092 = vmatpush.bf16.msra.mxu0 0
      %1093 = vmatpush.bf16.msra.mxu0 0
      %1094 = vmatpush.bf16.msra.mxu0 0
      %1095 = vmatpush.bf16.msra.mxu0 0
      %1096 = vmatpush.bf16.msra.mxu0 %v1088
      %1097 = vmatpush.bf16.msra.mxu0 %v1077
      %1098 = vmatmul.bf16.gmra.mxu0 %v1082
      %v1099 = vpop.f32.mrf.mxu0
      %v1100 = vadd.f32 0.0, %v1099
      %v1101 = vpop.f32.mrf.mxu0
      %v1102 = vadd.f32 0.0, %v1101
      %1103 = vmatmul.bf16.gmra.mxu0 %v1085
      %v1104 = vpop.f32.mrf.mxu0
      %v1105 = vadd.f32 0.0, %v1104
      %v1106 = vpop.f32.mrf.mxu0
      %1107 = vdwg.mxu0
      %v1108 = vpack.c.bf16 %v1102, %v1100
      %v1109 = vpack.c.bf16 %v1105, %v1105
      %v1111 = vsel %vm863, %v1108, 0
      %v1114 = vsel %vm863, %v1109, 0
      %v1117 = vsel %vm973, %v846, 0
      %1119 = vmatpush.bf16.msra.mxu0 0
      %1120 = vmatpush.bf16.msra.mxu0 0
      %1121 = vmatpush.bf16.msra.mxu0 0
      %1122 = vmatpush.bf16.msra.mxu0 0
      %1123 = vmatpush.bf16.msra.mxu0 0
      %1124 = vmatpush.bf16.msra.mxu0 0
      %1125 = vmatpush.bf16.msra.mxu0 0
      %1126 = vmatpush.bf16.msra.mxu0 %v1117
      %1127 = vmatmul.bf16.gmra.mxu0 %v1111
      %v1128 = vpop.f32.mrf.mxu0
      %v1129 = vadd.f32 0.0, %v1128
      %v1130 = vpop.f32.mrf.mxu0
      %v1131 = vadd.f32 0.0, %v1130
      %1132 = vmatmul.bf16.gmra.mxu0 %v1114
      %v1133 = vpop.f32.mrf.mxu0
      %v1134 = vadd.f32 0.0, %v1133
      %v1135 = vpop.f32.mrf.mxu0
      %1136 = vdwg.mxu0
      %v1137 = vadd.f32 %v998, %v1129
      %v1138 = vadd.f32 %v999, %v1131
      %v1139 = vadd.f32 %v1000, %v1134
      %1140 = vrot.lane.b32.xlu0 %v853, 112
      %v1141 = vpop.permute.xlu0 %1140
      %1142 = vrot.lane.b32.xlu0 %v854, 112
      %v1143 = vpop.permute.xlu0 %1142
      %1144 = vrot.lane.b32.xlu0 %v855, 80
      %v1145 = vpop.permute.xlu0 %1144
      %1146 = vrot.lane.b32.xlu0 %v856, 80
      %v1147 = vpop.permute.xlu0 %1146
      %v1149 = vsel %vm863, %v1141, 0
      %v1152 = vsel %vm863, %v1143, 0
      %v1155 = vsel %vm863, %v1145, 0
      %v1158 = vsel %vm863, %v1147, 0
      %1160 = vmatpush.bf16.xpose.msra.mxu0 0
      %1161 = vmatpush.bf16.xpose.msra.mxu0 0
      %1162 = vmatpush.bf16.xpose.msra.mxu0 0
      %1163 = vmatpush.bf16.xpose.msra.mxu0 0
      %1164 = vmatpush.bf16.xpose.msra.mxu0 0
      %1165 = vmatpush.bf16.xpose.msra.mxu0 0
      %1166 = vmatpush.bf16.xpose.msra.mxu0 %v1158
      %1167 = vmatpush.bf16.xpose.msra.mxu0 %v1155
      %1168 = vmatmul.bf16.gmra.mxu0 %v1149
      %v1169 = vpop.f32.mrf.mxu0
      %v1170 = vadd.f32 0.0, %v1169
      %v1171 = vpop.f32.mrf.mxu0
      %v1172 = vadd.f32 0.0, %v1171
      %1173 = vmatmul.bf16.gmra.mxu0 %v1152
      %v1174 = vpop.f32.mrf.mxu0
      %v1175 = vadd.f32 0.0, %v1174
      %v1176 = vpop.f32.mrf.mxu0
      %1177 = vdwg.mxu0
      %v1178 = vsel %vm894, %v1170, -inf
      %1179 = vmax.xlane.f32.xlu0 %v1178
      %v1180 = vpop.xlane.xlu0 %1179
      %v1181 = vsel %vm894, %v1172, -inf
      %1182 = vmax.xlane.f32.xlu0 %v1181
      %v1183 = vpop.xlane.xlu0 %1182
      %v1184 = vsel %vm901, %v1175, -inf
      %1185 = vmax.xlane.f32.xlu0 %v1184
      %v1186 = vpop.xlane.xlu0 %1185
      %v1187 = vsub.f32 %v1170, %v1180
      %v1188 = vsub.f32 %v1172, %v1183
      %v1189 = vsub.f32 %v1175, %v1186
      %v1190 = vmul.f32 %v1187, 1.442695
      %v1191 = vpow.pop %v1190
      %v1192 = vmul.f32 %v1188, 1.442695
      %v1193 = vpow.pop %v1192
      %v1194 = vmul.f32 %v1189, 1.442695
      %v1195 = vpow.pop %v1194
      %v1196 = vsel %vm894, %v1191, 0.0
      %1197 = vadd.xlane.f32.xlu0 %v1196
      %v1198 = vpop.xlane.xlu0 %1197
      %v1199 = vsel %vm894, %v1193, 0.0
      %1200 = vadd.xlane.f32.xlu0 %v1199
      %v1201 = vpop.xlane.xlu0 %1200
      %v1202 = vsel %vm901, %v1195, 0.0
      %1203 = vadd.xlane.f32.xlu0 %v1202
      %v1204 = vpop.xlane.xlu0 %1203
      %v1205 = vrcp.pop %v1198
      %v1206 = vrcp.pop %v1201
      %v1207 = vrcp.pop %v1204
      %v1208 = vmul.f32 %v1191, %v1205
      %v1209 = vmul.f32 %v1193, %v1206
      %v1210 = vmul.f32 %v1195, %v1207
      %v1211 = vpack.c.bf16 %v1209, %v1208
      %v1212 = vpack.c.bf16 %v1210, %v1210
      %1213 = vrot.lane.b32.xlu0 %v855, 48
      %v1214 = vpop.permute.xlu0 %1213
      %1215 = vrot.lane.b32.xlu0 %v856, 48
      %v1216 = vpop.permute.xlu0 %1215
      %v1219 = vsel %vm894, %v1211, 0
      %v1222 = vsel %vm894, %v1212, 0
      %v1225 = vand.u32 %v1216, %v943
      %1227 = vmatpush.bf16.msra.mxu0 0
      %1228 = vmatpush.bf16.msra.mxu0 0
      %1229 = vmatpush.bf16.msra.mxu0 0
      %1230 = vmatpush.bf16.msra.mxu0 0
      %1231 = vmatpush.bf16.msra.mxu0 0
      %1232 = vmatpush.bf16.msra.mxu0 0
      %1233 = vmatpush.bf16.msra.mxu0 %v1225
      %1234 = vmatpush.bf16.msra.mxu0 %v1214
      %1235 = vmatmul.bf16.gmra.mxu0 %v1219
      %v1236 = vpop.f32.mrf.mxu0
      %v1237 = vadd.f32 0.0, %v1236
      %v1238 = vpop.f32.mrf.mxu0
      %v1239 = vadd.f32 0.0, %v1238
      %1240 = vmatmul.bf16.gmra.mxu0 %v1222
      %v1241 = vpop.f32.mrf.mxu0
      %v1242 = vadd.f32 0.0, %v1241
      %v1243 = vpop.f32.mrf.mxu0
      %1244 = vdwg.mxu0
      %v1245 = vpack.c.bf16 %v1239, %v1237
      %v1246 = vpack.c.bf16 %v1242, %v1242
      %v1248 = vsel %vm863, %v1245, 0
      %v1251 = vsel %vm863, %v1246, 0
      %v1254 = vsel %vm973, %v847, 0
      %1256 = vmatpush.bf16.msra.mxu0 0
      %1257 = vmatpush.bf16.msra.mxu0 0
      %1258 = vmatpush.bf16.msra.mxu0 0
      %1259 = vmatpush.bf16.msra.mxu0 0
      %1260 = vmatpush.bf16.msra.mxu0 0
      %1261 = vmatpush.bf16.msra.mxu0 0
      %1262 = vmatpush.bf16.msra.mxu0 0
      %1263 = vmatpush.bf16.msra.mxu0 %v1254
      %1264 = vmatmul.bf16.gmra.mxu0 %v1248
      %v1265 = vpop.f32.mrf.mxu0
      %v1266 = vadd.f32 0.0, %v1265
      %v1267 = vpop.f32.mrf.mxu0
      %v1268 = vadd.f32 0.0, %v1267
      %1269 = vmatmul.bf16.gmra.mxu0 %v1251
      %v1270 = vpop.f32.mrf.mxu0
      %v1271 = vadd.f32 0.0, %v1270
      %v1272 = vpop.f32.mrf.mxu0
      %1273 = vdwg.mxu0
      %v1274 = vadd.f32 %v1137, %v1266
      %v1275 = vadd.f32 %v1138, %v1268
      %v1276 = vadd.f32 %v1139, %v1271
      %1277 = vrot.lane.b32.xlu0 %v853, 104
      %v1278 = vpop.permute.xlu0 %1277
      %1279 = vrot.lane.b32.xlu0 %v854, 104
      %v1280 = vpop.permute.xlu0 %1279
      %1281 = vrot.lane.b32.xlu0 %v855, 72
      %v1282 = vpop.permute.xlu0 %1281
      %1283 = vrot.lane.b32.xlu0 %v856, 72
      %v1284 = vpop.permute.xlu0 %1283
      %v1286 = vsel %vm863, %v1278, 0
      %v1289 = vsel %vm863, %v1280, 0
      %v1292 = vsel %vm863, %v1282, 0
      %v1295 = vsel %vm863, %v1284, 0
      %1297 = vmatpush.bf16.xpose.msra.mxu0 0
      %1298 = vmatpush.bf16.xpose.msra.mxu0 0
      %1299 = vmatpush.bf16.xpose.msra.mxu0 0
      %1300 = vmatpush.bf16.xpose.msra.mxu0 0
      %1301 = vmatpush.bf16.xpose.msra.mxu0 0
      %1302 = vmatpush.bf16.xpose.msra.mxu0 0
      %1303 = vmatpush.bf16.xpose.msra.mxu0 %v1295
      %1304 = vmatpush.bf16.xpose.msra.mxu0 %v1292
      %1305 = vmatmul.bf16.gmra.mxu0 %v1286
      %v1306 = vpop.f32.mrf.mxu0
      %v1307 = vadd.f32 0.0, %v1306
      %v1308 = vpop.f32.mrf.mxu0
      %v1309 = vadd.f32 0.0, %v1308
      %1310 = vmatmul.bf16.gmra.mxu0 %v1289
      %v1311 = vpop.f32.mrf.mxu0
      %v1312 = vadd.f32 0.0, %v1311
      %v1313 = vpop.f32.mrf.mxu0
      %1314 = vdwg.mxu0
      %v1315 = vsel %vm894, %v1307, -inf
      %1316 = vmax.xlane.f32.xlu0 %v1315
      %v1317 = vpop.xlane.xlu0 %1316
      %v1318 = vsel %vm894, %v1309, -inf
      %1319 = vmax.xlane.f32.xlu0 %v1318
      %v1320 = vpop.xlane.xlu0 %1319
      %v1321 = vsel %vm901, %v1312, -inf
      %1322 = vmax.xlane.f32.xlu0 %v1321
      %v1323 = vpop.xlane.xlu0 %1322
      %v1324 = vsub.f32 %v1307, %v1317
      %v1325 = vsub.f32 %v1309, %v1320
      %v1326 = vsub.f32 %v1312, %v1323
      %v1327 = vmul.f32 %v1324, 1.442695
      %v1328 = vpow.pop %v1327
      %v1329 = vmul.f32 %v1325, 1.442695
      %v1330 = vpow.pop %v1329
      %v1331 = vmul.f32 %v1326, 1.442695
      %v1332 = vpow.pop %v1331
      %v1333 = vsel %vm894, %v1328, 0.0
      %1334 = vadd.xlane.f32.xlu0 %v1333
      %v1335 = vpop.xlane.xlu0 %1334
      %v1336 = vsel %vm894, %v1330, 0.0
      %1337 = vadd.xlane.f32.xlu0 %v1336
      %v1338 = vpop.xlane.xlu0 %1337
      %v1339 = vsel %vm901, %v1332, 0.0
      %1340 = vadd.xlane.f32.xlu0 %v1339
      %v1341 = vpop.xlane.xlu0 %1340
      %v1342 = vrcp.pop %v1335
      %v1343 = vrcp.pop %v1338
      %v1344 = vrcp.pop %v1341
      %v1345 = vmul.f32 %v1328, %v1342
      %v1346 = vmul.f32 %v1330, %v1343
      %v1347 = vmul.f32 %v1332, %v1344
      %v1348 = vpack.c.bf16 %v1346, %v1345
      %v1349 = vpack.c.bf16 %v1347, %v1347
      %1350 = vrot.lane.b32.xlu0 %v855, 40
      %v1351 = vpop.permute.xlu0 %1350
      %1352 = vrot.lane.b32.xlu0 %v856, 40
      %v1353 = vpop.permute.xlu0 %1352
      %v1356 = vsel %vm894, %v1348, 0
      %v1359 = vsel %vm894, %v1349, 0
      %v1362 = vand.u32 %v1353, %v943
      %1364 = vmatpush.bf16.msra.mxu0 0
      %1365 = vmatpush.bf16.msra.mxu0 0
      %1366 = vmatpush.bf16.msra.mxu0 0
      %1367 = vmatpush.bf16.msra.mxu0 0
      %1368 = vmatpush.bf16.msra.mxu0 0
      %1369 = vmatpush.bf16.msra.mxu0 0
      %1370 = vmatpush.bf16.msra.mxu0 %v1362
      %1371 = vmatpush.bf16.msra.mxu0 %v1351
      %1372 = vmatmul.bf16.gmra.mxu0 %v1356
      %v1373 = vpop.f32.mrf.mxu0
      %v1374 = vadd.f32 0.0, %v1373
      %v1375 = vpop.f32.mrf.mxu0
      %v1376 = vadd.f32 0.0, %v1375
      %1377 = vmatmul.bf16.gmra.mxu0 %v1359
      %v1378 = vpop.f32.mrf.mxu0
      %v1379 = vadd.f32 0.0, %v1378
      %v1380 = vpop.f32.mrf.mxu0
      %1381 = vdwg.mxu0
      %v1382 = vpack.c.bf16 %v1376, %v1374
      %v1383 = vpack.c.bf16 %v1379, %v1379
      %v1385 = vsel %vm863, %v1382, 0
      %v1388 = vsel %vm863, %v1383, 0
      %v1391 = vsel %vm973, %v848, 0
      %1393 = vmatpush.bf16.msra.mxu0 0
      %1394 = vmatpush.bf16.msra.mxu0 0
      %1395 = vmatpush.bf16.msra.mxu0 0
      %1396 = vmatpush.bf16.msra.mxu0 0
      %1397 = vmatpush.bf16.msra.mxu0 0
      %1398 = vmatpush.bf16.msra.mxu0 0
      %1399 = vmatpush.bf16.msra.mxu0 0
      %1400 = vmatpush.bf16.msra.mxu0 %v1391
      %1401 = vmatmul.bf16.gmra.mxu0 %v1385
      %v1402 = vpop.f32.mrf.mxu0
      %v1403 = vadd.f32 0.0, %v1402
      %v1404 = vpop.f32.mrf.mxu0
      %v1405 = vadd.f32 0.0, %v1404
      %1406 = vmatmul.bf16.gmra.mxu0 %v1388
      %v1407 = vpop.f32.mrf.mxu0
      %v1408 = vadd.f32 0.0, %v1407
      %v1409 = vpop.f32.mrf.mxu0
      %1410 = vdwg.mxu0
      %v1411 = vadd.f32 %v1274, %v1403
      %v1412 = vadd.f32 %v1275, %v1405
      %v1413 = vadd.f32 %v1276, %v1408
      %v1414 = vadd.f32 %v702, %v1411
      %v1415 = vadd.f32 %v704, %v1412
      %v1416 = vadd.f32 %v707, %v1413
      %v1417 = vld [vmem:[%s9] sm:$0x1]
      %v1418 = vld [vmem:[%s10] sm:$0x1]
      %v1419 = vsel %vm712, %v1414, 0.0
      %1420 = vadd.xlane.f32.xlu0 %v1419
      %v1421 = vpop.xlane.xlu0 %1420
      %v1422 = vsel %vm712, %v1415, 0.0
      %1423 = vadd.xlane.f32.xlu0 %v1422
      %v1424 = vpop.xlane.xlu0 %1423
      %v1425 = vsel %vm719, %v1416, 0.0
      %1426 = vadd.xlane.f32.xlu0 %v1425
      %v1427 = vpop.xlane.xlu0 %1426
      %v1428 = vmul.f32 %v1421, %v729
      %v1429 = vmul.f32 %v1424, %v729
      %v1430 = vmul.f32 %v1427, %v729
      %v1431 = vsub.f32 %v1414, %v1428
      %v1432 = vsub.f32 %v1415, %v1429
      %v1433 = vsub.f32 %v1416, %v1430
      %v1434 = vmul.f32 %v1431, %v1431
      %v1435 = vmul.f32 %v1432, %v1432
      %v1436 = vmul.f32 %v1433, %v1433
      %v1437 = vsel %vm712, %v1434, 0.0
      %1438 = vadd.xlane.f32.xlu0 %v1437
      %v1439 = vpop.xlane.xlu0 %1438
      %v1440 = vsel %vm712, %v1435, 0.0
      %1441 = vadd.xlane.f32.xlu0 %v1440
      %v1442 = vpop.xlane.xlu0 %1441
      %v1443 = vsel %vm719, %v1436, 0.0
      %1444 = vadd.xlane.f32.xlu0 %v1443
      %v1445 = vpop.xlane.xlu0 %1444
      %v1446 = vmul.f32 %v1439, %v729
      %v1447 = vmul.f32 %v1442, %v729
      %v1448 = vmul.f32 %v1445, %v729
      %v1449 = vadd.f32 %v1446, 1e-06
      %v1450 = vadd.f32 %v1447, 1e-06
      %v1451 = vadd.f32 %v1448, 1e-06
      %v1452 = vrsqrt.pop %v1449
      %v1453 = vmul.f32 %v1452, %v1449
      %v1454 = vmul.f32 %v1453, %v1452
      %v1455 = vmul.f32 0.5, %v1454
      %v1456 = vsub.f32 1.5, %v1455
      %v1457 = vmul.f32 %v1452, %v1456
      %vm1458 = vweird.f32 %v1449
      %vm1459 = vweird.f32 %v1452
      %vm1460 = vmor %vm1458, %vm1459
      %v1461 = vsel %vm1460, %v1452, %v1457
      %v1462 = vrsqrt.pop %v1450
      %v1463 = vmul.f32 %v1462, %v1450
      %v1464 = vmul.f32 %v1463, %v1462
      %v1465 = vmul.f32 0.5, %v1464
      %v1466 = vsub.f32 1.5, %v1465
      %v1467 = vmul.f32 %v1462, %v1466
      %vm1468 = vweird.f32 %v1450
      %vm1469 = vweird.f32 %v1462
      %vm1470 = vmor %vm1468, %vm1469
      %v1471 = vsel %vm1470, %v1462, %v1467
      %v1472 = vrsqrt.pop %v1451
      %v1473 = vmul.f32 %v1472, %v1451
      %v1474 = vmul.f32 %v1473, %v1472
      %v1475 = vmul.f32 0.5, %v1474
      %v1476 = vsub.f32 1.5, %v1475
      %v1477 = vmul.f32 %v1472, %v1476
      %vm1478 = vweird.f32 %v1451
      %vm1479 = vweird.f32 %v1472
      %vm1480 = vmor %vm1478, %vm1479
      %v1481 = vsel %vm1480, %v1472, %v1477
      %v1482 = vmul.f32 %v1431, %v1461
      %v1483 = vmul.f32 %v1432, %v1471
      %v1484 = vmul.f32 %v1433, %v1481
      %v1486 = vperm.slane %v1417, 0
      %v1488 = vmul.f32 %v1482, %v1486
      %v1489 = vmul.f32 %v1483, %v1486
      %v1490 = vmul.f32 %v1484, %v1486
      %v1492 = vperm.slane %v1418, 0
      %v1494 = vadd.f32 %v1488, %v1492
      %v1495 = vadd.f32 %v1489, %v1492
      %v1496 = vadd.f32 %v1490, %v1492
      %v1497 = vpack.c.bf16 %v1495, %v1494
      %v1498 = vpack.c.bf16 %v1496, %v1496
      %v1499 = vld [vmem:[%s11] sm:$0xf]
      %v1500 = vld [vmem:[%s11 + $0x4] sm:$0xf]
      %v1501 = vld [vmem:[%s11 + $0x8] sm:$0xf]
      %v1502 = vld [vmem:[%s11 + $0xc] sm:$0xf]
      %v1503 = vld [vmem:[%s12] sm:$0x1]
      %v1505 = vperm.slane %v1503, 0
      %v1511 = vunpack.c.l.b16 %v1499
      %v1512 = vunpack.c.l.b16 %v1500
      %v1513 = vunpack.c.l.b16 %v1501
      %v1514 = vunpack.c.l.b16 %v1502
      %v1515 = vpack.c.b16 %v1512, %v1511
      %v1516 = vpack.c.b16 %v1514, %v1513
      %v1520 = vsel %vm712, %v1497, 0
      %v1523 = vsel %vm712, %v1498, 0
      %1525 = vmatpush.bf16.msra.mxu0 0
      %1526 = vmatpush.bf16.msra.mxu0 0
      %1527 = vmatpush.bf16.msra.mxu0 0
      %1528 = vmatpush.bf16.msra.mxu0 0
      %1529 = vmatpush.bf16.msra.mxu0 0
      %1530 = vmatpush.bf16.msra.mxu0 0
      %1531 = vmatpush.bf16.msra.mxu0 %v1516
      %1532 = vmatpush.bf16.msra.mxu0 %v1515
      %1533 = vmatmul.bf16.gmra.mxu0 %v1520
      %v1534 = vpop.f32.mrf.mxu0
      %v1535 = vadd.f32 %v1505, %v1534
      %v1536 = vpop.f32.mrf.mxu0
      %v1537 = vadd.f32 %v1505, %v1536
      %1538 = vmatmul.bf16.gmra.mxu0 %v1523
      %v1539 = vpop.f32.mrf.mxu0
      %v1540 = vadd.f32 %v1505, %v1539
      %v1541 = vpop.f32.mrf.mxu0
      %1542 = vdwg.mxu0
      %v1543 = vmul.f32 %v1535, 0.5
      %v1544 = vmul.f32 %v1537, 0.5
      %v1545 = vmul.f32 %v1540, 0.5
      %v1546 = vmul.f32 %v1535, 0.70710677
      %v1547 = vmul.f32 %v1537, 0.70710677
      %v1548 = vmul.f32 %v1540, 0.70710677
      %vm1549 = vcmp.lt.f32.partialorder %v1546, 0.0
      %vm1550 = vcmp.lt.f32.partialorder %v1547, 0.0
      %vm1551 = vcmp.lt.f32.partialorder %v1548, 0.0
      %v1552 = vsel %vm1549, -1.0, 1.0
      %v1553 = vsel %vm1550, -1.0, 1.0
      %v1554 = vsel %vm1551, -1.0, 1.0
      %v1555 = vand.u32 2147483647, %v1546
      %v1556 = vand.u32 2147483647, %v1547
      %v1557 = vand.u32 2147483647, %v1548
      %v1558 = vmul.f32 %v1555, 0.3275911
      %v1559 = vmul.f32 %v1556, 0.3275911
      %v1560 = vmul.f32 %v1557, 0.3275911
      %v1561 = vadd.f32 %v1558, 1.0
      %v1562 = vadd.f32 %v1559, 1.0
      %v1563 = vadd.f32 %v1560, 1.0
      %v1564 = vrcp.pop %v1561
      %v1565 = vmul.f32 %v1561, %v1564
      %v1566 = vsub.f32 1.0, %v1565
      %v1567 = vmul.f32 %v1564, %v1566
      %v1568 = vadd.f32 %v1564, %v1567
      %vm1569 = vweird.f32 %v1561
      %vm1570 = vweird.f32 %v1564
      %vm1571 = vmor %vm1569, %vm1570
      %v1572 = vsel %vm1571, %v1564, %v1568
      %v1573 = vand.u32 2147483647, %v1561
      %vm1574 = vcmp.eq.f32.partialorder %v1573, 8.507059e+37
      %v1575 = vand.u32 %v1561, 2147483648
      %v1576 = vor.u32 1.1754944e-38, %v1575
      %v1577 = vsel %vm1574, %v1576, %v1572
      %v1578 = vmul.f32 1.0, %v1577
      %v1579 = vrcp.pop %v1562
      %v1580 = vmul.f32 %v1562, %v1579
      %v1581 = vsub.f32 1.0, %v1580
      %v1582 = vmul.f32 %v1579, %v1581
      %v1583 = vadd.f32 %v1579, %v1582
      %vm1584 = vweird.f32 %v1562
      %vm1585 = vweird.f32 %v1579
      %vm1586 = vmor %vm1584, %vm1585
      %v1587 = vsel %vm1586, %v1579, %v1583
      %v1588 = vand.u32 2147483647, %v1562
      %vm1589 = vcmp.eq.f32.partialorder %v1588, 8.507059e+37
      %v1590 = vand.u32 %v1562, 2147483648
      %v1591 = vor.u32 1.1754944e-38, %v1590
      %v1592 = vsel %vm1589, %v1591, %v1587
      %v1593 = vmul.f32 1.0, %v1592
      %v1594 = vrcp.pop %v1563
      %v1595 = vmul.f32 %v1563, %v1594
      %v1596 = vsub.f32 1.0, %v1595
      %v1597 = vmul.f32 %v1594, %v1596
      %v1598 = vadd.f32 %v1594, %v1597
      %vm1599 = vweird.f32 %v1563
      %vm1600 = vweird.f32 %v1594
      %vm1601 = vmor %vm1599, %vm1600
      %v1602 = vsel %vm1601, %v1594, %v1598
      %v1603 = vand.u32 2147483647, %v1563
      %vm1604 = vcmp.eq.f32.partialorder %v1603, 8.507059e+37
      %v1605 = vand.u32 %v1563, 2147483648
      %v1606 = vor.u32 1.1754944e-38, %v1605
      %v1607 = vsel %vm1604, %v1606, %v1602
      %v1608 = vmul.f32 1.0, %v1607
      %v1609 = vmul.f32 %v1578, 1.0614054
      %v1610 = vmul.f32 %v1593, 1.0614054
      %v1611 = vmul.f32 %v1608, 1.0614054
      %v1612 = vadd.f32 %v1609, -1.4531521
      %v1613 = vadd.f32 %v1610, -1.4531521
      %v1614 = vadd.f32 %v1611, -1.4531521
      %v1615 = vmul.f32 %v1578, %v1612
      %v1616 = vmul.f32 %v1593, %v1613
      %v1617 = vmul.f32 %v1608, %v1614
      %v1618 = vadd.f32 %v1615, 1.4214138
      %v1619 = vadd.f32 %v1616, 1.4214138
      %v1620 = vadd.f32 %v1617, 1.4214138
      %v1621 = vmul.f32 %v1578, %v1618
      %v1622 = vmul.f32 %v1593, %v1619
      %v1623 = vmul.f32 %v1608, %v1620
      %v1624 = vadd.f32 %v1621, -0.28449672
      %v1625 = vadd.f32 %v1622, -0.28449672
      %v1626 = vadd.f32 %v1623, -0.28449672
      %v1627 = vmul.f32 %v1578, %v1624
      %v1628 = vmul.f32 %v1593, %v1625
      %v1629 = vmul.f32 %v1608, %v1626
      %v1630 = vadd.f32 %v1627, 0.2548296
      %v1631 = vadd.f32 %v1628, 0.2548296
      %v1632 = vadd.f32 %v1629, 0.2548296
      %v1633 = vmul.f32 %v1578, %v1630
      %v1634 = vmul.f32 %v1593, %v1631
      %v1635 = vmul.f32 %v1608, %v1632
      %v1636 = vsub.f32 0.0, %v1555
      %v1637 = vsub.f32 0.0, %v1556
      %v1638 = vsub.f32 0.0, %v1557
      %v1639 = vmul.f32 %v1636, %v1555
      %v1640 = vmul.f32 %v1637, %v1556
      %v1641 = vmul.f32 %v1638, %v1557
      %v1642 = vmul.f32 %v1639, 1.442695
      %v1643 = vpow.pop %v1642
      %v1644 = vmul.f32 %v1640, 1.442695
      %v1645 = vpow.pop %v1644
      %v1646 = vmul.f32 %v1641, 1.442695
      %v1647 = vpow.pop %v1646
      %v1648 = vmul.f32 %v1633, %v1643
      %v1649 = vmul.f32 %v1634, %v1645
      %v1650 = vmul.f32 %v1635, %v1647
      %v1651 = vsub.f32 1.0, %v1648
      %v1652 = vsub.f32 1.0, %v1649
      %v1653 = vsub.f32 1.0, %v1650
      %v1654 = vmul.f32 %v1552, %v1651
      %v1655 = vmul.f32 %v1553, %v1652
      %v1656 = vmul.f32 %v1554, %v1653
      %v1657 = vadd.f32 %v1654, 1.0
      %v1658 = vadd.f32 %v1655, 1.0
      %v1659 = vadd.f32 %v1656, 1.0
      %v1660 = vmul.f32 %v1543, %v1657
      %v1661 = vmul.f32 %v1544, %v1658
      %v1662 = vmul.f32 %v1545, %v1659
      %v1663 = vpack.c.bf16 %v1661, %v1660
      %v1664 = vpack.c.bf16 %v1662, %v1662
      %v1665 = vld [vmem:[%s13] sm:$0xf]
      %v1666 = vld [vmem:[%s13 + $0x4] sm:$0xf]
      %v1667 = vld [vmem:[%s13 + $0x8] sm:$0xf]
      %v1668 = vld [vmem:[%s13 + $0xc] sm:$0xf]
      %v1669 = vld [vmem:[%s13 + $0x10] sm:$0xf]
      %v1670 = vld [vmem:[%s13 + $0x14] sm:$0xf]
      %v1671 = vld [vmem:[%s13 + $0x18] sm:$0xf]
      %v1672 = vld [vmem:[%s13 + $0x1c] sm:$0xf]
      %v1673 = vld [vmem:[%s13 + $0x20] sm:$0xf]
      %v1674 = vld [vmem:[%s13 + $0x24] sm:$0xf]
      %v1675 = vld [vmem:[%s13 + $0x28] sm:$0xf]
      %v1676 = vld [vmem:[%s13 + $0x2c] sm:$0xf]
      %v1677 = vld [vmem:[%s13 + $0x30] sm:$0xf]
      %v1678 = vld [vmem:[%s13 + $0x34] sm:$0xf]
      %v1679 = vld [vmem:[%s13 + $0x38] sm:$0xf]
      %v1680 = vld [vmem:[%s13 + $0x3c] sm:$0xf]
      %v1681 = vld [vmem:[%s14] sm:$0x1]
      %v1683 = vperm.slane %v1681, 0
      %v1701 = vunpack.c.l.b16 %v1665
      %v1702 = vunpack.c.l.b16 %v1666
      %v1703 = vunpack.c.l.b16 %v1667
      %v1704 = vunpack.c.l.b16 %v1668
      %v1705 = vunpack.c.l.b16 %v1669
      %v1706 = vunpack.c.l.b16 %v1670
      %v1707 = vunpack.c.l.b16 %v1671
      %v1708 = vunpack.c.l.b16 %v1672
      %v1709 = vunpack.c.l.b16 %v1673
      %v1710 = vunpack.c.l.b16 %v1674
      %v1711 = vunpack.c.l.b16 %v1675
      %v1712 = vunpack.c.l.b16 %v1676
      %v1713 = vunpack.c.l.b16 %v1677
      %v1714 = vunpack.c.l.b16 %v1678
      %v1715 = vunpack.c.l.b16 %v1679
      %v1716 = vunpack.c.l.b16 %v1680
      %v1717 = vpack.c.b16 %v1702, %v1701
      %v1718 = vpack.c.b16 %v1704, %v1703
      %v1719 = vpack.c.b16 %v1706, %v1705
      %v1720 = vpack.c.b16 %v1708, %v1707
      %v1721 = vpack.c.b16 %v1710, %v1709
      %v1722 = vpack.c.b16 %v1712, %v1711
      %v1723 = vpack.c.b16 %v1714, %v1713
      %v1724 = vpack.c.b16 %v1716, %v1715
      %1733 = vmatpush.bf16.msra.mxu0 %v1724
      %1734 = vmatpush.bf16.msra.mxu0 %v1723
      %1735 = vmatpush.bf16.msra.mxu0 %v1722
      %1736 = vmatpush.bf16.msra.mxu0 %v1721
      %1737 = vmatpush.bf16.msra.mxu0 %v1720
      %1738 = vmatpush.bf16.msra.mxu0 %v1719
      %1739 = vmatpush.bf16.msra.mxu0 %v1718
      %1740 = vmatpush.bf16.msra.mxu0 %v1717
      %1741 = vmatmul.bf16.gmra.mxu0 %v1663
      %v1742 = vpop.f32.mrf.mxu0
      %v1743 = vadd.f32 %v1683, %v1742
      %v1744 = vpop.f32.mrf.mxu0
      %v1745 = vadd.f32 %v1683, %v1744
      %1746 = vmatmul.bf16.gmra.mxu0 %v1664
      %v1747 = vpop.f32.mrf.mxu0
      %v1748 = vadd.f32 %v1683, %v1747
      %v1749 = vpop.f32.mrf.mxu0
      %1750 = vdwg.mxu0
      %v1751 = vadd.f32 %v1414, %v1743
      %v1752 = vadd.f32 %v1415, %v1745
      %v1753 = vadd.f32 %v1416, %v1748
      %s1754 = scalar_lea.vmem %s3, 1
      %v1755 = vld [vmem:[%s1754] sm:$0x1]
      %s1756 = scalar_lea.vmem %s4, 1
      %v1757 = vld [vmem:[%s1756] sm:$0x1]
      %v1758 = vsel %vm712, %v1751, 0.0
      %1759 = vadd.xlane.f32.xlu0 %v1758
      %v1760 = vpop.xlane.xlu0 %1759
      %v1761 = vsel %vm712, %v1752, 0.0
      %1762 = vadd.xlane.f32.xlu0 %v1761
      %v1763 = vpop.xlane.xlu0 %1762
      %v1764 = vsel %vm719, %v1753, 0.0
      %1765 = vadd.xlane.f32.xlu0 %v1764
      %v1766 = vpop.xlane.xlu0 %1765
      %v1767 = vmul.f32 %v1760, %v729
      %v1768 = vmul.f32 %v1763, %v729
      %v1769 = vmul.f32 %v1766, %v729
      %v1770 = vsub.f32 %v1751, %v1767
      %v1771 = vsub.f32 %v1752, %v1768
      %v1772 = vsub.f32 %v1753, %v1769
      %v1773 = vmul.f32 %v1770, %v1770
      %v1774 = vmul.f32 %v1771, %v1771
      %v1775 = vmul.f32 %v1772, %v1772
      %v1776 = vsel %vm712, %v1773, 0.0
      %1777 = vadd.xlane.f32.xlu0 %v1776
      %v1778 = vpop.xlane.xlu0 %1777
      %v1779 = vsel %vm712, %v1774, 0.0
      %1780 = vadd.xlane.f32.xlu0 %v1779
      %v1781 = vpop.xlane.xlu0 %1780
      %v1782 = vsel %vm719, %v1775, 0.0
      %1783 = vadd.xlane.f32.xlu0 %v1782
      %v1784 = vpop.xlane.xlu0 %1783
      %v1785 = vmul.f32 %v1778, %v729
      %v1786 = vmul.f32 %v1781, %v729
      %v1787 = vmul.f32 %v1784, %v729
      %v1788 = vadd.f32 %v1785, 1e-06
      %v1789 = vadd.f32 %v1786, 1e-06
      %v1790 = vadd.f32 %v1787, 1e-06
      %v1791 = vrsqrt.pop %v1788
      %v1792 = vmul.f32 %v1791, %v1788
      %v1793 = vmul.f32 %v1792, %v1791
      %v1794 = vmul.f32 0.5, %v1793
      %v1795 = vsub.f32 1.5, %v1794
      %v1796 = vmul.f32 %v1791, %v1795
      %vm1797 = vweird.f32 %v1788
      %vm1798 = vweird.f32 %v1791
      %vm1799 = vmor %vm1797, %vm1798
      %v1800 = vsel %vm1799, %v1791, %v1796
      %v1801 = vrsqrt.pop %v1789
      %v1802 = vmul.f32 %v1801, %v1789
      %v1803 = vmul.f32 %v1802, %v1801
      %v1804 = vmul.f32 0.5, %v1803
      %v1805 = vsub.f32 1.5, %v1804
      %v1806 = vmul.f32 %v1801, %v1805
      %vm1807 = vweird.f32 %v1789
      %vm1808 = vweird.f32 %v1801
      %vm1809 = vmor %vm1807, %vm1808
      %v1810 = vsel %vm1809, %v1801, %v1806
      %v1811 = vrsqrt.pop %v1790
      %v1812 = vmul.f32 %v1811, %v1790
      %v1813 = vmul.f32 %v1812, %v1811
      %v1814 = vmul.f32 0.5, %v1813
      %v1815 = vsub.f32 1.5, %v1814
      %v1816 = vmul.f32 %v1811, %v1815
      %vm1817 = vweird.f32 %v1790
      %vm1818 = vweird.f32 %v1811
      %vm1819 = vmor %vm1817, %vm1818
      %v1820 = vsel %vm1819, %v1811, %v1816
      %v1821 = vmul.f32 %v1770, %v1800
      %v1822 = vmul.f32 %v1771, %v1810
      %v1823 = vmul.f32 %v1772, %v1820
      %v1825 = vperm.slane %v1755, 0
      %v1827 = vmul.f32 %v1821, %v1825
      %v1828 = vmul.f32 %v1822, %v1825
      %v1829 = vmul.f32 %v1823, %v1825
      %v1831 = vperm.slane %v1757, 0
      %v1833 = vadd.f32 %v1827, %v1831
      %v1834 = vadd.f32 %v1828, %v1831
      %v1835 = vadd.f32 %v1829, %v1831
      %v1836 = vpack.c.bf16 %v1834, %v1833
      %v1837 = vpack.c.bf16 %v1835, %v1835
      %s1838 = scalar_lea.vmem %s5, 16
      %v1839 = vld [vmem:[%s1838] sm:$0xf]
      %v1840 = vld [vmem:[%s1838 + $0x4] sm:$0xf]
      %v1841 = vld [vmem:[%s1838 + $0x8] sm:$0xf]
      %v1842 = vld [vmem:[%s1838 + $0xc] sm:$0xf]
      %s1843 = scalar_lea.vmem %s6, 1
      %v1844 = vld [vmem:[%s1843] sm:$0x1]
      %v1846 = vperm.slane %v1844, 0
      %v1852 = vunpack.c.l.b16 %v1839
      %v1853 = vunpack.c.l.b16 %v1840
      %v1854 = vunpack.c.l.b16 %v1841
      %v1855 = vunpack.c.l.b16 %v1842
      %v1856 = vpack.c.b16 %v1853, %v1852
      %v1857 = vpack.c.b16 %v1855, %v1854
      %v1861 = vsel %vm712, %v1836, 0
      %v1864 = vsel %vm712, %v1837, 0
      %1866 = vmatpush.bf16.msra.mxu0 0
      %1867 = vmatpush.bf16.msra.mxu0 0
      %1868 = vmatpush.bf16.msra.mxu0 0
      %1869 = vmatpush.bf16.msra.mxu0 0
      %1870 = vmatpush.bf16.msra.mxu0 0
      %1871 = vmatpush.bf16.msra.mxu0 0
      %1872 = vmatpush.bf16.msra.mxu0 %v1857
      %1873 = vmatpush.bf16.msra.mxu0 %v1856
      %1874 = vmatmul.bf16.gmra.mxu0 %v1861
      %v1875 = vpop.f32.mrf.mxu0
      %v1876 = vadd.f32 %v1846, %v1875
      %v1877 = vpop.f32.mrf.mxu0
      %v1878 = vadd.f32 %v1846, %v1877
      %1879 = vmatmul.bf16.gmra.mxu0 %v1864
      %v1880 = vpop.f32.mrf.mxu0
      %v1881 = vadd.f32 %v1846, %v1880
      %v1882 = vpop.f32.mrf.mxu0
      %1883 = vdwg.mxu0
      %s1884 = scalar_lea.vmem %s7, 16
      %v1885 = vld [vmem:[%s1884] sm:$0xf]
      %v1886 = vld [vmem:[%s1884 + $0x4] sm:$0xf]
      %v1887 = vld [vmem:[%s1884 + $0x8] sm:$0xf]
      %v1888 = vld [vmem:[%s1884 + $0xc] sm:$0xf]
      %s1889 = scalar_lea.vmem %s8, 1
      %v1890 = vld [vmem:[%s1889] sm:$0x1]
      %v1891 = vmul.f32 %v1876, 0.35355338
      %v1892 = vmul.f32 %v1878, 0.35355338
      %v1893 = vmul.f32 %v1881, 0.35355338
      %v1894 = vpack.c.bf16 %v1892, %v1891
      %v1895 = vpack.c.bf16 %v1893, %v1893
      %v1896 = vpack.c.bf16 %v1878, %v1876
      %v1897 = vpack.c.bf16 %v1881, %v1881
      %1900 = vrot.lane.b32.xlu0 %v1896, 96
      %v1901 = vpop.permute.xlu0 %1900
      %1902 = vrot.lane.b32.xlu0 %v1897, 96
      %v1903 = vpop.permute.xlu0 %1902
      %v1905 = vsel %vm863, %v1894, 0
      %v1908 = vsel %vm863, %v1895, 0
      %v1911 = vsel %vm863, %v1901, 0
      %v1914 = vsel %vm863, %v1903, 0
      %1916 = vmatpush.bf16.xpose.msra.mxu0 0
      %1917 = vmatpush.bf16.xpose.msra.mxu0 0
      %1918 = vmatpush.bf16.xpose.msra.mxu0 0
      %1919 = vmatpush.bf16.xpose.msra.mxu0 0
      %1920 = vmatpush.bf16.xpose.msra.mxu0 0
      %1921 = vmatpush.bf16.xpose.msra.mxu0 0
      %1922 = vmatpush.bf16.xpose.msra.mxu0 %v1914
      %1923 = vmatpush.bf16.xpose.msra.mxu0 %v1911
      %1924 = vmatmul.bf16.gmra.mxu0 %v1905
      %v1925 = vpop.f32.mrf.mxu0
      %v1926 = vadd.f32 0.0, %v1925
      %v1927 = vpop.f32.mrf.mxu0
      %v1928 = vadd.f32 0.0, %v1927
      %1929 = vmatmul.bf16.gmra.mxu0 %v1908
      %v1930 = vpop.f32.mrf.mxu0
      %v1931 = vadd.f32 0.0, %v1930
      %v1932 = vpop.f32.mrf.mxu0
      %1933 = vdwg.mxu0
      %v1934 = vsel %vm894, %v1926, -inf
      %1935 = vmax.xlane.f32.xlu0 %v1934
      %v1936 = vpop.xlane.xlu0 %1935
      %v1937 = vsel %vm894, %v1928, -inf
      %1938 = vmax.xlane.f32.xlu0 %v1937
      %v1939 = vpop.xlane.xlu0 %1938
      %v1940 = vsel %vm901, %v1931, -inf
      %1941 = vmax.xlane.f32.xlu0 %v1940
      %v1942 = vpop.xlane.xlu0 %1941
      %v1943 = vsub.f32 %v1926, %v1936
      %v1944 = vsub.f32 %v1928, %v1939
      %v1945 = vsub.f32 %v1931, %v1942
      %v1946 = vmul.f32 %v1943, 1.442695
      %v1947 = vpow.pop %v1946
      %v1948 = vmul.f32 %v1944, 1.442695
      %v1949 = vpow.pop %v1948
      %v1950 = vmul.f32 %v1945, 1.442695
      %v1951 = vpow.pop %v1950
      %v1952 = vsel %vm894, %v1947, 0.0
      %1953 = vadd.xlane.f32.xlu0 %v1952
      %v1954 = vpop.xlane.xlu0 %1953
      %v1955 = vsel %vm894, %v1949, 0.0
      %1956 = vadd.xlane.f32.xlu0 %v1955
      %v1957 = vpop.xlane.xlu0 %1956
      %v1958 = vsel %vm901, %v1951, 0.0
      %1959 = vadd.xlane.f32.xlu0 %v1958
      %v1960 = vpop.xlane.xlu0 %1959
      %v1961 = vrcp.pop %v1954
      %v1962 = vrcp.pop %v1957
      %v1963 = vrcp.pop %v1960
      %v1964 = vmul.f32 %v1947, %v1961
      %v1965 = vmul.f32 %v1949, %v1962
      %v1966 = vmul.f32 %v1951, %v1963
      %v1967 = vpack.c.bf16 %v1965, %v1964
      %v1968 = vpack.c.bf16 %v1966, %v1966
      %1969 = vrot.lane.b32.xlu0 %v1896, 64
      %v1970 = vpop.permute.xlu0 %1969
      %1971 = vrot.lane.b32.xlu0 %v1897, 64
      %v1972 = vpop.permute.xlu0 %1971
      %v1975 = vsel %vm894, %v1967, 0
      %v1978 = vsel %vm894, %v1968, 0
      %v1981 = vand.u32 %v1972, %v943
      %1983 = vmatpush.bf16.msra.mxu0 0
      %1984 = vmatpush.bf16.msra.mxu0 0
      %1985 = vmatpush.bf16.msra.mxu0 0
      %1986 = vmatpush.bf16.msra.mxu0 0
      %1987 = vmatpush.bf16.msra.mxu0 0
      %1988 = vmatpush.bf16.msra.mxu0 0
      %1989 = vmatpush.bf16.msra.mxu0 %v1981
      %1990 = vmatpush.bf16.msra.mxu0 %v1970
      %1991 = vmatmul.bf16.gmra.mxu0 %v1975
      %v1992 = vpop.f32.mrf.mxu0
      %v1993 = vadd.f32 0.0, %v1992
      %v1994 = vpop.f32.mrf.mxu0
      %v1995 = vadd.f32 0.0, %v1994
      %1996 = vmatmul.bf16.gmra.mxu0 %v1978
      %v1997 = vpop.f32.mrf.mxu0
      %v1998 = vadd.f32 0.0, %v1997
      %v1999 = vpop.f32.mrf.mxu0
      %2000 = vdwg.mxu0
      %v2001 = vpack.c.bf16 %v1995, %v1993
      %v2002 = vpack.c.bf16 %v1998, %v1998
      %v2004 = vsel %vm863, %v2001, 0
      %v2007 = vsel %vm863, %v2002, 0
      %v2010 = vsel %vm973, %v1885, 0
      %2012 = vmatpush.bf16.msra.mxu0 0
      %2013 = vmatpush.bf16.msra.mxu0 0
      %2014 = vmatpush.bf16.msra.mxu0 0
      %2015 = vmatpush.bf16.msra.mxu0 0
      %2016 = vmatpush.bf16.msra.mxu0 0
      %2017 = vmatpush.bf16.msra.mxu0 0
      %2018 = vmatpush.bf16.msra.mxu0 0
      %2019 = vmatpush.bf16.msra.mxu0 %v2010
      %2020 = vmatmul.bf16.gmra.mxu0 %v2004
      %v2021 = vpop.f32.mrf.mxu0
      %v2022 = vadd.f32 0.0, %v2021
      %v2023 = vpop.f32.mrf.mxu0
      %v2024 = vadd.f32 0.0, %v2023
      %2025 = vmatmul.bf16.gmra.mxu0 %v2007
      %v2026 = vpop.f32.mrf.mxu0
      %v2027 = vadd.f32 0.0, %v2026
      %v2028 = vpop.f32.mrf.mxu0
      %2029 = vdwg.mxu0
      %v2031 = vperm.slane %v1890, 0
      %v2033 = vadd.f32 %v2031, %v2022
      %v2034 = vadd.f32 %v2031, %v2024
      %v2035 = vadd.f32 %v2031, %v2027
      %2038 = vrot.lane.b32.xlu0 %v1894, 120
      %v2039 = vpop.permute.xlu0 %2038
      %2040 = vrot.lane.b32.xlu0 %v1895, 120
      %v2041 = vpop.permute.xlu0 %2040
      %2042 = vrot.lane.b32.xlu0 %v1896, 88
      %v2043 = vpop.permute.xlu0 %2042
      %2044 = vrot.lane.b32.xlu0 %v1897, 88
      %v2045 = vpop.permute.xlu0 %2044
      %v2047 = vsel %vm863, %v2039, 0
      %v2050 = vsel %vm863, %v2041, 0
      %v2053 = vsel %vm863, %v2043, 0
      %v2056 = vsel %vm863, %v2045, 0
      %2058 = vmatpush.bf16.xpose.msra.mxu0 0
      %2059 = vmatpush.bf16.xpose.msra.mxu0 0
      %2060 = vmatpush.bf16.xpose.msra.mxu0 0
      %2061 = vmatpush.bf16.xpose.msra.mxu0 0
      %2062 = vmatpush.bf16.xpose.msra.mxu0 0
      %2063 = vmatpush.bf16.xpose.msra.mxu0 0
      %2064 = vmatpush.bf16.xpose.msra.mxu0 %v2056
      %2065 = vmatpush.bf16.xpose.msra.mxu0 %v2053
      %2066 = vmatmul.bf16.gmra.mxu0 %v2047
      %v2067 = vpop.f32.mrf.mxu0
      %v2068 = vadd.f32 0.0, %v2067
      %v2069 = vpop.f32.mrf.mxu0
      %v2070 = vadd.f32 0.0, %v2069
      %2071 = vmatmul.bf16.gmra.mxu0 %v2050
      %v2072 = vpop.f32.mrf.mxu0
      %v2073 = vadd.f32 0.0, %v2072
      %v2074 = vpop.f32.mrf.mxu0
      %2075 = vdwg.mxu0
      %v2076 = vsel %vm894, %v2068, -inf
      %2077 = vmax.xlane.f32.xlu0 %v2076
      %v2078 = vpop.xlane.xlu0 %2077
      %v2079 = vsel %vm894, %v2070, -inf
      %2080 = vmax.xlane.f32.xlu0 %v2079
      %v2081 = vpop.xlane.xlu0 %2080
      %v2082 = vsel %vm901, %v2073, -inf
      %2083 = vmax.xlane.f32.xlu0 %v2082
      %v2084 = vpop.xlane.xlu0 %2083
      %v2085 = vsub.f32 %v2068, %v2078
      %v2086 = vsub.f32 %v2070, %v2081
      %v2087 = vsub.f32 %v2073, %v2084
      %v2088 = vmul.f32 %v2085, 1.442695
      %v2089 = vpow.pop %v2088
      %v2090 = vmul.f32 %v2086, 1.442695
      %v2091 = vpow.pop %v2090
      %v2092 = vmul.f32 %v2087, 1.442695
      %v2093 = vpow.pop %v2092
      %v2094 = vsel %vm894, %v2089, 0.0
      %2095 = vadd.xlane.f32.xlu0 %v2094
      %v2096 = vpop.xlane.xlu0 %2095
      %v2097 = vsel %vm894, %v2091, 0.0
      %2098 = vadd.xlane.f32.xlu0 %v2097
      %v2099 = vpop.xlane.xlu0 %2098
      %v2100 = vsel %vm901, %v2093, 0.0
      %2101 = vadd.xlane.f32.xlu0 %v2100
      %v2102 = vpop.xlane.xlu0 %2101
      %v2103 = vrcp.pop %v2096
      %v2104 = vrcp.pop %v2099
      %v2105 = vrcp.pop %v2102
      %v2106 = vmul.f32 %v2089, %v2103
      %v2107 = vmul.f32 %v2091, %v2104
      %v2108 = vmul.f32 %v2093, %v2105
      %v2109 = vpack.c.bf16 %v2107, %v2106
      %v2110 = vpack.c.bf16 %v2108, %v2108
      %2111 = vrot.lane.b32.xlu0 %v1896, 56
      %v2112 = vpop.permute.xlu0 %2111
      %2113 = vrot.lane.b32.xlu0 %v1897, 56
      %v2114 = vpop.permute.xlu0 %2113
      %v2117 = vsel %vm894, %v2109, 0
      %v2120 = vsel %vm894, %v2110, 0
      %v2123 = vand.u32 %v2114, %v943
      %2125 = vmatpush.bf16.msra.mxu0 0
      %2126 = vmatpush.bf16.msra.mxu0 0
      %2127 = vmatpush.bf16.msra.mxu0 0
      %2128 = vmatpush.bf16.msra.mxu0 0
      %2129 = vmatpush.bf16.msra.mxu0 0
      %2130 = vmatpush.bf16.msra.mxu0 0
      %2131 = vmatpush.bf16.msra.mxu0 %v2123
      %2132 = vmatpush.bf16.msra.mxu0 %v2112
      %2133 = vmatmul.bf16.gmra.mxu0 %v2117
      %v2134 = vpop.f32.mrf.mxu0
      %v2135 = vadd.f32 0.0, %v2134
      %v2136 = vpop.f32.mrf.mxu0
      %v2137 = vadd.f32 0.0, %v2136
      %2138 = vmatmul.bf16.gmra.mxu0 %v2120
      %v2139 = vpop.f32.mrf.mxu0
      %v2140 = vadd.f32 0.0, %v2139
      %v2141 = vpop.f32.mrf.mxu0
      %2142 = vdwg.mxu0
      %v2143 = vpack.c.bf16 %v2137, %v2135
      %v2144 = vpack.c.bf16 %v2140, %v2140
      %v2146 = vsel %vm863, %v2143, 0
      %v2149 = vsel %vm863, %v2144, 0
      %v2152 = vsel %vm973, %v1886, 0
      %2154 = vmatpush.bf16.msra.mxu0 0
      %2155 = vmatpush.bf16.msra.mxu0 0
      %2156 = vmatpush.bf16.msra.mxu0 0
      %2157 = vmatpush.bf16.msra.mxu0 0
      %2158 = vmatpush.bf16.msra.mxu0 0
      %2159 = vmatpush.bf16.msra.mxu0 0
      %2160 = vmatpush.bf16.msra.mxu0 0
      %2161 = vmatpush.bf16.msra.mxu0 %v2152
      %2162 = vmatmul.bf16.gmra.mxu0 %v2146
      %v2163 = vpop.f32.mrf.mxu0
      %v2164 = vadd.f32 0.0, %v2163
      %v2165 = vpop.f32.mrf.mxu0
      %v2166 = vadd.f32 0.0, %v2165
      %2167 = vmatmul.bf16.gmra.mxu0 %v2149
      %v2168 = vpop.f32.mrf.mxu0
      %v2169 = vadd.f32 0.0, %v2168
      %v2170 = vpop.f32.mrf.mxu0
      %2171 = vdwg.mxu0
      %v2172 = vadd.f32 %v2033, %v2164
      %v2173 = vadd.f32 %v2034, %v2166
      %v2174 = vadd.f32 %v2035, %v2169
      %2175 = vrot.lane.b32.xlu0 %v1894, 112
      %v2176 = vpop.permute.xlu0 %2175
      %2177 = vrot.lane.b32.xlu0 %v1895, 112
      %v2178 = vpop.permute.xlu0 %2177
      %2179 = vrot.lane.b32.xlu0 %v1896, 80
      %v2180 = vpop.permute.xlu0 %2179
      %2181 = vrot.lane.b32.xlu0 %v1897, 80
      %v2182 = vpop.permute.xlu0 %2181
      %v2184 = vsel %vm863, %v2176, 0
      %v2187 = vsel %vm863, %v2178, 0
      %v2190 = vsel %vm863, %v2180, 0
      %v2193 = vsel %vm863, %v2182, 0
      %2195 = vmatpush.bf16.xpose.msra.mxu0 0
      %2196 = vmatpush.bf16.xpose.msra.mxu0 0
      %2197 = vmatpush.bf16.xpose.msra.mxu0 0
      %2198 = vmatpush.bf16.xpose.msra.mxu0 0
      %2199 = vmatpush.bf16.xpose.msra.mxu0 0
      %2200 = vmatpush.bf16.xpose.msra.mxu0 0
      %2201 = vmatpush.bf16.xpose.msra.mxu0 %v2193
      %2202 = vmatpush.bf16.xpose.msra.mxu0 %v2190
      %2203 = vmatmul.bf16.gmra.mxu0 %v2184
      %v2204 = vpop.f32.mrf.mxu0
      %v2205 = vadd.f32 0.0, %v2204
      %v2206 = vpop.f32.mrf.mxu0
      %v2207 = vadd.f32 0.0, %v2206
      %2208 = vmatmul.bf16.gmra.mxu0 %v2187
      %v2209 = vpop.f32.mrf.mxu0
      %v2210 = vadd.f32 0.0, %v2209
      %v2211 = vpop.f32.mrf.mxu0
      %2212 = vdwg.mxu0
      %v2213 = vsel %vm894, %v2205, -inf
      %2214 = vmax.xlane.f32.xlu0 %v2213
      %v2215 = vpop.xlane.xlu0 %2214
      %v2216 = vsel %vm894, %v2207, -inf
      %2217 = vmax.xlane.f32.xlu0 %v2216
      %v2218 = vpop.xlane.xlu0 %2217
      %v2219 = vsel %vm901, %v2210, -inf
      %2220 = vmax.xlane.f32.xlu0 %v2219
      %v2221 = vpop.xlane.xlu0 %2220
      %v2222 = vsub.f32 %v2205, %v2215
      %v2223 = vsub.f32 %v2207, %v2218
      %v2224 = vsub.f32 %v2210, %v2221
      %v2225 = vmul.f32 %v2222, 1.442695
      %v2226 = vpow.pop %v2225
      %v2227 = vmul.f32 %v2223, 1.442695
      %v2228 = vpow.pop %v2227
      %v2229 = vmul.f32 %v2224, 1.442695
      %v2230 = vpow.pop %v2229
      %v2231 = vsel %vm894, %v2226, 0.0
      %2232 = vadd.xlane.f32.xlu0 %v2231
      %v2233 = vpop.xlane.xlu0 %2232
      %v2234 = vsel %vm894, %v2228, 0.0
      %2235 = vadd.xlane.f32.xlu0 %v2234
      %v2236 = vpop.xlane.xlu0 %2235
      %v2237 = vsel %vm901, %v2230, 0.0
      %2238 = vadd.xlane.f32.xlu0 %v2237
      %v2239 = vpop.xlane.xlu0 %2238
      %v2240 = vrcp.pop %v2233
      %v2241 = vrcp.pop %v2236
      %v2242 = vrcp.pop %v2239
      %v2243 = vmul.f32 %v2226, %v2240
      %v2244 = vmul.f32 %v2228, %v2241
      %v2245 = vmul.f32 %v2230, %v2242
      %v2246 = vpack.c.bf16 %v2244, %v2243
      %v2247 = vpack.c.bf16 %v2245, %v2245
      %2248 = vrot.lane.b32.xlu0 %v1896, 48
      %v2249 = vpop.permute.xlu0 %2248
      %2250 = vrot.lane.b32.xlu0 %v1897, 48
      %v2251 = vpop.permute.xlu0 %2250
      %v2254 = vsel %vm894, %v2246, 0
      %v2257 = vsel %vm894, %v2247, 0
      %v2260 = vand.u32 %v2251, %v943
      %2262 = vmatpush.bf16.msra.mxu0 0
      %2263 = vmatpush.bf16.msra.mxu0 0
      %2264 = vmatpush.bf16.msra.mxu0 0
      %2265 = vmatpush.bf16.msra.mxu0 0
      %2266 = vmatpush.bf16.msra.mxu0 0
      %2267 = vmatpush.bf16.msra.mxu0 0
      %2268 = vmatpush.bf16.msra.mxu0 %v2260
      %2269 = vmatpush.bf16.msra.mxu0 %v2249
      %2270 = vmatmul.bf16.gmra.mxu0 %v2254
      %v2271 = vpop.f32.mrf.mxu0
      %v2272 = vadd.f32 0.0, %v2271
      %v2273 = vpop.f32.mrf.mxu0
      %v2274 = vadd.f32 0.0, %v2273
      %2275 = vmatmul.bf16.gmra.mxu0 %v2257
      %v2276 = vpop.f32.mrf.mxu0
      %v2277 = vadd.f32 0.0, %v2276
      %v2278 = vpop.f32.mrf.mxu0
      %2279 = vdwg.mxu0
      %v2280 = vpack.c.bf16 %v2274, %v2272
      %v2281 = vpack.c.bf16 %v2277, %v2277
      %v2283 = vsel %vm863, %v2280, 0
      %v2286 = vsel %vm863, %v2281, 0
      %v2289 = vsel %vm973, %v1887, 0
      %2291 = vmatpush.bf16.msra.mxu0 0
      %2292 = vmatpush.bf16.msra.mxu0 0
      %2293 = vmatpush.bf16.msra.mxu0 0
      %2294 = vmatpush.bf16.msra.mxu0 0
      %2295 = vmatpush.bf16.msra.mxu0 0
      %2296 = vmatpush.bf16.msra.mxu0 0
      %2297 = vmatpush.bf16.msra.mxu0 0
      %2298 = vmatpush.bf16.msra.mxu0 %v2289
      %2299 = vmatmul.bf16.gmra.mxu0 %v2283
      %v2300 = vpop.f32.mrf.mxu0
      %v2301 = vadd.f32 0.0, %v2300
      %v2302 = vpop.f32.mrf.mxu0
      %v2303 = vadd.f32 0.0, %v2302
      %2304 = vmatmul.bf16.gmra.mxu0 %v2286
      %v2305 = vpop.f32.mrf.mxu0
      %v2306 = vadd.f32 0.0, %v2305
      %v2307 = vpop.f32.mrf.mxu0
      %2308 = vdwg.mxu0
      %v2309 = vadd.f32 %v2172, %v2301
      %v2310 = vadd.f32 %v2173, %v2303
      %v2311 = vadd.f32 %v2174, %v2306
      %2312 = vrot.lane.b32.xlu0 %v1894, 104
      %v2313 = vpop.permute.xlu0 %2312
      %2314 = vrot.lane.b32.xlu0 %v1895, 104
      %v2315 = vpop.permute.xlu0 %2314
      %2316 = vrot.lane.b32.xlu0 %v1896, 72
      %v2317 = vpop.permute.xlu0 %2316
      %2318 = vrot.lane.b32.xlu0 %v1897, 72
      %v2319 = vpop.permute.xlu0 %2318
      %v2321 = vsel %vm863, %v2313, 0
      %v2324 = vsel %vm863, %v2315, 0
      %v2327 = vsel %vm863, %v2317, 0
      %v2330 = vsel %vm863, %v2319, 0
      %2332 = vmatpush.bf16.xpose.msra.mxu0 0
      %2333 = vmatpush.bf16.xpose.msra.mxu0 0
      %2334 = vmatpush.bf16.xpose.msra.mxu0 0
      %2335 = vmatpush.bf16.xpose.msra.mxu0 0
      %2336 = vmatpush.bf16.xpose.msra.mxu0 0
      %2337 = vmatpush.bf16.xpose.msra.mxu0 0
      %2338 = vmatpush.bf16.xpose.msra.mxu0 %v2330
      %2339 = vmatpush.bf16.xpose.msra.mxu0 %v2327
      %2340 = vmatmul.bf16.gmra.mxu0 %v2321
      %v2341 = vpop.f32.mrf.mxu0
      %v2342 = vadd.f32 0.0, %v2341
      %v2343 = vpop.f32.mrf.mxu0
      %v2344 = vadd.f32 0.0, %v2343
      %2345 = vmatmul.bf16.gmra.mxu0 %v2324
      %v2346 = vpop.f32.mrf.mxu0
      %v2347 = vadd.f32 0.0, %v2346
      %v2348 = vpop.f32.mrf.mxu0
      %2349 = vdwg.mxu0
      %v2350 = vsel %vm894, %v2342, -inf
      %2351 = vmax.xlane.f32.xlu0 %v2350
      %v2352 = vpop.xlane.xlu0 %2351
      %v2353 = vsel %vm894, %v2344, -inf
      %2354 = vmax.xlane.f32.xlu0 %v2353
      %v2355 = vpop.xlane.xlu0 %2354
      %v2356 = vsel %vm901, %v2347, -inf
      %2357 = vmax.xlane.f32.xlu0 %v2356
      %v2358 = vpop.xlane.xlu0 %2357
      %v2359 = vsub.f32 %v2342, %v2352
      %v2360 = vsub.f32 %v2344, %v2355
      %v2361 = vsub.f32 %v2347, %v2358
      %v2362 = vmul.f32 %v2359, 1.442695
      %v2363 = vpow.pop %v2362
      %v2364 = vmul.f32 %v2360, 1.442695
      %v2365 = vpow.pop %v2364
      %v2366 = vmul.f32 %v2361, 1.442695
      %v2367 = vpow.pop %v2366
      %v2368 = vsel %vm894, %v2363, 0.0
      %2369 = vadd.xlane.f32.xlu0 %v2368
      %v2370 = vpop.xlane.xlu0 %2369
      %v2371 = vsel %vm894, %v2365, 0.0
      %2372 = vadd.xlane.f32.xlu0 %v2371
      %v2373 = vpop.xlane.xlu0 %2372
      %v2374 = vsel %vm901, %v2367, 0.0
      %2375 = vadd.xlane.f32.xlu0 %v2374
      %v2376 = vpop.xlane.xlu0 %2375
      %v2377 = vrcp.pop %v2370
      %v2378 = vrcp.pop %v2373
      %v2379 = vrcp.pop %v2376
      %v2380 = vmul.f32 %v2363, %v2377
      %v2381 = vmul.f32 %v2365, %v2378
      %v2382 = vmul.f32 %v2367, %v2379
      %v2383 = vpack.c.bf16 %v2381, %v2380
      %v2384 = vpack.c.bf16 %v2382, %v2382
      %2385 = vrot.lane.b32.xlu0 %v1896, 40
      %v2386 = vpop.permute.xlu0 %2385
      %2387 = vrot.lane.b32.xlu0 %v1897, 40
      %v2388 = vpop.permute.xlu0 %2387
      %v2391 = vsel %vm894, %v2383, 0
      %v2394 = vsel %vm894, %v2384, 0
      %v2397 = vand.u32 %v2388, %v943
      %2399 = vmatpush.bf16.msra.mxu0 0
      %2400 = vmatpush.bf16.msra.mxu0 0
      %2401 = vmatpush.bf16.msra.mxu0 0
      %2402 = vmatpush.bf16.msra.mxu0 0
      %2403 = vmatpush.bf16.msra.mxu0 0
      %2404 = vmatpush.bf16.msra.mxu0 0
      %2405 = vmatpush.bf16.msra.mxu0 %v2397
      %2406 = vmatpush.bf16.msra.mxu0 %v2386
      %2407 = vmatmul.bf16.gmra.mxu0 %v2391
      %v2408 = vpop.f32.mrf.mxu0
      %v2409 = vadd.f32 0.0, %v2408
      %v2410 = vpop.f32.mrf.mxu0
      %v2411 = vadd.f32 0.0, %v2410
      %2412 = vmatmul.bf16.gmra.mxu0 %v2394
      %v2413 = vpop.f32.mrf.mxu0
      %v2414 = vadd.f32 0.0, %v2413
      %v2415 = vpop.f32.mrf.mxu0
      %2416 = vdwg.mxu0
      %v2417 = vpack.c.bf16 %v2411, %v2409
      %v2418 = vpack.c.bf16 %v2414, %v2414
      %v2420 = vsel %vm863, %v2417, 0
      %v2423 = vsel %vm863, %v2418, 0
      %v2426 = vsel %vm973, %v1888, 0
      %2428 = vmatpush.bf16.msra.mxu0 0
      %2429 = vmatpush.bf16.msra.mxu0 0
      %2430 = vmatpush.bf16.msra.mxu0 0
      %2431 = vmatpush.bf16.msra.mxu0 0
      %2432 = vmatpush.bf16.msra.mxu0 0
      %2433 = vmatpush.bf16.msra.mxu0 0
      %2434 = vmatpush.bf16.msra.mxu0 0
      %2435 = vmatpush.bf16.msra.mxu0 %v2426
      %2436 = vmatmul.bf16.gmra.mxu0 %v2420
      %v2437 = vpop.f32.mrf.mxu0
      %v2438 = vadd.f32 0.0, %v2437
      %v2439 = vpop.f32.mrf.mxu0
      %v2440 = vadd.f32 0.0, %v2439
      %2441 = vmatmul.bf16.gmra.mxu0 %v2423
      %v2442 = vpop.f32.mrf.mxu0
      %v2443 = vadd.f32 0.0, %v2442
      %v2444 = vpop.f32.mrf.mxu0
      %2445 = vdwg.mxu0
      %v2446 = vadd.f32 %v2309, %v2438
      %v2447 = vadd.f32 %v2310, %v2440
      %v2448 = vadd.f32 %v2311, %v2443
      %v2449 = vadd.f32 %v1751, %v2446
      %v2450 = vadd.f32 %v1752, %v2447
      %v2451 = vadd.f32 %v1753, %v2448
      %s2452 = scalar_lea.vmem %s9, 1
      %v2453 = vld [vmem:[%s2452] sm:$0x1]
      %s2454 = scalar_lea.vmem %s10, 1
      %v2455 = vld [vmem:[%s2454] sm:$0x1]
      %v2456 = vsel %vm712, %v2449, 0.0
      %2457 = vadd.xlane.f32.xlu0 %v2456
      %v2458 = vpop.xlane.xlu0 %2457
      %v2459 = vsel %vm712, %v2450, 0.0
      %2460 = vadd.xlane.f32.xlu0 %v2459
      %v2461 = vpop.xlane.xlu0 %2460
      %v2462 = vsel %vm719, %v2451, 0.0
      %2463 = vadd.xlane.f32.xlu0 %v2462
      %v2464 = vpop.xlane.xlu0 %2463
      %v2465 = vmul.f32 %v2458, %v729
      %v2466 = vmul.f32 %v2461, %v729
      %v2467 = vmul.f32 %v2464, %v729
      %v2468 = vsub.f32 %v2449, %v2465
      %v2469 = vsub.f32 %v2450, %v2466
      %v2470 = vsub.f32 %v2451, %v2467
      %v2471 = vmul.f32 %v2468, %v2468
      %v2472 = vmul.f32 %v2469, %v2469
      %v2473 = vmul.f32 %v2470, %v2470
      %v2474 = vsel %vm712, %v2471, 0.0
      %2475 = vadd.xlane.f32.xlu0 %v2474
      %v2476 = vpop.xlane.xlu0 %2475
      %v2477 = vsel %vm712, %v2472, 0.0
      %2478 = vadd.xlane.f32.xlu0 %v2477
      %v2479 = vpop.xlane.xlu0 %2478
      %v2480 = vsel %vm719, %v2473, 0.0
      %2481 = vadd.xlane.f32.xlu0 %v2480
      %v2482 = vpop.xlane.xlu0 %2481
      %v2483 = vmul.f32 %v2476, %v729
      %v2484 = vmul.f32 %v2479, %v729
      %v2485 = vmul.f32 %v2482, %v729
      %v2486 = vadd.f32 %v2483, 1e-06
      %v2487 = vadd.f32 %v2484, 1e-06
      %v2488 = vadd.f32 %v2485, 1e-06
      %v2489 = vrsqrt.pop %v2486
      %v2490 = vmul.f32 %v2489, %v2486
      %v2491 = vmul.f32 %v2490, %v2489
      %v2492 = vmul.f32 0.5, %v2491
      %v2493 = vsub.f32 1.5, %v2492
      %v2494 = vmul.f32 %v2489, %v2493
      %vm2495 = vweird.f32 %v2486
      %vm2496 = vweird.f32 %v2489
      %vm2497 = vmor %vm2495, %vm2496
      %v2498 = vsel %vm2497, %v2489, %v2494
      %v2499 = vrsqrt.pop %v2487
      %v2500 = vmul.f32 %v2499, %v2487
      %v2501 = vmul.f32 %v2500, %v2499
      %v2502 = vmul.f32 0.5, %v2501
      %v2503 = vsub.f32 1.5, %v2502
      %v2504 = vmul.f32 %v2499, %v2503
      %vm2505 = vweird.f32 %v2487
      %vm2506 = vweird.f32 %v2499
      %vm2507 = vmor %vm2505, %vm2506
      %v2508 = vsel %vm2507, %v2499, %v2504
      %v2509 = vrsqrt.pop %v2488
      %v2510 = vmul.f32 %v2509, %v2488
      %v2511 = vmul.f32 %v2510, %v2509
      %v2512 = vmul.f32 0.5, %v2511
      %v2513 = vsub.f32 1.5, %v2512
      %v2514 = vmul.f32 %v2509, %v2513
      %vm2515 = vweird.f32 %v2488
      %vm2516 = vweird.f32 %v2509
      %vm2517 = vmor %vm2515, %vm2516
      %v2518 = vsel %vm2517, %v2509, %v2514
      %v2519 = vmul.f32 %v2468, %v2498
      %v2520 = vmul.f32 %v2469, %v2508
      %v2521 = vmul.f32 %v2470, %v2518
      %v2523 = vperm.slane %v2453, 0
      %v2525 = vmul.f32 %v2519, %v2523
      %v2526 = vmul.f32 %v2520, %v2523
      %v2527 = vmul.f32 %v2521, %v2523
      %v2529 = vperm.slane %v2455, 0
      %v2531 = vadd.f32 %v2525, %v2529
      %v2532 = vadd.f32 %v2526, %v2529
      %v2533 = vadd.f32 %v2527, %v2529
      %v2534 = vpack.c.bf16 %v2532, %v2531
      %v2535 = vpack.c.bf16 %v2533, %v2533
      %s2536 = scalar_lea.vmem %s11, 16
      %v2537 = vld [vmem:[%s2536] sm:$0xf]
      %v2538 = vld [vmem:[%s2536 + $0x4] sm:$0xf]
      %v2539 = vld [vmem:[%s2536 + $0x8] sm:$0xf]
      %v2540 = vld [vmem:[%s2536 + $0xc] sm:$0xf]
      %s2541 = scalar_lea.vmem %s12, 1
      %v2542 = vld [vmem:[%s2541] sm:$0x1]
      %v2544 = vperm.slane %v2542, 0
      %v2550 = vunpack.c.l.b16 %v2537
      %v2551 = vunpack.c.l.b16 %v2538
      %v2552 = vunpack.c.l.b16 %v2539
      %v2553 = vunpack.c.l.b16 %v2540
      %v2554 = vpack.c.b16 %v2551, %v2550
      %v2555 = vpack.c.b16 %v2553, %v2552
      %v2559 = vsel %vm712, %v2534, 0
      %v2562 = vsel %vm712, %v2535, 0
      %2564 = vmatpush.bf16.msra.mxu0 0
      %2565 = vmatpush.bf16.msra.mxu0 0
      %2566 = vmatpush.bf16.msra.mxu0 0
      %2567 = vmatpush.bf16.msra.mxu0 0
      %2568 = vmatpush.bf16.msra.mxu0 0
      %2569 = vmatpush.bf16.msra.mxu0 0
      %2570 = vmatpush.bf16.msra.mxu0 %v2555
      %2571 = vmatpush.bf16.msra.mxu0 %v2554
      %2572 = vmatmul.bf16.gmra.mxu0 %v2559
      %v2573 = vpop.f32.mrf.mxu0
      %v2574 = vadd.f32 %v2544, %v2573
      %v2575 = vpop.f32.mrf.mxu0
      %v2576 = vadd.f32 %v2544, %v2575
      %2577 = vmatmul.bf16.gmra.mxu0 %v2562
      %v2578 = vpop.f32.mrf.mxu0
      %v2579 = vadd.f32 %v2544, %v2578
      %v2580 = vpop.f32.mrf.mxu0
      %2581 = vdwg.mxu0
      %v2582 = vmul.f32 %v2574, 0.5
      %v2583 = vmul.f32 %v2576, 0.5
      %v2584 = vmul.f32 %v2579, 0.5
      %v2585 = vmul.f32 %v2574, 0.70710677
      %v2586 = vmul.f32 %v2576, 0.70710677
      %v2587 = vmul.f32 %v2579, 0.70710677
      %vm2588 = vcmp.lt.f32.partialorder %v2585, 0.0
      %vm2589 = vcmp.lt.f32.partialorder %v2586, 0.0
      %vm2590 = vcmp.lt.f32.partialorder %v2587, 0.0
      %v2591 = vsel %vm2588, -1.0, 1.0
      %v2592 = vsel %vm2589, -1.0, 1.0
      %v2593 = vsel %vm2590, -1.0, 1.0
      %v2594 = vand.u32 2147483647, %v2585
      %v2595 = vand.u32 2147483647, %v2586
      %v2596 = vand.u32 2147483647, %v2587
      %v2597 = vmul.f32 %v2594, 0.3275911
      %v2598 = vmul.f32 %v2595, 0.3275911
      %v2599 = vmul.f32 %v2596, 0.3275911
      %v2600 = vadd.f32 %v2597, 1.0
      %v2601 = vadd.f32 %v2598, 1.0
      %v2602 = vadd.f32 %v2599, 1.0
      %v2603 = vrcp.pop %v2600
      %v2604 = vmul.f32 %v2600, %v2603
      %v2605 = vsub.f32 1.0, %v2604
      %v2606 = vmul.f32 %v2603, %v2605
      %v2607 = vadd.f32 %v2603, %v2606
      %vm2608 = vweird.f32 %v2600
      %vm2609 = vweird.f32 %v2603
      %vm2610 = vmor %vm2608, %vm2609
      %v2611 = vsel %vm2610, %v2603, %v2607
      %v2612 = vand.u32 2147483647, %v2600
      %vm2613 = vcmp.eq.f32.partialorder %v2612, 8.507059e+37
      %v2614 = vand.u32 %v2600, 2147483648
      %v2615 = vor.u32 1.1754944e-38, %v2614
      %v2616 = vsel %vm2613, %v2615, %v2611
      %v2617 = vmul.f32 1.0, %v2616
      %v2618 = vrcp.pop %v2601
      %v2619 = vmul.f32 %v2601, %v2618
      %v2620 = vsub.f32 1.0, %v2619
      %v2621 = vmul.f32 %v2618, %v2620
      %v2622 = vadd.f32 %v2618, %v2621
      %vm2623 = vweird.f32 %v2601
      %vm2624 = vweird.f32 %v2618
      %vm2625 = vmor %vm2623, %vm2624
      %v2626 = vsel %vm2625, %v2618, %v2622
      %v2627 = vand.u32 2147483647, %v2601
      %vm2628 = vcmp.eq.f32.partialorder %v2627, 8.507059e+37
      %v2629 = vand.u32 %v2601, 2147483648
      %v2630 = vor.u32 1.1754944e-38, %v2629
      %v2631 = vsel %vm2628, %v2630, %v2626
      %v2632 = vmul.f32 1.0, %v2631
      %v2633 = vrcp.pop %v2602
      %v2634 = vmul.f32 %v2602, %v2633
      %v2635 = vsub.f32 1.0, %v2634
      %v2636 = vmul.f32 %v2633, %v2635
      %v2637 = vadd.f32 %v2633, %v2636
      %vm2638 = vweird.f32 %v2602
      %vm2639 = vweird.f32 %v2633
      %vm2640 = vmor %vm2638, %vm2639
      %v2641 = vsel %vm2640, %v2633, %v2637
      %v2642 = vand.u32 2147483647, %v2602
      %vm2643 = vcmp.eq.f32.partialorder %v2642, 8.507059e+37
      %v2644 = vand.u32 %v2602, 2147483648
      %v2645 = vor.u32 1.1754944e-38, %v2644
      %v2646 = vsel %vm2643, %v2645, %v2641
      %v2647 = vmul.f32 1.0, %v2646
      %v2648 = vmul.f32 %v2617, 1.0614054
      %v2649 = vmul.f32 %v2632, 1.0614054
      %v2650 = vmul.f32 %v2647, 1.0614054
      %v2651 = vadd.f32 %v2648, -1.4531521
      %v2652 = vadd.f32 %v2649, -1.4531521
      %v2653 = vadd.f32 %v2650, -1.4531521
      %v2654 = vmul.f32 %v2617, %v2651
      %v2655 = vmul.f32 %v2632, %v2652
      %v2656 = vmul.f32 %v2647, %v2653
      %v2657 = vadd.f32 %v2654, 1.4214138
      %v2658 = vadd.f32 %v2655, 1.4214138
      %v2659 = vadd.f32 %v2656, 1.4214138
      %v2660 = vmul.f32 %v2617, %v2657
      %v2661 = vmul.f32 %v2632, %v2658
      %v2662 = vmul.f32 %v2647, %v2659
      %v2663 = vadd.f32 %v2660, -0.28449672
      %v2664 = vadd.f32 %v2661, -0.28449672
      %v2665 = vadd.f32 %v2662, -0.28449672
      %v2666 = vmul.f32 %v2617, %v2663
      %v2667 = vmul.f32 %v2632, %v2664
      %v2668 = vmul.f32 %v2647, %v2665
      %v2669 = vadd.f32 %v2666, 0.2548296
      %v2670 = vadd.f32 %v2667, 0.2548296
      %v2671 = vadd.f32 %v2668, 0.2548296
      %v2672 = vmul.f32 %v2617, %v2669
      %v2673 = vmul.f32 %v2632, %v2670
      %v2674 = vmul.f32 %v2647, %v2671
      %v2675 = vsub.f32 0.0, %v2594
      %v2676 = vsub.f32 0.0, %v2595
      %v2677 = vsub.f32 0.0, %v2596
      %v2678 = vmul.f32 %v2675, %v2594
      %v2679 = vmul.f32 %v2676, %v2595
      %v2680 = vmul.f32 %v2677, %v2596
      %v2681 = vmul.f32 %v2678, 1.442695
      %v2682 = vpow.pop %v2681
      %v2683 = vmul.f32 %v2679, 1.442695
      %v2684 = vpow.pop %v2683
      %v2685 = vmul.f32 %v2680, 1.442695
      %v2686 = vpow.pop %v2685
      %v2687 = vmul.f32 %v2672, %v2682
      %v2688 = vmul.f32 %v2673, %v2684
      %v2689 = vmul.f32 %v2674, %v2686
      %v2690 = vsub.f32 1.0, %v2687
      %v2691 = vsub.f32 1.0, %v2688
      %v2692 = vsub.f32 1.0, %v2689
      %v2693 = vmul.f32 %v2591, %v2690
      %v2694 = vmul.f32 %v2592, %v2691
      %v2695 = vmul.f32 %v2593, %v2692
      %v2696 = vadd.f32 %v2693, 1.0
      %v2697 = vadd.f32 %v2694, 1.0
      %v2698 = vadd.f32 %v2695, 1.0
      %v2699 = vmul.f32 %v2582, %v2696
      %v2700 = vmul.f32 %v2583, %v2697
      %v2701 = vmul.f32 %v2584, %v2698
      %v2702 = vpack.c.bf16 %v2700, %v2699
      %v2703 = vpack.c.bf16 %v2701, %v2701
      %s2704 = scalar_lea.vmem %s13, 64
      %v2705 = vld [vmem:[%s2704] sm:$0xf]
      %v2706 = vld [vmem:[%s2704 + $0x4] sm:$0xf]
      %v2707 = vld [vmem:[%s2704 + $0x8] sm:$0xf]
      %v2708 = vld [vmem:[%s2704 + $0xc] sm:$0xf]
      %v2709 = vld [vmem:[%s2704 + $0x10] sm:$0xf]
      %v2710 = vld [vmem:[%s2704 + $0x14] sm:$0xf]
      %v2711 = vld [vmem:[%s2704 + $0x18] sm:$0xf]
      %v2712 = vld [vmem:[%s2704 + $0x1c] sm:$0xf]
      %v2713 = vld [vmem:[%s2704 + $0x20] sm:$0xf]
      %v2714 = vld [vmem:[%s2704 + $0x24] sm:$0xf]
      %v2715 = vld [vmem:[%s2704 + $0x28] sm:$0xf]
      %v2716 = vld [vmem:[%s2704 + $0x2c] sm:$0xf]
      %v2717 = vld [vmem:[%s2704 + $0x30] sm:$0xf]
      %v2718 = vld [vmem:[%s2704 + $0x34] sm:$0xf]
      %v2719 = vld [vmem:[%s2704 + $0x38] sm:$0xf]
      %v2720 = vld [vmem:[%s2704 + $0x3c] sm:$0xf]
      %s2721 = scalar_lea.vmem %s14, 1
      %v2722 = vld [vmem:[%s2721] sm:$0x1]
      %v2724 = vperm.slane %v2722, 0
      %v2742 = vunpack.c.l.b16 %v2705
      %v2743 = vunpack.c.l.b16 %v2706
      %v2744 = vunpack.c.l.b16 %v2707
      %v2745 = vunpack.c.l.b16 %v2708
      %v2746 = vunpack.c.l.b16 %v2709
      %v2747 = vunpack.c.l.b16 %v2710
      %v2748 = vunpack.c.l.b16 %v2711
      %v2749 = vunpack.c.l.b16 %v2712
      %v2750 = vunpack.c.l.b16 %v2713
      %v2751 = vunpack.c.l.b16 %v2714
      %v2752 = vunpack.c.l.b16 %v2715
      %v2753 = vunpack.c.l.b16 %v2716
      %v2754 = vunpack.c.l.b16 %v2717
      %v2755 = vunpack.c.l.b16 %v2718
      %v2756 = vunpack.c.l.b16 %v2719
      %v2757 = vunpack.c.l.b16 %v2720
      %v2758 = vpack.c.b16 %v2743, %v2742
      %v2759 = vpack.c.b16 %v2745, %v2744
      %v2760 = vpack.c.b16 %v2747, %v2746
      %v2761 = vpack.c.b16 %v2749, %v2748
      %v2762 = vpack.c.b16 %v2751, %v2750
      %v2763 = vpack.c.b16 %v2753, %v2752
      %v2764 = vpack.c.b16 %v2755, %v2754
      %v2765 = vpack.c.b16 %v2757, %v2756
      %2774 = vmatpush.bf16.msra.mxu0 %v2765
      %2775 = vmatpush.bf16.msra.mxu0 %v2764
      %2776 = vmatpush.bf16.msra.mxu0 %v2763
      %2777 = vmatpush.bf16.msra.mxu0 %v2762
      %2778 = vmatpush.bf16.msra.mxu0 %v2761
      %2779 = vmatpush.bf16.msra.mxu0 %v2760
      %2780 = vmatpush.bf16.msra.mxu0 %v2759
      %2781 = vmatpush.bf16.msra.mxu0 %v2758
      %2782 = vmatmul.bf16.gmra.mxu0 %v2702
      %v2783 = vpop.f32.mrf.mxu0
      %v2784 = vadd.f32 %v2724, %v2783
      %v2785 = vpop.f32.mrf.mxu0
      %v2786 = vadd.f32 %v2724, %v2785
      %2787 = vmatmul.bf16.gmra.mxu0 %v2703
      %v2788 = vpop.f32.mrf.mxu0
      %v2789 = vadd.f32 %v2724, %v2788
      %v2790 = vpop.f32.mrf.mxu0
      %2791 = vdwg.mxu0
      %v2792 = vadd.f32 %v2449, %v2784
      %v2793 = vadd.f32 %v2450, %v2786
      %v2794 = vadd.f32 %v2451, %v2789
      %v2795 = vld [vmem:[%s15] sm:$0x1]
      %v2796 = vld [vmem:[%s16] sm:$0x1]
      %v2797 = vsel %vm712, %v2792, 0.0
      %2798 = vadd.xlane.f32.xlu0 %v2797
      %v2799 = vpop.xlane.xlu0 %2798
      %v2800 = vsel %vm712, %v2793, 0.0
      %2801 = vadd.xlane.f32.xlu0 %v2800
      %v2802 = vpop.xlane.xlu0 %2801
      %v2803 = vsel %vm719, %v2794, 0.0
      %2804 = vadd.xlane.f32.xlu0 %v2803
      %v2805 = vpop.xlane.xlu0 %2804
      %v2806 = vmul.f32 %v2799, %v729
      %v2807 = vmul.f32 %v2802, %v729
      %v2808 = vmul.f32 %v2805, %v729
      %v2809 = vsub.f32 %v2792, %v2806
      %v2810 = vsub.f32 %v2793, %v2807
      %v2811 = vsub.f32 %v2794, %v2808
      %v2812 = vmul.f32 %v2809, %v2809
      %v2813 = vmul.f32 %v2810, %v2810
      %v2814 = vmul.f32 %v2811, %v2811
      %v2815 = vsel %vm712, %v2812, 0.0
      %2816 = vadd.xlane.f32.xlu0 %v2815
      %v2817 = vpop.xlane.xlu0 %2816
      %v2818 = vsel %vm712, %v2813, 0.0
      %2819 = vadd.xlane.f32.xlu0 %v2818
      %v2820 = vpop.xlane.xlu0 %2819
      %v2821 = vsel %vm719, %v2814, 0.0
      %2822 = vadd.xlane.f32.xlu0 %v2821
      %v2823 = vpop.xlane.xlu0 %2822
      %v2824 = vmul.f32 %v2817, %v729
      %v2825 = vmul.f32 %v2820, %v729
      %v2826 = vmul.f32 %v2823, %v729
      %v2827 = vadd.f32 %v2824, 1e-06
      %v2828 = vadd.f32 %v2825, 1e-06
      %v2829 = vadd.f32 %v2826, 1e-06
      %v2830 = vrsqrt.pop %v2827
      %v2831 = vmul.f32 %v2830, %v2827
      %v2832 = vmul.f32 %v2831, %v2830
      %v2833 = vmul.f32 0.5, %v2832
      %v2834 = vsub.f32 1.5, %v2833
      %v2835 = vmul.f32 %v2830, %v2834
      %vm2836 = vweird.f32 %v2827
      %vm2837 = vweird.f32 %v2830
      %vm2838 = vmor %vm2836, %vm2837
      %v2839 = vsel %vm2838, %v2830, %v2835
      %v2840 = vrsqrt.pop %v2828
      %v2841 = vmul.f32 %v2840, %v2828
      %v2842 = vmul.f32 %v2841, %v2840
      %v2843 = vmul.f32 0.5, %v2842
      %v2844 = vsub.f32 1.5, %v2843
      %v2845 = vmul.f32 %v2840, %v2844
      %vm2846 = vweird.f32 %v2828
      %vm2847 = vweird.f32 %v2840
      %vm2848 = vmor %vm2846, %vm2847
      %v2849 = vsel %vm2848, %v2840, %v2845
      %v2850 = vrsqrt.pop %v2829
      %v2851 = vmul.f32 %v2850, %v2829
      %v2852 = vmul.f32 %v2851, %v2850
      %v2853 = vmul.f32 0.5, %v2852
      %v2854 = vsub.f32 1.5, %v2853
      %v2855 = vmul.f32 %v2850, %v2854
      %vm2856 = vweird.f32 %v2829
      %vm2857 = vweird.f32 %v2850
      %vm2858 = vmor %vm2856, %vm2857
      %v2859 = vsel %vm2858, %v2850, %v2855
      %v2860 = vmul.f32 %v2809, %v2839
      %v2861 = vmul.f32 %v2810, %v2849
      %v2862 = vmul.f32 %v2811, %v2859
      %v2864 = vperm.slane %v2795, 0
      %v2866 = vmul.f32 %v2860, %v2864
      %v2867 = vmul.f32 %v2861, %v2864
      %v2868 = vmul.f32 %v2862, %v2864
      %v2870 = vperm.slane %v2796, 0
      %v2872 = vadd.f32 %v2866, %v2870
      %v2873 = vadd.f32 %v2867, %v2870
      %v2874 = vadd.f32 %v2868, %v2870
      %2875 = vst.msk [vmem:[%s548] sm:$0xff] %vm712, %v2872
      %2876 = vst.msk [vmem:[%s548 + $0x8] sm:$0xff] %vm712, %v2873
      %2877 = vst.msk [vmem:[%s548 + $0x10] sm:$0x1] %vm719, %v2874
      %p2878 = scmp.lt.s32.totalorder %s28, 1
      %s2879 = scalar_select %p2878, %s28, 1
      %s2880 = smul.addr %s2879, 3
      %s2881 = smul.addr %s2880, 8
      %s2882 = scalar_lea.vmem %s17, %s2881
      // Predicated region
      $region89: #{vit_encoder_forward.1} parent=87 // pred_check
        %p2883 = pneg %p408
      $region90: #{vit_encoder_forward.1} parent=87 // pred_check_branch
        %2885 = sbr.rel (%p2883) target = $region92
      $region91: #{vit_encoder_forward.1} parent=87 // pred_region
        _
      $region92: #{vit_encoder_forward.1} parent=87 // pred_fallthru
        _
    $region88: #{vit_encoder_forward.1} parent=5 // pred_fallthru
      _
    %p2886 = scmp.le.s32.totalorder 2, %s23
    // Predicated region
    $region93: #{vit_encoder_forward.1} parent=5 // pred_check
      %p2887 = pneg %p2886
    $region94: #{vit_encoder_forward.1} parent=5 // pred_check_branch
      %2889 = sbr.rel (%p2887) target = $region96
    $region95: #{vit_encoder_forward.1} parent=5 // pred_region
      %s2890 = ssub.s32 %s23, 2
      // Predicated region
      $region97: #{vit_encoder_forward.1} parent=95 // pred_check
        %p2891 = pneg %p414
      $region98: #{vit_encoder_forward.1} parent=95 // pred_check_branch
        %2893 = sbr.rel (%p2891) target = $region100
      $region99: #{vit_encoder_forward.1} parent=95 // pred_region
        %p2894 = scmp.lt.s32.totalorder %s29, 1
        %s2895 = scalar_select %p2894, %s29, 1
        %s2896 = smul.addr %s2895, 3
        %s2897 = smul.addr %s2896, 8
        %s2898 = scalar_lea.vmem %s17, %s2897
      $region100: #{vit_encoder_forward.1} parent=95 // pred_fallthru
        _
    $region96: #{vit_encoder_forward.1} parent=5 // pred_fallthru
      _
  $region6: #{vit_encoder_forward.1} parent=0 // loop_footer
    %s27 = sadd.s32 1, %s23
  $region7: #{vit_encoder_forward.1} parent=0 // loop_footer_branch
    %22 = sbr.rel target = $region3
  $region8: #{vit_encoder_forward.1} parent=0 // loop_exit
    _

</llo_original>
